<compile_context>
chip_gen: v7x
topology: tpu7x:2x2x1
jax: 0.10.0
libtpu: 0.0.40
codegen_flags: <defaults>
</compile_context>

<pallas_src>
import functools

import jax
import jax.numpy as jnp
from jax.experimental import pallas as pl
from jax.experimental.pallas import tpu as pltpu

LN_EPS = 1e-12   # espnet LayerNorm eps
BN_EPS = 1e-5    # torch BatchNorm1d default eps
MASK_BIAS = -1e30  # finite additive mask bias (float32.min overflows to -inf)

# MXU operand dtype.  bf16 runs the MXU at full rate on v5e/v6e/v7x and halves
# weight VMEM residency; accumulation stays f32 (preferred_element_type) and
# all element-wise math stays f32.  Flip to jnp.float32 for bit-exact checks.
MATMUL_DTYPE = jnp.bfloat16


def _ln(x, g, b):
    mean = jnp.mean(x, axis=-1, keepdims=True)
    var = jnp.mean((x - mean) ** 2, axis=-1, keepdims=True)
    return (x - mean) * jax.lax.rsqrt(var + LN_EPS) * g + b


def _mm(a, b):
    """a @ b on the MXU (bf16 operands, f32 accumulation)."""
    return jnp.dot(a.astype(MATMUL_DTYPE), b.astype(MATMUL_DTYPE),
                   preferred_element_type=jnp.float32)


def _mm_nt(a, b):
    """a @ b.T (contract last dims of both) without materializing b.T."""
    return jax.lax.dot_general(
        a.astype(MATMUL_DTYPE), b.astype(MATMUL_DTYPE),
        dimension_numbers=(((1,), (1,)), ((), ())),
        preferred_element_type=jnp.float32)


def _dw_geometry(kernel_size):
    """(pad, interior offset) for the depthwise-conv halo scratch.  The interior
    starts at a sublane-aligned (multiple-of-8) row so its store is unmasked."""
    pad = (kernel_size - 1) // 2
    off = ((pad + 7) // 8) * 8
    return pad, off


# ------------------------------ fused kernel --------------------------------


def encoder_layer_kernel(
    # inputs
    x_ref, mask_ref,
    # macaron feed-forward
    g_mac_ref, b_mac_ref, mac_w1_ref, mac_b1_ref, mac_w2_ref, mac_b2_ref,
    # multi-head self-attention (full-width projections, scale folded into q)
    g_mha_ref, b_mha_ref, wq_ref, bq_ref, wk_ref, bk_ref, wv_ref, bv_ref,
    wo_ref, bo_ref,
    # convolution module
    g_cnv_ref, b_cnv_ref, pw1a_w_ref, pw1a_b_ref, pw1g_w_ref, pw1g_b_ref,
    dw_w_ref, dw_b_ref, bn_g_ref, bn_b_ref, bn_m_ref, bn_v_ref,
    pw2_w_ref, pw2_b_ref,
    # feed-forward
    g_ff_ref, b_ff_ref, ff_w1_ref, ff_b1_ref, ff_w2_ref, ff_b2_ref,
    # final layer norm
    g_fin_ref, b_fin_ref,
    # output
    o_ref,
    # scratch: halo-padded buffer for the depthwise conv taps
    dwpad_ref,
    *, n_heads, kernel_size):
    x = x_ref[0]                                    # (T, D) f32
    T, D = x.shape
    dk = D // n_heads

    # ---- 1) macaron FFN: x = x + 0.5 * (relu(LN(x) W1 + b1) W2 + b2) --------
    y = _ln(x, g_mac_ref[...], b_mac_ref[...])
    h = jnp.maximum(_mm(y, mac_w1_ref[...]) + mac_b1_ref[...], 0.0)
    x = x + 0.5 * (_mm(h, mac_w2_ref[...]) + mac_b2_ref[...])

    # ---- 2) multi-head self-attention: x = x + MHA(LN(x), mask) -------------
    lnx = _ln(x, g_mha_ref[...], b_mha_ref[...]).astype(MATMUL_DTYPE)
    # Full-width projections: three (T,D)@(D,D) matmuls (full lane occupancy,
    # K=D contraction) instead of 3*H narrow N=dk per-head matmuls.
    # 1/sqrt(dk) is pre-folded into wq/bq host-side.
    qf = (_mm(lnx, wq_ref[...]) + bq_ref[...]).astype(MATMUL_DTYPE)   # (T, D)
    kf = (_mm(lnx, wk_ref[...]) + bk_ref[...]).astype(MATMUL_DTYPE)   # (T, D)
    vf = (_mm(lnx, wv_ref[...]) + bv_ref[...]).astype(MATMUL_DTYPE)   # (T, D)

    m = mask_ref[0]                                 # (1, T); 1.0 keep, 0.0 mask
    bias = jnp.where(m == 0.0, MASK_BIAS, 0.0)      # finite additive score bias

    # TODO(synk): for long sequences (T >> 1k) tile T and switch to a
    # flash-style online-softmax KV loop; unnecessary at these shapes.
    ctx_heads = []
    for hd in range(n_heads):
        lo = hd * dk
        qh, kh, vh = qf[:, lo:lo + dk], kf[:, lo:lo + dk], vf[:, lo:lo + dk]
        s = _mm_nt(qh, kh) + bias                   # (T, T) f32
        e = jnp.exp(s - jnp.max(s, axis=-1, keepdims=True))
        # masked columns are exactly 0 (exp underflow of the -1e30 bias), so no
        # per-head where() is needed.  Normalization is deferred: scale the
        # (T, dk) context by the EUP reciprocal instead of dividing (T, T).
        inv = pl.reciprocal(jnp.sum(e, axis=-1, keepdims=True), approx=True)
        ctx_heads.append(_mm(e, vh) * inv)          # (T, dk) f32
    ctx = jnp.concatenate(ctx_heads, axis=-1)       # (T, D) f32
    # espnet zeroes the attention matrix when every key is masked -> zero ctx.
    keep = (jnp.max(m, axis=-1, keepdims=True) > 0.0).astype(jnp.float32)
    ctx = ctx * keep
    # Single full-depth (K=D) output projection instead of H K=dk matmuls.
    x = x + _mm(ctx, wo_ref[...]) + bo_ref[...]

    # ---- 3) convolution module: pw-conv -> GLU -> dw-conv -> BN -> Swish -> pw-conv
    lnx = _ln(x, g_cnv_ref[...], b_cnv_ref[...]).astype(MATMUL_DTYPE)
    # pointwise conv 1 + GLU with pre-split content / gate weights
    a = _mm(lnx, pw1a_w_ref[...]) + pw1a_b_ref[...]
    gate = _mm(lnx, pw1g_w_ref[...]) + pw1g_b_ref[...]
    y = a * jax.nn.sigmoid(gate)                    # (T, D) f32

    # depthwise conv, zero ("same") padding: K shifted multiply-adds read out of
    # a halo-padded VMEM scratch.  Interior lands at a sublane-aligned offset;
    # only the 2*pad halo rows are zeroed (tiny stores, each step, so scratch
    # state never leaks across megacore-sharded grid programs).
    pad, off = _dw_geometry(kernel_size)
    if pad > 0:
        zrows = jnp.zeros((pad, D), jnp.float32)
        dwpad_ref[off - pad:off, :] = zrows
        dwpad_ref[off + T:off + T + pad, :] = zrows
    dwpad_ref[off:off + T, :] = y
    # TODO(synk): if vld/vst ever saturates, the K shifted reads can become
    # pltpu.roll (XLU slot) instead of sublane-offset loads.
    acc = jnp.zeros((T, D), jnp.float32)
    for j in range(kernel_size):
        s0 = off - pad + j
        acc = acc + dwpad_ref[s0:s0 + T, :] * dw_w_ref[j]   # dw_w_ref[j]: (1, D)
    y = acc + dw_b_ref[...]

    # batch norm (eval mode, running stats) + swish — all f32 VPU/EUP work
    y = (y - bn_m_ref[...]) * jax.lax.rsqrt(bn_v_ref[...] + BN_EPS) \
        * bn_g_ref[...] + bn_b_ref[...]
    y = y * jax.nn.sigmoid(y)
    # pointwise conv 2
    x = x + _mm(y, pw2_w_ref[...]) + pw2_b_ref[...]

    # ---- 4) FFN + 5) final layer norm (fused into the same kernel) ----------
    y = _ln(x, g_ff_ref[...], b_ff_ref[...])
    h = jnp.maximum(_mm(y, ff_w1_ref[...]) + ff_b1_ref[...], 0.0)
    x = x + 0.5 * (_mm(h, ff_w2_ref[...]) + ff_b2_ref[...])
    o_ref[0] = _ln(x, g_fin_ref[...], b_fin_ref[...])


# ------------------------------ wrapper --------------------------------------


def _bcast_spec(shape):
    """Full-array block, broadcast across the batch grid axis.

    TODO(synk): on v7x (64 MiB VMEM) mark these constant-index weight blocks
    pipeline_mode=pl.Buffered(1) — double-buffering a block whose index_map is
    constant only burns VMEM.
    """
    nd = len(shape)
    return pl.BlockSpec(shape, lambda b, nd=nd: (0,) * nd)


def _vmem_limit_bytes():
    """Generation-aware scoped-VMEM limit: ~3/4 of physical capacity
    (v5e/v6e: 128 MiB -> 96 MiB, v7x: 64 MiB -> 48 MiB), capped at 100 MiB."""
    try:
        cap = int(pltpu.get_tpu_info().vmem_capacity_bytes)
    except Exception:
        cap = 64 * 1024 * 1024          # conservative fallback (fits all gens)
    return max(32 * 1024 * 1024, min(cap * 3 // 4, 100 * 1024 * 1024))


def prepare_params(P, *, n_heads):
    """One-time host-side parameter prep (hoisted out of the per-call path):
    GLU content/gate split, depthwise tap reshape, 1/sqrt(dk) folded into the
    Q projection, and all matmul weights cast to MATMUL_DTYPE (bf16).  Biases,
    LayerNorm/BatchNorm params and depthwise taps stay f32 (VPU/EUP math is
    f32; matters on v5e which has no bf16 VPU path).  Returns the flat tuple of
    kernel weight operands in kernel-argument order."""
    mha, conv = P['mha'], P['conv']
    D = mha['wq'].shape[0]
    dk = D // n_heads
    scale = 1.0 / (float(dk) ** 0.5)
    K = conv['dw_w'].shape[0]

    def mx(w):                     # MXU operand -> bf16-resident in VMEM
        return w.astype(MATMUL_DTYPE)

    pw1a_w, pw1g_w = conv['pw1_w'][:, :D], conv['pw1_w'][:, D:]
    pw1a_b, pw1g_b = conv['pw1_b'][:, :D], conv['pw1_b'][:, D:]

    return (
        P['norm_ff_macaron']['g'], P['norm_ff_macaron']['b'],
        mx(P['ff_macaron']['w1']), P['ff_macaron']['b1'],
        mx(P['ff_macaron']['w2']), P['ff_macaron']['b2'],
        P['norm_mha']['g'], P['norm_mha']['b'],
        mx(mha['wq'] * scale), mha['bq'] * scale,
        mx(mha['wk']), mha['bk'],
        mx(mha['wv']), mha['bv'],
        mx(mha['wo']), mha['bo'],
        P['norm_conv']['g'], P['norm_conv']['b'],
        mx(pw1a_w), pw1a_b, mx(pw1g_w), pw1g_b,
        conv['dw_w'].reshape(K, 1, D), conv['dw_b'],
        conv['bn_g'], conv['bn_b'], conv['bn_m'], conv['bn_v'],
        mx(conv['pw2_w']), conv['pw2_b'],
        P['norm_ff']['g'], P['norm_ff']['b'],
        mx(P['ff']['w1']), P['ff']['b1'], mx(P['ff']['w2']), P['ff']['b2'],
        P['norm_final']['g'], P['norm_final']['b'],
    )


def encoder_layer_forward(x, mask, prepared, *, n_heads, conv_kernel):
    """Pallas implementation of EncoderLayer.forward (cache=None, pos_emb=None)."""
    B, T, D = x.shape
    pad, off = _dw_geometry(conv_kernel)

    in_specs = ([pl.BlockSpec((1, T, D), lambda b: (b, 0, 0)),
                 pl.BlockSpec((1, 1, T), lambda b: (b, 0, 0))]
                + [_bcast_spec(a.shape) for a in prepared])

    # TODO(synk): for streaming inference with B == 1 on v7x, add a second
    # "parallel" grid axis (query tiles) so both TensorCores stay busy.
    out = pl.pallas_call(
        functools.partial(encoder_layer_kernel, n_heads=n_heads,
                          kernel_size=conv_kernel),
        out_shape=jax.ShapeDtypeStruct((B, T, D), jnp.float32),
        grid=(B,),
        in_specs=in_specs,
        out_specs=pl.BlockSpec((1, T, D), lambda b: (b, 0, 0)),
        scratch_shapes=[pltpu.VMEM((2 * off + T, D), jnp.float32)],
        compiler_params=pltpu.CompilerParams(
            dimension_semantics=("parallel",),
            vmem_limit_bytes=_vmem_limit_bytes()),
    )(x, mask, *prepared)
    # TODO(synk): the trailing "accent embedding" re-attention in the PyTorch
    # forward torch.load()s embeddings from a hard-coded NAS path and builds a
    # freshly randomly-initialized RelPositionMultiHeadAttention(384, 4) inside
    # forward(); it is file-/device-dependent and non-deterministic, so it has
    # no faithful Pallas equivalent and is omitted.
    return out, mask


# ------------------------------ reference (plain JAX, f32) -------------------


def ref_forward(x, mask, P, *, n_heads, conv_kernel):
    def ln(z, p):
        return _ln(z, p['g'], p['b'])

    def ffn(z, p):
        h = jnp.maximum(z @ p['w1'] + p['b1'], 0.0)
        return h @ p['w2'] + p['b2']

    B, T, D = x.shape
    x = x + 0.5 * ffn(ln(x, P['norm_ff_macaron']), P['ff_macaron'])

    p = P['mha']
    lnx = ln(x, P['norm_mha'])
    dk = D // n_heads

    def split(z):
        return z.reshape(B, T, n_heads, dk).transpose(0, 2, 1, 3)

    q = split(lnx @ p['wq'] + p['bq'])
    k = split(lnx @ p['wk'] + p['bk'])
    v = split(lnx @ p['wv'] + p['bv'])
    scores = jnp.einsum('bhqd,bhkd->bhqk', q, k) / (float(dk) ** 0.5)
    masked = (mask == 0.0)[:, None, :, :]
    neg = jnp.finfo(jnp.float32).min
    scores = jnp.where(masked, neg, scores)
    attn = jax.nn.softmax(scores, axis=-1)
    attn = jnp.where(masked, 0.0, attn)
    ctx = jnp.einsum('bhqk,bhkd->bhqd', attn, v).transpose(0, 2, 1, 3).reshape(B, T, D)
    x = x + (ctx @ p['wo'] + p['bo'])

    p = P['conv']
    lnx = ln(x, P['norm_conv'])
    y = lnx @ p['pw1_w'] + p['pw1_b']
    y = y[..., :D] * jax.nn.sigmoid(y[..., D:])
    pad = (conv_kernel - 1) // 2
    yp = jnp.pad(y, ((0, 0), (pad, pad), (0, 0)))
    acc = jnp.zeros_like(y)
    for j in range(conv_kernel):
        acc = acc + yp[:, j:j + T, :] * p['dw_w'][j][None, None, :]
    y = acc + p['dw_b']
    y = (y - p['bn_m']) * jax.lax.rsqrt(p['bn_v'] + BN_EPS) * p['bn_g'] + p['bn_b']
    y = y * jax.nn.sigmoid(y)
    x = x + (y @ p['pw2_w'] + p['pw2_b'])

    x = x + 0.5 * ffn(ln(x, P['norm_ff']), P['ff'])
    x = ln(x, P['norm_final'])
    return x, mask


# ------------------------------ params & main --------------------------------


def init_params(key, D, Hff, K):
    ks = iter(jax.random.split(key, 64))

    def w(shape, scale=0.05):
        return scale * jax.random.normal(next(ks), shape, jnp.float32)

    def ln_p():
        return {'g': 1.0 + w((1, D)), 'b': w((1, D))}

    def ff_p():
        return {'w1': w((D, Hff)), 'b1': w((1, Hff)), 'w2': w((Hff, D)), 'b2': w((1, D))}

    mha = {}
    for n in ('wq', 'wk', 'wv', 'wo'):
        mha[n] = w((D, D))
    for n in ('bq', 'bk', 'bv', 'bo'):
        mha[n] = w((1, D))
    conv = {'pw1_w': w((D, 2 * D)), 'pw1_b': w((1, 2 * D)),
            'dw_w': w((K, D)), 'dw_b': w((1, D)),
            'bn_g': 1.0 + w((1, D)), 'bn_b': w((1, D)),
            'bn_m': w((1, D)), 'bn_v': 1.0 + jnp.abs(w((1, D))),
            'pw2_w': w((D, D)), 'pw2_b': w((1, D))}
    return {'norm_ff_macaron': ln_p(), 'norm_mha': ln_p(), 'norm_conv': ln_p(),
            'norm_ff': ln_p(), 'norm_final': ln_p(),
            'ff_macaron': ff_p(), 'ff': ff_p(), 'mha': mha, 'conv': conv}


if __name__ == "__main__":
    B, T, D = 2, 8, 32
    H, HFF, K = 4, 64, 3

    key = jax.random.PRNGKey(0)
    k_x, k_p = jax.random.split(key)
    x = jax.random.normal(k_x, (B, T, D), jnp.float32)
    mask = jnp.ones((B, 1, T), jnp.float32).at[1, 0, T - 1].set(0.0)  # (#batch, 1, time)
    P = init_params(k_p, D, HFF, K)
    prepared = prepare_params(P, n_heads=H)   # one-time host-side prep (bf16 weights)

    out, out_mask = encoder_layer_forward(x, mask, prepared, n_heads=H, conv_kernel=K)
    out = jax.block_until_ready(out)

    ref, _ = ref_forward(x, mask, P, n_heads=H, conv_kernel=K)
    assert out.shape == (B, T, D)
    # bf16 MXU operands + approx reciprocal vs. the pure-f32 reference:
    # loosen the tolerance accordingly (errors observed are ~1e-3).
    err = float(jnp.max(jnp.abs(out - ref)))
    assert jnp.allclose(out, ref, rtol=2e-2, atol=2e-2), \
        f"mismatch vs reference (max abs err {err})"

    print("KERNEL_OK")
</pallas_src>

<mosaic_0001>
module attributes {stable_mosaic.version = 11 : i64} {
  func.func @encoder_layer_kernel(%arg0: i32, %arg1: memref<1x8x32xf32, #tpu.memory_space<vmem>>, %arg2: memref<1x1x8xf32, #tpu.memory_space<vmem>>, %arg3: memref<1x32xf32, #tpu.memory_space<vmem>>, %arg4: memref<1x32xf32, #tpu.memory_space<vmem>>, %arg5: memref<32x64xbf16, #tpu.memory_space<vmem>>, %arg6: memref<1x64xf32, #tpu.memory_space<vmem>>, %arg7: memref<64x32xbf16, #tpu.memory_space<vmem>>, %arg8: memref<1x32xf32, #tpu.memory_space<vmem>>, %arg9: memref<1x32xf32, #tpu.memory_space<vmem>>, %arg10: memref<1x32xf32, #tpu.memory_space<vmem>>, %arg11: memref<32x32xbf16, #tpu.memory_space<vmem>>, %arg12: memref<1x32xf32, #tpu.memory_space<vmem>>, %arg13: memref<32x32xbf16, #tpu.memory_space<vmem>>, %arg14: memref<1x32xf32, #tpu.memory_space<vmem>>, %arg15: memref<32x32xbf16, #tpu.memory_space<vmem>>, %arg16: memref<1x32xf32, #tpu.memory_space<vmem>>, %arg17: memref<32x32xbf16, #tpu.memory_space<vmem>>, %arg18: memref<1x32xf32, #tpu.memory_space<vmem>>, %arg19: memref<1x32xf32, #tpu.memory_space<vmem>>, %arg20: memref<1x32xf32, #tpu.memory_space<vmem>>, %arg21: memref<32x32xbf16, #tpu.memory_space<vmem>>, %arg22: memref<1x32xf32, #tpu.memory_space<vmem>>, %arg23: memref<32x32xbf16, #tpu.memory_space<vmem>>, %arg24: memref<1x32xf32, #tpu.memory_space<vmem>>, %arg25: memref<3x1x32xf32, #tpu.memory_space<vmem>>, %arg26: memref<1x32xf32, #tpu.memory_space<vmem>>, %arg27: memref<1x32xf32, #tpu.memory_space<vmem>>, %arg28: memref<1x32xf32, #tpu.memory_space<vmem>>, %arg29: memref<1x32xf32, #tpu.memory_space<vmem>>, %arg30: memref<1x32xf32, #tpu.memory_space<vmem>>, %arg31: memref<32x32xbf16, #tpu.memory_space<vmem>>, %arg32: memref<1x32xf32, #tpu.memory_space<vmem>>, %arg33: memref<1x32xf32, #tpu.memory_space<vmem>>, %arg34: memref<1x32xf32, #tpu.memory_space<vmem>>, %arg35: memref<32x64xbf16, #tpu.memory_space<vmem>>, %arg36: memref<1x64xf32, #tpu.memory_space<vmem>>, %arg37: memref<64x32xbf16, #tpu.memory_space<vmem>>, %arg38: memref<1x32xf32, #tpu.memory_space<vmem>>, %arg39: memref<1x32xf32, #tpu.memory_space<vmem>>, %arg40: memref<1x32xf32, #tpu.memory_space<vmem>>, %arg41: memref<1x8x32xf32, #tpu.memory_space<vmem>>, %arg42: memref<24x32xf32, #tpu.memory_space<vmem>>) attributes {dimension_semantics = [#tpu.dimension_semantics<parallel>], iteration_bounds = array<i64: 2>, scalar_prefetch = 0 : i64, scratch_operands = 1 : i64, tpu.core_type = #tpu.core_type<tc>, window_params = [{transform_indices = @transform_0, window_bounds = array<i64: 1, 8, 32>}, {transform_indices = @transform_1, window_bounds = array<i64: 1, 1, 8>}, {pipeline_mode = #tpu.pipeline_mode<synchronous>, transform_indices = @transform_2, window_bounds = array<i64: 1, 32>}, {pipeline_mode = #tpu.pipeline_mode<synchronous>, transform_indices = @transform_3, window_bounds = array<i64: 1, 32>}, {pipeline_mode = #tpu.pipeline_mode<synchronous>, transform_indices = @transform_4, window_bounds = array<i64: 32, 64>}, {pipeline_mode = #tpu.pipeline_mode<synchronous>, transform_indices = @transform_5, window_bounds = array<i64: 1, 64>}, {pipeline_mode = #tpu.pipeline_mode<synchronous>, transform_indices = @transform_6, window_bounds = array<i64: 64, 32>}, {pipeline_mode = #tpu.pipeline_mode<synchronous>, transform_indices = @transform_7, window_bounds = array<i64: 1, 32>}, {pipeline_mode = #tpu.pipeline_mode<synchronous>, transform_indices = @transform_8, window_bounds = array<i64: 1, 32>}, {pipeline_mode = #tpu.pipeline_mode<synchronous>, transform_indices = @transform_9, window_bounds = array<i64: 1, 32>}, {pipeline_mode = #tpu.pipeline_mode<synchronous>, transform_indices = @transform_10, window_bounds = array<i64: 32, 32>}, {pipeline_mode = #tpu.pipeline_mode<synchronous>, transform_indices = @transform_11, window_bounds = array<i64: 1, 32>}, {pipeline_mode = #tpu.pipeline_mode<synchronous>, transform_indices = @transform_12, window_bounds = array<i64: 32, 32>}, {pipeline_mode = #tpu.pipeline_mode<synchronous>, transform_indices = @transform_13, window_bounds = array<i64: 1, 32>}, {pipeline_mode = #tpu.pipeline_mode<synchronous>, transform_indices = @transform_14, window_bounds = array<i64: 32, 32>}, {pipeline_mode = #tpu.pipeline_mode<synchronous>, transform_indices = @transform_15, window_bounds = array<i64: 1, 32>}, {pipeline_mode = #tpu.pipeline_mode<synchronous>, transform_indices = @transform_16, window_bounds = array<i64: 32, 32>}, {pipeline_mode = #tpu.pipeline_mode<synchronous>, transform_indices = @transform_17, window_bounds = array<i64: 1, 32>}, {pipeline_mode = #tpu.pipeline_mode<synchronous>, transform_indices = @transform_18, window_bounds = array<i64: 1, 32>}, {pipeline_mode = #tpu.pipeline_mode<synchronous>, transform_indices = @transform_19, window_bounds = array<i64: 1, 32>}, {pipeline_mode = #tpu.pipeline_mode<synchronous>, transform_indices = @transform_20, window_bounds = array<i64: 32, 32>}, {pipeline_mode = #tpu.pipeline_mode<synchronous>, transform_indices = @transform_21, window_bounds = array<i64: 1, 32>}, {pipeline_mode = #tpu.pipeline_mode<synchronous>, transform_indices = @transform_22, window_bounds = array<i64: 32, 32>}, {pipeline_mode = #tpu.pipeline_mode<synchronous>, transform_indices = @transform_23, window_bounds = array<i64: 1, 32>}, {pipeline_mode = #tpu.pipeline_mode<synchronous>, transform_indices = @transform_24, window_bounds = array<i64: 3, 1, 32>}, {pipeline_mode = #tpu.pipeline_mode<synchronous>, transform_indices = @transform_25, window_bounds = array<i64: 1, 32>}, {pipeline_mode = #tpu.pipeline_mode<synchronous>, transform_indices = @transform_26, window_bounds = array<i64: 1, 32>}, {pipeline_mode = #tpu.pipeline_mode<synchronous>, transform_indices = @transform_27, window_bounds = array<i64: 1, 32>}, {pipeline_mode = #tpu.pipeline_mode<synchronous>, transform_indices = @transform_28, window_bounds = array<i64: 1, 32>}, {pipeline_mode = #tpu.pipeline_mode<synchronous>, transform_indices = @transform_29, window_bounds = array<i64: 1, 32>}, {pipeline_mode = #tpu.pipeline_mode<synchronous>, transform_indices = @transform_30, window_bounds = array<i64: 32, 32>}, {pipeline_mode = #tpu.pipeline_mode<synchronous>, transform_indices = @transform_31, window_bounds = array<i64: 1, 32>}, {pipeline_mode = #tpu.pipeline_mode<synchronous>, transform_indices = @transform_32, window_bounds = array<i64: 1, 32>}, {pipeline_mode = #tpu.pipeline_mode<synchronous>, transform_indices = @transform_33, window_bounds = array<i64: 1, 32>}, {pipeline_mode = #tpu.pipeline_mode<synchronous>, transform_indices = @transform_34, window_bounds = array<i64: 32, 64>}, {pipeline_mode = #tpu.pipeline_mode<synchronous>, transform_indices = @transform_35, window_bounds = array<i64: 1, 64>}, {pipeline_mode = #tpu.pipeline_mode<synchronous>, transform_indices = @transform_36, window_bounds = array<i64: 64, 32>}, {pipeline_mode = #tpu.pipeline_mode<synchronous>, transform_indices = @transform_37, window_bounds = array<i64: 1, 32>}, {pipeline_mode = #tpu.pipeline_mode<synchronous>, transform_indices = @transform_38, window_bounds = array<i64: 1, 32>}, {pipeline_mode = #tpu.pipeline_mode<synchronous>, transform_indices = @transform_39, window_bounds = array<i64: 1, 32>}, {transform_indices = @transform_40, window_bounds = array<i64: 1, 8, 32>}]} {
    %c0 = arith.constant 0 : index
    %c0_0 = arith.constant 0 : index
    %c0_1 = arith.constant 0 : index
    %0 = vector.load %arg1[%c0, %c0_0, %c0_1] : memref<1x8x32xf32, #tpu.memory_space<vmem>>, vector<1x8x32xf32>
    %1 = vector.shape_cast %0 : vector<1x8x32xf32> to vector<8x32xf32>
    %c0_2 = arith.constant 0 : index
    %c0_3 = arith.constant 0 : index
    %2 = vector.load %arg3[%c0_2, %c0_3] : memref<1x32xf32, #tpu.memory_space<vmem>>, vector<1x32xf32>
    %c0_4 = arith.constant 0 : index
    %c0_5 = arith.constant 0 : index
    %3 = vector.load %arg4[%c0_4, %c0_5] : memref<1x32xf32, #tpu.memory_space<vmem>>, vector<1x32xf32>
    %cst = arith.constant dense<0.000000e+00> : vector<8xf32>
    %4 = vector.multi_reduction <add>, %1, %cst [1] : vector<8x32xf32> to vector<8xf32>
    %5 = vector.shape_cast %4 : vector<8xf32> to vector<8x1xf32>
    %cst_6 = arith.constant 3.200000e+01 : f32
    %6 = vector.broadcast %cst_6 : f32 to vector<8x1xf32>
    %7 = arith.divf %5, %6 : vector<8x1xf32>
    %8 = vector.broadcast %7 : vector<8x1xf32> to vector<8x32xf32>
    %9 = arith.subf %1, %8 : vector<8x32xf32>
    %10 = arith.mulf %9, %9 : vector<8x32xf32>
    %cst_7 = arith.constant dense<0.000000e+00> : vector<8xf32>
    %11 = vector.multi_reduction <add>, %10, %cst_7 [1] : vector<8x32xf32> to vector<8xf32>
    %12 = vector.shape_cast %11 : vector<8xf32> to vector<8x1xf32>
    %cst_8 = arith.constant 3.200000e+01 : f32
    %13 = vector.broadcast %cst_8 : f32 to vector<8x1xf32>
    %14 = arith.divf %12, %13 : vector<8x1xf32>
    %15 = vector.broadcast %7 : vector<8x1xf32> to vector<8x32xf32>
    %16 = arith.subf %1, %15 : vector<8x32xf32>
    %cst_9 = arith.constant 9.99999996E-13 : f32
    %17 = vector.broadcast %cst_9 : f32 to vector<8x1xf32>
    %18 = arith.addf %14, %17 : vector<8x1xf32>
    %19 = math.rsqrt %18 : vector<8x1xf32>
    %20 = vector.broadcast %19 : vector<8x1xf32> to vector<8x32xf32>
    %21 = arith.mulf %16, %20 : vector<8x32xf32>
    %22 = vector.broadcast %2 : vector<1x32xf32> to vector<8x32xf32>
    %23 = arith.mulf %21, %22 : vector<8x32xf32>
    %24 = vector.broadcast %3 : vector<1x32xf32> to vector<8x32xf32>
    %25 = arith.addf %23, %24 : vector<8x32xf32>
    %c0_10 = arith.constant 0 : index
    %c0_11 = arith.constant 0 : index
    %26 = vector.load %arg5[%c0_10, %c0_11] : memref<32x64xbf16, #tpu.memory_space<vmem>>, vector<32x64xbf16>
    %27 = arith.truncf %25 : vector<8x32xf32> to vector<8x32xbf16>
    %cst_12 = arith.constant dense<0.000000e+00> : vector<8x64xf32>
    %28 = tpu.matmul %27, %26, %cst_12 {dimension_numbers = #tpu.dot_dimension_numbers<[1], [0], [0], [1], [0, 0, 1, 1], [], []>} : vector<8x32xbf16>, vector<32x64xbf16>, vector<8x64xf32> -> vector<8x64xf32>
    %c0_13 = arith.constant 0 : index
    %c0_14 = arith.constant 0 : index
    %29 = vector.load %arg6[%c0_13, %c0_14] : memref<1x64xf32, #tpu.memory_space<vmem>>, vector<1x64xf32>
    %30 = vector.broadcast %29 : vector<1x64xf32> to vector<8x64xf32>
    %31 = arith.addf %28, %30 : vector<8x64xf32>
    %cst_15 = arith.constant 0.000000e+00 : f32
    %32 = vector.broadcast %cst_15 : f32 to vector<8x64xf32>
    %33 = arith.maximumf %31, %32 : vector<8x64xf32>
    %c0_16 = arith.constant 0 : index
    %c0_17 = arith.constant 0 : index
    %34 = vector.load %arg7[%c0_16, %c0_17] : memref<64x32xbf16, #tpu.memory_space<vmem>>, vector<64x32xbf16>
    %35 = arith.truncf %33 : vector<8x64xf32> to vector<8x64xbf16>
    %cst_18 = arith.constant dense<0.000000e+00> : vector<8x32xf32>
    %36 = tpu.matmul %35, %34, %cst_18 {dimension_numbers = #tpu.dot_dimension_numbers<[1], [0], [0], [1], [0, 0, 1, 1], [], []>} : vector<8x64xbf16>, vector<64x32xbf16>, vector<8x32xf32> -> vector<8x32xf32>
    %c0_19 = arith.constant 0 : index
    %c0_20 = arith.constant 0 : index
    %37 = vector.load %arg8[%c0_19, %c0_20] : memref<1x32xf32, #tpu.memory_space<vmem>>, vector<1x32xf32>
    %38 = vector.broadcast %37 : vector<1x32xf32> to vector<8x32xf32>
    %39 = arith.addf %36, %38 : vector<8x32xf32>
    %cst_21 = arith.constant 5.000000e-01 : f32
    %40 = vector.broadcast %cst_21 : f32 to vector<8x32xf32>
    %41 = arith.mulf %40, %39 : vector<8x32xf32>
    %42 = arith.addf %1, %41 : vector<8x32xf32>
    %c0_22 = arith.constant 0 : index
    %c0_23 = arith.constant 0 : index
    %43 = vector.load %arg9[%c0_22, %c0_23] : memref<1x32xf32, #tpu.memory_space<vmem>>, vector<1x32xf32>
    %c0_24 = arith.constant 0 : index
    %c0_25 = arith.constant 0 : index
    %44 = vector.load %arg10[%c0_24, %c0_25] : memref<1x32xf32, #tpu.memory_space<vmem>>, vector<1x32xf32>
    %cst_26 = arith.constant dense<0.000000e+00> : vector<8xf32>
    %45 = vector.multi_reduction <add>, %42, %cst_26 [1] : vector<8x32xf32> to vector<8xf32>
    %46 = vector.shape_cast %45 : vector<8xf32> to vector<8x1xf32>
    %cst_27 = arith.constant 3.200000e+01 : f32
    %47 = vector.broadcast %cst_27 : f32 to vector<8x1xf32>
    %48 = arith.divf %46, %47 : vector<8x1xf32>
    %49 = vector.broadcast %48 : vector<8x1xf32> to vector<8x32xf32>
    %50 = arith.subf %42, %49 : vector<8x32xf32>
    %51 = arith.mulf %50, %50 : vector<8x32xf32>
    %cst_28 = arith.constant dense<0.000000e+00> : vector<8xf32>
    %52 = vector.multi_reduction <add>, %51, %cst_28 [1] : vector<8x32xf32> to vector<8xf32>
    %53 = vector.shape_cast %52 : vector<8xf32> to vector<8x1xf32>
    %cst_29 = arith.constant 3.200000e+01 : f32
    %54 = vector.broadcast %cst_29 : f32 to vector<8x1xf32>
    %55 = arith.divf %53, %54 : vector<8x1xf32>
    %56 = vector.broadcast %48 : vector<8x1xf32> to vector<8x32xf32>
    %57 = arith.subf %42, %56 : vector<8x32xf32>
    %cst_30 = arith.constant 9.99999996E-13 : f32
    %58 = vector.broadcast %cst_30 : f32 to vector<8x1xf32>
    %59 = arith.addf %55, %58 : vector<8x1xf32>
    %60 = math.rsqrt %59 : vector<8x1xf32>
    %61 = vector.broadcast %60 : vector<8x1xf32> to vector<8x32xf32>
    %62 = arith.mulf %57, %61 : vector<8x32xf32>
    %63 = vector.broadcast %43 : vector<1x32xf32> to vector<8x32xf32>
    %64 = arith.mulf %62, %63 : vector<8x32xf32>
    %65 = vector.broadcast %44 : vector<1x32xf32> to vector<8x32xf32>
    %66 = arith.addf %64, %65 : vector<8x32xf32>
    %67 = arith.truncf %66 : vector<8x32xf32> to vector<8x32xbf16>
    %c0_31 = arith.constant 0 : index
    %c0_32 = arith.constant 0 : index
    %68 = vector.load %arg11[%c0_31, %c0_32] : memref<32x32xbf16, #tpu.memory_space<vmem>>, vector<32x32xbf16>
    %cst_33 = arith.constant dense<0.000000e+00> : vector<8x32xf32>
    %69 = tpu.matmul %67, %68, %cst_33 {dimension_numbers = #tpu.dot_dimension_numbers<[1], [0], [0], [1], [0, 0, 1, 1], [], []>} : vector<8x32xbf16>, vector<32x32xbf16>, vector<8x32xf32> -> vector<8x32xf32>
    %c0_34 = arith.constant 0 : index
    %c0_35 = arith.constant 0 : index
    %70 = vector.load %arg12[%c0_34, %c0_35] : memref<1x32xf32, #tpu.memory_space<vmem>>, vector<1x32xf32>
    %71 = vector.broadcast %70 : vector<1x32xf32> to vector<8x32xf32>
    %72 = arith.addf %69, %71 : vector<8x32xf32>
    %73 = arith.truncf %72 : vector<8x32xf32> to vector<8x32xbf16>
    %c0_36 = arith.constant 0 : index
    %c0_37 = arith.constant 0 : index
    %74 = vector.load %arg13[%c0_36, %c0_37] : memref<32x32xbf16, #tpu.memory_space<vmem>>, vector<32x32xbf16>
    %cst_38 = arith.constant dense<0.000000e+00> : vector<8x32xf32>
    %75 = tpu.matmul %67, %74, %cst_38 {dimension_numbers = #tpu.dot_dimension_numbers<[1], [0], [0], [1], [0, 0, 1, 1], [], []>} : vector<8x32xbf16>, vector<32x32xbf16>, vector<8x32xf32> -> vector<8x32xf32>
    %c0_39 = arith.constant 0 : index
    %c0_40 = arith.constant 0 : index
    %76 = vector.load %arg14[%c0_39, %c0_40] : memref<1x32xf32, #tpu.memory_space<vmem>>, vector<1x32xf32>
    %77 = vector.broadcast %76 : vector<1x32xf32> to vector<8x32xf32>
    %78 = arith.addf %75, %77 : vector<8x32xf32>
    %79 = arith.truncf %78 : vector<8x32xf32> to vector<8x32xbf16>
    %c0_41 = arith.constant 0 : index
    %c0_42 = arith.constant 0 : index
    %80 = vector.load %arg15[%c0_41, %c0_42] : memref<32x32xbf16, #tpu.memory_space<vmem>>, vector<32x32xbf16>
    %cst_43 = arith.constant dense<0.000000e+00> : vector<8x32xf32>
    %81 = tpu.matmul %67, %80, %cst_43 {dimension_numbers = #tpu.dot_dimension_numbers<[1], [0], [0], [1], [0, 0, 1, 1], [], []>} : vector<8x32xbf16>, vector<32x32xbf16>, vector<8x32xf32> -> vector<8x32xf32>
    %c0_44 = arith.constant 0 : index
    %c0_45 = arith.constant 0 : index
    %82 = vector.load %arg16[%c0_44, %c0_45] : memref<1x32xf32, #tpu.memory_space<vmem>>, vector<1x32xf32>
    %83 = vector.broadcast %82 : vector<1x32xf32> to vector<8x32xf32>
    %84 = arith.addf %81, %83 : vector<8x32xf32>
    %85 = arith.truncf %84 : vector<8x32xf32> to vector<8x32xbf16>
    %c0_46 = arith.constant 0 : index
    %c0_47 = arith.constant 0 : index
    %c0_48 = arith.constant 0 : index
    %86 = vector.load %arg2[%c0_46, %c0_47, %c0_48] : memref<1x1x8xf32, #tpu.memory_space<vmem>>, vector<1x1x8xf32>
    %87 = vector.shape_cast %86 : vector<1x1x8xf32> to vector<1x8xf32>
    %cst_49 = arith.constant 0.000000e+00 : f32
    %88 = vector.broadcast %cst_49 : f32 to vector<1x8xf32>
    %89 = arith.cmpf oeq, %87, %88 : vector<1x8xf32>
    %cst_50 = arith.constant -1.000000e+30 : f32
    %cst_51 = arith.constant 0.000000e+00 : f32
    %90 = vector.broadcast %cst_50 : f32 to vector<1x8xf32>
    %91 = vector.broadcast %cst_51 : f32 to vector<1x8xf32>
    %92 = arith.select %89, %90, %91 : vector<1x8xi1>, vector<1x8xf32>
    %93 = vector.extract_strided_slice %73 {offsets = [0, 0], sizes = [8, 8], strides = [1, 1]} : vector<8x32xbf16> to vector<8x8xbf16>
    %94 = vector.extract_strided_slice %79 {offsets = [0, 0], sizes = [8, 8], strides = [1, 1]} : vector<8x32xbf16> to vector<8x8xbf16>
    %95 = vector.extract_strided_slice %85 {offsets = [0, 0], sizes = [8, 8], strides = [1, 1]} : vector<8x32xbf16> to vector<8x8xbf16>
    %cst_52 = arith.constant dense<0.000000e+00> : vector<8x8xf32>
    %96 = tpu.matmul %93, %94, %cst_52 {dimension_numbers = #tpu.dot_dimension_numbers<[1], [1], [0], [0], [0, 0, 1, 0], [], []>} : vector<8x8xbf16>, vector<8x8xbf16>, vector<8x8xf32> -> vector<8x8xf32>
    %97 = vector.broadcast %92 : vector<1x8xf32> to vector<8x8xf32>
    %98 = arith.addf %96, %97 : vector<8x8xf32>
    %cst_53 = arith.constant dense<0xFF800000> : vector<8xf32>
    %99 = vector.multi_reduction <maximumf>, %98, %cst_53 [1] : vector<8x8xf32> to vector<8xf32>
    %100 = vector.shape_cast %99 : vector<8xf32> to vector<8x1xf32>
    %101 = vector.broadcast %100 : vector<8x1xf32> to vector<8x8xf32>
    %102 = arith.subf %98, %101 : vector<8x8xf32>
    %103 = math.exp %102 : vector<8x8xf32>
    %cst_54 = arith.constant dense<0.000000e+00> : vector<8xf32>
    %104 = vector.multi_reduction <add>, %103, %cst_54 [1] : vector<8x8xf32> to vector<8xf32>
    %105 = vector.shape_cast %104 : vector<8xf32> to vector<8x1xf32>
    %106 = tpu.reciprocal %105 {approx = true} : vector<8x1xf32> -> vector<8x1xf32>
    %107 = arith.truncf %103 : vector<8x8xf32> to vector<8x8xbf16>
    %cst_55 = arith.constant dense<0.000000e+00> : vector<8x8xf32>
    %108 = tpu.matmul %107, %95, %cst_55 {dimension_numbers = #tpu.dot_dimension_numbers<[1], [0], [0], [1], [0, 0, 1, 1], [], []>} : vector<8x8xbf16>, vector<8x8xbf16>, vector<8x8xf32> -> vector<8x8xf32>
    %109 = vector.broadcast %106 : vector<8x1xf32> to vector<8x8xf32>
    %110 = arith.mulf %108, %109 : vector<8x8xf32>
    %111 = vector.extract_strided_slice %73 {offsets = [0, 8], sizes = [8, 8], strides = [1, 1]} : vector<8x32xbf16> to vector<8x8xbf16>
    %112 = vector.extract_strided_slice %79 {offsets = [0, 8], sizes = [8, 8], strides = [1, 1]} : vector<8x32xbf16> to vector<8x8xbf16>
    %113 = vector.extract_strided_slice %85 {offsets = [0, 8], sizes = [8, 8], strides = [1, 1]} : vector<8x32xbf16> to vector<8x8xbf16>
    %cst_56 = arith.constant dense<0.000000e+00> : vector<8x8xf32>
    %114 = tpu.matmul %111, %112, %cst_56 {dimension_numbers = #tpu.dot_dimension_numbers<[1], [1], [0], [0], [0, 0, 1, 0], [], []>} : vector<8x8xbf16>, vector<8x8xbf16>, vector<8x8xf32> -> vector<8x8xf32>
    %115 = vector.broadcast %92 : vector<1x8xf32> to vector<8x8xf32>
    %116 = arith.addf %114, %115 : vector<8x8xf32>
    %cst_57 = arith.constant dense<0xFF800000> : vector<8xf32>
    %117 = vector.multi_reduction <maximumf>, %116, %cst_57 [1] : vector<8x8xf32> to vector<8xf32>
    %118 = vector.shape_cast %117 : vector<8xf32> to vector<8x1xf32>
    %119 = vector.broadcast %118 : vector<8x1xf32> to vector<8x8xf32>
    %120 = arith.subf %116, %119 : vector<8x8xf32>
    %121 = math.exp %120 : vector<8x8xf32>
    %cst_58 = arith.constant dense<0.000000e+00> : vector<8xf32>
    %122 = vector.multi_reduction <add>, %121, %cst_58 [1] : vector<8x8xf32> to vector<8xf32>
    %123 = vector.shape_cast %122 : vector<8xf32> to vector<8x1xf32>
    %124 = tpu.reciprocal %123 {approx = true} : vector<8x1xf32> -> vector<8x1xf32>
    %125 = arith.truncf %121 : vector<8x8xf32> to vector<8x8xbf16>
    %cst_59 = arith.constant dense<0.000000e+00> : vector<8x8xf32>
    %126 = tpu.matmul %125, %113, %cst_59 {dimension_numbers = #tpu.dot_dimension_numbers<[1], [0], [0], [1], [0, 0, 1, 1], [], []>} : vector<8x8xbf16>, vector<8x8xbf16>, vector<8x8xf32> -> vector<8x8xf32>
    %127 = vector.broadcast %124 : vector<8x1xf32> to vector<8x8xf32>
    %128 = arith.mulf %126, %127 : vector<8x8xf32>
    %129 = vector.extract_strided_slice %73 {offsets = [0, 16], sizes = [8, 8], strides = [1, 1]} : vector<8x32xbf16> to vector<8x8xbf16>
    %130 = vector.extract_strided_slice %79 {offsets = [0, 16], sizes = [8, 8], strides = [1, 1]} : vector<8x32xbf16> to vector<8x8xbf16>
    %131 = vector.extract_strided_slice %85 {offsets = [0, 16], sizes = [8, 8], strides = [1, 1]} : vector<8x32xbf16> to vector<8x8xbf16>
    %cst_60 = arith.constant dense<0.000000e+00> : vector<8x8xf32>
    %132 = tpu.matmul %129, %130, %cst_60 {dimension_numbers = #tpu.dot_dimension_numbers<[1], [1], [0], [0], [0, 0, 1, 0], [], []>} : vector<8x8xbf16>, vector<8x8xbf16>, vector<8x8xf32> -> vector<8x8xf32>
    %133 = vector.broadcast %92 : vector<1x8xf32> to vector<8x8xf32>
    %134 = arith.addf %132, %133 : vector<8x8xf32>
    %cst_61 = arith.constant dense<0xFF800000> : vector<8xf32>
    %135 = vector.multi_reduction <maximumf>, %134, %cst_61 [1] : vector<8x8xf32> to vector<8xf32>
    %136 = vector.shape_cast %135 : vector<8xf32> to vector<8x1xf32>
    %137 = vector.broadcast %136 : vector<8x1xf32> to vector<8x8xf32>
    %138 = arith.subf %134, %137 : vector<8x8xf32>
    %139 = math.exp %138 : vector<8x8xf32>
    %cst_62 = arith.constant dense<0.000000e+00> : vector<8xf32>
    %140 = vector.multi_reduction <add>, %139, %cst_62 [1] : vector<8x8xf32> to vector<8xf32>
    %141 = vector.shape_cast %140 : vector<8xf32> to vector<8x1xf32>
    %142 = tpu.reciprocal %141 {approx = true} : vector<8x1xf32> -> vector<8x1xf32>
    %143 = arith.truncf %139 : vector<8x8xf32> to vector<8x8xbf16>
    %cst_63 = arith.constant dense<0.000000e+00> : vector<8x8xf32>
    %144 = tpu.matmul %143, %131, %cst_63 {dimension_numbers = #tpu.dot_dimension_numbers<[1], [0], [0], [1], [0, 0, 1, 1], [], []>} : vector<8x8xbf16>, vector<8x8xbf16>, vector<8x8xf32> -> vector<8x8xf32>
    %145 = vector.broadcast %142 : vector<8x1xf32> to vector<8x8xf32>
    %146 = arith.mulf %144, %145 : vector<8x8xf32>
    %147 = vector.extract_strided_slice %73 {offsets = [0, 24], sizes = [8, 8], strides = [1, 1]} : vector<8x32xbf16> to vector<8x8xbf16>
    %148 = vector.extract_strided_slice %79 {offsets = [0, 24], sizes = [8, 8], strides = [1, 1]} : vector<8x32xbf16> to vector<8x8xbf16>
    %149 = vector.extract_strided_slice %85 {offsets = [0, 24], sizes = [8, 8], strides = [1, 1]} : vector<8x32xbf16> to vector<8x8xbf16>
    %cst_64 = arith.constant dense<0.000000e+00> : vector<8x8xf32>
    %150 = tpu.matmul %147, %148, %cst_64 {dimension_numbers = #tpu.dot_dimension_numbers<[1], [1], [0], [0], [0, 0, 1, 0], [], []>} : vector<8x8xbf16>, vector<8x8xbf16>, vector<8x8xf32> -> vector<8x8xf32>
    %151 = vector.broadcast %92 : vector<1x8xf32> to vector<8x8xf32>
    %152 = arith.addf %150, %151 : vector<8x8xf32>
    %cst_65 = arith.constant dense<0xFF800000> : vector<8xf32>
    %153 = vector.multi_reduction <maximumf>, %152, %cst_65 [1] : vector<8x8xf32> to vector<8xf32>
    %154 = vector.shape_cast %153 : vector<8xf32> to vector<8x1xf32>
    %155 = vector.broadcast %154 : vector<8x1xf32> to vector<8x8xf32>
    %156 = arith.subf %152, %155 : vector<8x8xf32>
    %157 = math.exp %156 : vector<8x8xf32>
    %cst_66 = arith.constant dense<0.000000e+00> : vector<8xf32>
    %158 = vector.multi_reduction <add>, %157, %cst_66 [1] : vector<8x8xf32> to vector<8xf32>
    %159 = vector.shape_cast %158 : vector<8xf32> to vector<8x1xf32>
    %160 = tpu.reciprocal %159 {approx = true} : vector<8x1xf32> -> vector<8x1xf32>
    %161 = arith.truncf %157 : vector<8x8xf32> to vector<8x8xbf16>
    %cst_67 = arith.constant dense<0.000000e+00> : vector<8x8xf32>
    %162 = tpu.matmul %161, %149, %cst_67 {dimension_numbers = #tpu.dot_dimension_numbers<[1], [0], [0], [1], [0, 0, 1, 1], [], []>} : vector<8x8xbf16>, vector<8x8xbf16>, vector<8x8xf32> -> vector<8x8xf32>
    %163 = vector.broadcast %160 : vector<8x1xf32> to vector<8x8xf32>
    %164 = arith.mulf %162, %163 : vector<8x8xf32>
    %165 = tpu.concatenate %110, %128, %146, %164 in 1 : vector<8x8xf32>, vector<8x8xf32>, vector<8x8xf32>, vector<8x8xf32> -> vector<8x32xf32>
    %cst_68 = arith.constant dense<0xFF800000> : vector<1xf32>
    %166 = vector.multi_reduction <maximumf>, %87, %cst_68 [1] : vector<1x8xf32> to vector<1xf32>
    %167 = vector.shape_cast %166 : vector<1xf32> to vector<1x1xf32>
    %cst_69 = arith.constant 0.000000e+00 : f32
    %168 = vector.broadcast %cst_69 : f32 to vector<1x1xf32>
    %169 = arith.cmpf ogt, %167, %168 : vector<1x1xf32>
    %170 = arith.extui %169 : vector<1x1xi1> to vector<1x1xi32>
    %171 = arith.sitofp %170 : vector<1x1xi32> to vector<1x1xf32>
    %172 = vector.broadcast %171 : vector<1x1xf32> to vector<8x32xf32>
    %173 = arith.mulf %165, %172 : vector<8x32xf32>
    %c0_70 = arith.constant 0 : index
    %c0_71 = arith.constant 0 : index
    %174 = vector.load %arg17[%c0_70, %c0_71] : memref<32x32xbf16, #tpu.memory_space<vmem>>, vector<32x32xbf16>
    %175 = arith.truncf %173 : vector<8x32xf32> to vector<8x32xbf16>
    %cst_72 = arith.constant dense<0.000000e+00> : vector<8x32xf32>
    %176 = tpu.matmul %175, %174, %cst_72 {dimension_numbers = #tpu.dot_dimension_numbers<[1], [0], [0], [1], [0, 0, 1, 1], [], []>} : vector<8x32xbf16>, vector<32x32xbf16>, vector<8x32xf32> -> vector<8x32xf32>
    %177 = arith.addf %42, %176 : vector<8x32xf32>
    %c0_73 = arith.constant 0 : index
    %c0_74 = arith.constant 0 : index
    %178 = vector.load %arg18[%c0_73, %c0_74] : memref<1x32xf32, #tpu.memory_space<vmem>>, vector<1x32xf32>
    %179 = vector.broadcast %178 : vector<1x32xf32> to vector<8x32xf32>
    %180 = arith.addf %177, %179 : vector<8x32xf32>
    %c0_75 = arith.constant 0 : index
    %c0_76 = arith.constant 0 : index
    %181 = vector.load %arg19[%c0_75, %c0_76] : memref<1x32xf32, #tpu.memory_space<vmem>>, vector<1x32xf32>
    %c0_77 = arith.constant 0 : index
    %c0_78 = arith.constant 0 : index
    %182 = vector.load %arg20[%c0_77, %c0_78] : memref<1x32xf32, #tpu.memory_space<vmem>>, vector<1x32xf32>
    %cst_79 = arith.constant dense<0.000000e+00> : vector<8xf32>
    %183 = vector.multi_reduction <add>, %180, %cst_79 [1] : vector<8x32xf32> to vector<8xf32>
    %184 = vector.shape_cast %183 : vector<8xf32> to vector<8x1xf32>
    %cst_80 = arith.constant 3.200000e+01 : f32
    %185 = vector.broadcast %cst_80 : f32 to vector<8x1xf32>
    %186 = arith.divf %184, %185 : vector<8x1xf32>
    %187 = vector.broadcast %186 : vector<8x1xf32> to vector<8x32xf32>
    %188 = arith.subf %180, %187 : vector<8x32xf32>
    %189 = arith.mulf %188, %188 : vector<8x32xf32>
    %cst_81 = arith.constant dense<0.000000e+00> : vector<8xf32>
    %190 = vector.multi_reduction <add>, %189, %cst_81 [1] : vector<8x32xf32> to vector<8xf32>
    %191 = vector.shape_cast %190 : vector<8xf32> to vector<8x1xf32>
    %cst_82 = arith.constant 3.200000e+01 : f32
    %192 = vector.broadcast %cst_82 : f32 to vector<8x1xf32>
    %193 = arith.divf %191, %192 : vector<8x1xf32>
    %194 = vector.broadcast %186 : vector<8x1xf32> to vector<8x32xf32>
    %195 = arith.subf %180, %194 : vector<8x32xf32>
    %cst_83 = arith.constant 9.99999996E-13 : f32
    %196 = vector.broadcast %cst_83 : f32 to vector<8x1xf32>
    %197 = arith.addf %193, %196 : vector<8x1xf32>
    %198 = math.rsqrt %197 : vector<8x1xf32>
    %199 = vector.broadcast %198 : vector<8x1xf32> to vector<8x32xf32>
    %200 = arith.mulf %195, %199 : vector<8x32xf32>
    %201 = vector.broadcast %181 : vector<1x32xf32> to vector<8x32xf32>
    %202 = arith.mulf %200, %201 : vector<8x32xf32>
    %203 = vector.broadcast %182 : vector<1x32xf32> to vector<8x32xf32>
    %204 = arith.addf %202, %203 : vector<8x32xf32>
    %205 = arith.truncf %204 : vector<8x32xf32> to vector<8x32xbf16>
    %c0_84 = arith.constant 0 : index
    %c0_85 = arith.constant 0 : index
    %206 = vector.load %arg21[%c0_84, %c0_85] : memref<32x32xbf16, #tpu.memory_space<vmem>>, vector<32x32xbf16>
    %cst_86 = arith.constant dense<0.000000e+00> : vector<8x32xf32>
    %207 = tpu.matmul %205, %206, %cst_86 {dimension_numbers = #tpu.dot_dimension_numbers<[1], [0], [0], [1], [0, 0, 1, 1], [], []>} : vector<8x32xbf16>, vector<32x32xbf16>, vector<8x32xf32> -> vector<8x32xf32>
    %c0_87 = arith.constant 0 : index
    %c0_88 = arith.constant 0 : index
    %208 = vector.load %arg22[%c0_87, %c0_88] : memref<1x32xf32, #tpu.memory_space<vmem>>, vector<1x32xf32>
    %209 = vector.broadcast %208 : vector<1x32xf32> to vector<8x32xf32>
    %210 = arith.addf %207, %209 : vector<8x32xf32>
    %c0_89 = arith.constant 0 : index
    %c0_90 = arith.constant 0 : index
    %211 = vector.load %arg23[%c0_89, %c0_90] : memref<32x32xbf16, #tpu.memory_space<vmem>>, vector<32x32xbf16>
    %cst_91 = arith.constant dense<0.000000e+00> : vector<8x32xf32>
    %212 = tpu.matmul %205, %211, %cst_91 {dimension_numbers = #tpu.dot_dimension_numbers<[1], [0], [0], [1], [0, 0, 1, 1], [], []>} : vector<8x32xbf16>, vector<32x32xbf16>, vector<8x32xf32> -> vector<8x32xf32>
    %c0_92 = arith.constant 0 : index
    %c0_93 = arith.constant 0 : index
    %213 = vector.load %arg24[%c0_92, %c0_93] : memref<1x32xf32, #tpu.memory_space<vmem>>, vector<1x32xf32>
    %214 = vector.broadcast %213 : vector<1x32xf32> to vector<8x32xf32>
    %215 = arith.addf %212, %214 : vector<8x32xf32>
    %216 = arith.negf %215 : vector<8x32xf32>
    %217 = math.exp %216 : vector<8x32xf32>
    %cst_94 = arith.constant 1.000000e+00 : f32
    %218 = vector.broadcast %cst_94 : f32 to vector<8x32xf32>
    %219 = arith.addf %218, %217 : vector<8x32xf32>
    %220 = arith.divf %218, %219 : vector<8x32xf32>
    %221 = arith.mulf %210, %220 : vector<8x32xf32>
    %cst_95 = arith.constant 0.000000e+00 : f32
    %222 = vector.broadcast %cst_95 : f32 to vector<1x32xf32>
    %c7 = arith.constant 7 : index
    %c0_96 = arith.constant 0 : index
    %223 = vector.load %arg42[%c7, %c0_96] : memref<24x32xf32, #tpu.memory_space<vmem>>, vector<1x32xf32>
    tpu.vector_store %arg42[%c7, %c0_96], %222 {strides = array<i32>} : memref<24x32xf32, #tpu.memory_space<vmem>>, vector<1x32xf32>,
    %c16 = arith.constant 16 : index
    %c0_97 = arith.constant 0 : index
    %224 = vector.load %arg42[%c16, %c0_97] : memref<24x32xf32, #tpu.memory_space<vmem>>, vector<1x32xf32>
    tpu.vector_store %arg42[%c16, %c0_97], %222 {strides = array<i32>} : memref<24x32xf32, #tpu.memory_space<vmem>>, vector<1x32xf32>,
    %c8 = arith.constant 8 : index
    %c0_98 = arith.constant 0 : index
    %225 = vector.load %arg42[%c8, %c0_98] : memref<24x32xf32, #tpu.memory_space<vmem>>, vector<8x32xf32>
    tpu.vector_store %arg42[%c8, %c0_98], %221 {strides = array<i32>} : memref<24x32xf32, #tpu.memory_space<vmem>>, vector<8x32xf32>,
    %cst_99 = arith.constant 0.000000e+00 : f32
    %226 = vector.broadcast %cst_99 : f32 to vector<8x32xf32>
    %c7_100 = arith.constant 7 : index
    %c0_101 = arith.constant 0 : index
    %227 = vector.load %arg42[%c7_100, %c0_101] : memref<24x32xf32, #tpu.memory_space<vmem>>, vector<8x32xf32>
    %c0_102 = arith.constant 0 : index
    %c0_103 = arith.constant 0 : index
    %c0_104 = arith.constant 0 : index
    %228 = vector.load %arg25[%c0_102, %c0_103, %c0_104] : memref<3x1x32xf32, #tpu.memory_space<vmem>>, vector<1x1x32xf32>
    %229 = vector.shape_cast %228 : vector<1x1x32xf32> to vector<1x32xf32>
    %230 = vector.broadcast %229 : vector<1x32xf32> to vector<8x32xf32>
    %231 = arith.mulf %227, %230 : vector<8x32xf32>
    %232 = arith.addf %226, %231 : vector<8x32xf32>
    %c8_105 = arith.constant 8 : index
    %c0_106 = arith.constant 0 : index
    %233 = vector.load %arg42[%c8_105, %c0_106] : memref<24x32xf32, #tpu.memory_space<vmem>>, vector<8x32xf32>
    %c1 = arith.constant 1 : index
    %c0_107 = arith.constant 0 : index
    %c0_108 = arith.constant 0 : index
    %234 = vector.load %arg25[%c1, %c0_107, %c0_108] : memref<3x1x32xf32, #tpu.memory_space<vmem>>, vector<1x1x32xf32>
    %235 = vector.shape_cast %234 : vector<1x1x32xf32> to vector<1x32xf32>
    %236 = vector.broadcast %235 : vector<1x32xf32> to vector<8x32xf32>
    %237 = arith.mulf %233, %236 : vector<8x32xf32>
    %238 = arith.addf %232, %237 : vector<8x32xf32>
    %c9 = arith.constant 9 : index
    %c0_109 = arith.constant 0 : index
    %239 = vector.load %arg42[%c9, %c0_109] : memref<24x32xf32, #tpu.memory_space<vmem>>, vector<8x32xf32>
    %c2 = arith.constant 2 : index
    %c0_110 = arith.constant 0 : index
    %c0_111 = arith.constant 0 : index
    %240 = vector.load %arg25[%c2, %c0_110, %c0_111] : memref<3x1x32xf32, #tpu.memory_space<vmem>>, vector<1x1x32xf32>
    %241 = vector.shape_cast %240 : vector<1x1x32xf32> to vector<1x32xf32>
    %242 = vector.broadcast %241 : vector<1x32xf32> to vector<8x32xf32>
    %243 = arith.mulf %239, %242 : vector<8x32xf32>
    %244 = arith.addf %238, %243 : vector<8x32xf32>
    %c0_112 = arith.constant 0 : index
    %c0_113 = arith.constant 0 : index
    %245 = vector.load %arg26[%c0_112, %c0_113] : memref<1x32xf32, #tpu.memory_space<vmem>>, vector<1x32xf32>
    %246 = vector.broadcast %245 : vector<1x32xf32> to vector<8x32xf32>
    %247 = arith.addf %244, %246 : vector<8x32xf32>
    %c0_114 = arith.constant 0 : index
    %c0_115 = arith.constant 0 : index
    %248 = vector.load %arg29[%c0_114, %c0_115] : memref<1x32xf32, #tpu.memory_space<vmem>>, vector<1x32xf32>
    %249 = vector.broadcast %248 : vector<1x32xf32> to vector<8x32xf32>
    %250 = arith.subf %247, %249 : vector<8x32xf32>
    %c0_116 = arith.constant 0 : index
    %c0_117 = arith.constant 0 : index
    %251 = vector.load %arg30[%c0_116, %c0_117] : memref<1x32xf32, #tpu.memory_space<vmem>>, vector<1x32xf32>
    %cst_118 = arith.constant 9.99999974E-6 : f32
    %252 = vector.broadcast %cst_118 : f32 to vector<1x32xf32>
    %253 = arith.addf %251, %252 : vector<1x32xf32>
    %254 = math.rsqrt %253 : vector<1x32xf32>
    %255 = vector.broadcast %254 : vector<1x32xf32> to vector<8x32xf32>
    %256 = arith.mulf %250, %255 : vector<8x32xf32>
    %c0_119 = arith.constant 0 : index
    %c0_120 = arith.constant 0 : index
    %257 = vector.load %arg27[%c0_119, %c0_120] : memref<1x32xf32, #tpu.memory_space<vmem>>, vector<1x32xf32>
    %258 = vector.broadcast %257 : vector<1x32xf32> to vector<8x32xf32>
    %259 = arith.mulf %256, %258 : vector<8x32xf32>
    %c0_121 = arith.constant 0 : index
    %c0_122 = arith.constant 0 : index
    %260 = vector.load %arg28[%c0_121, %c0_122] : memref<1x32xf32, #tpu.memory_space<vmem>>, vector<1x32xf32>
    %261 = vector.broadcast %260 : vector<1x32xf32> to vector<8x32xf32>
    %262 = arith.addf %259, %261 : vector<8x32xf32>
    %263 = arith.negf %262 : vector<8x32xf32>
    %264 = math.exp %263 : vector<8x32xf32>
    %cst_123 = arith.constant 1.000000e+00 : f32
    %265 = vector.broadcast %cst_123 : f32 to vector<8x32xf32>
    %266 = arith.addf %265, %264 : vector<8x32xf32>
    %267 = arith.divf %265, %266 : vector<8x32xf32>
    %268 = arith.mulf %262, %267 : vector<8x32xf32>
    %c0_124 = arith.constant 0 : index
    %c0_125 = arith.constant 0 : index
    %269 = vector.load %arg31[%c0_124, %c0_125] : memref<32x32xbf16, #tpu.memory_space<vmem>>, vector<32x32xbf16>
    %270 = arith.truncf %268 : vector<8x32xf32> to vector<8x32xbf16>
    %cst_126 = arith.constant dense<0.000000e+00> : vector<8x32xf32>
    %271 = tpu.matmul %270, %269, %cst_126 {dimension_numbers = #tpu.dot_dimension_numbers<[1], [0], [0], [1], [0, 0, 1, 1], [], []>} : vector<8x32xbf16>, vector<32x32xbf16>, vector<8x32xf32> -> vector<8x32xf32>
    %272 = arith.addf %180, %271 : vector<8x32xf32>
    %c0_127 = arith.constant 0 : index
    %c0_128 = arith.constant 0 : index
    %273 = vector.load %arg32[%c0_127, %c0_128] : memref<1x32xf32, #tpu.memory_space<vmem>>, vector<1x32xf32>
    %274 = vector.broadcast %273 : vector<1x32xf32> to vector<8x32xf32>
    %275 = arith.addf %272, %274 : vector<8x32xf32>
    %c0_129 = arith.constant 0 : index
    %c0_130 = arith.constant 0 : index
    %276 = vector.load %arg33[%c0_129, %c0_130] : memref<1x32xf32, #tpu.memory_space<vmem>>, vector<1x32xf32>
    %c0_131 = arith.constant 0 : index
    %c0_132 = arith.constant 0 : index
    %277 = vector.load %arg34[%c0_131, %c0_132] : memref<1x32xf32, #tpu.memory_space<vmem>>, vector<1x32xf32>
    %cst_133 = arith.constant dense<0.000000e+00> : vector<8xf32>
    %278 = vector.multi_reduction <add>, %275, %cst_133 [1] : vector<8x32xf32> to vector<8xf32>
    %279 = vector.shape_cast %278 : vector<8xf32> to vector<8x1xf32>
    %cst_134 = arith.constant 3.200000e+01 : f32
    %280 = vector.broadcast %cst_134 : f32 to vector<8x1xf32>
    %281 = arith.divf %279, %280 : vector<8x1xf32>
    %282 = vector.broadcast %281 : vector<8x1xf32> to vector<8x32xf32>
    %283 = arith.subf %275, %282 : vector<8x32xf32>
    %284 = arith.mulf %283, %283 : vector<8x32xf32>
    %cst_135 = arith.constant dense<0.000000e+00> : vector<8xf32>
    %285 = vector.multi_reduction <add>, %284, %cst_135 [1] : vector<8x32xf32> to vector<8xf32>
    %286 = vector.shape_cast %285 : vector<8xf32> to vector<8x1xf32>
    %cst_136 = arith.constant 3.200000e+01 : f32
    %287 = vector.broadcast %cst_136 : f32 to vector<8x1xf32>
    %288 = arith.divf %286, %287 : vector<8x1xf32>
    %289 = vector.broadcast %281 : vector<8x1xf32> to vector<8x32xf32>
    %290 = arith.subf %275, %289 : vector<8x32xf32>
    %cst_137 = arith.constant 9.99999996E-13 : f32
    %291 = vector.broadcast %cst_137 : f32 to vector<8x1xf32>
    %292 = arith.addf %288, %291 : vector<8x1xf32>
    %293 = math.rsqrt %292 : vector<8x1xf32>
    %294 = vector.broadcast %293 : vector<8x1xf32> to vector<8x32xf32>
    %295 = arith.mulf %290, %294 : vector<8x32xf32>
    %296 = vector.broadcast %276 : vector<1x32xf32> to vector<8x32xf32>
    %297 = arith.mulf %295, %296 : vector<8x32xf32>
    %298 = vector.broadcast %277 : vector<1x32xf32> to vector<8x32xf32>
    %299 = arith.addf %297, %298 : vector<8x32xf32>
    %c0_138 = arith.constant 0 : index
    %c0_139 = arith.constant 0 : index
    %300 = vector.load %arg35[%c0_138, %c0_139] : memref<32x64xbf16, #tpu.memory_space<vmem>>, vector<32x64xbf16>
    %301 = arith.truncf %299 : vector<8x32xf32> to vector<8x32xbf16>
    %cst_140 = arith.constant dense<0.000000e+00> : vector<8x64xf32>
    %302 = tpu.matmul %301, %300, %cst_140 {dimension_numbers = #tpu.dot_dimension_numbers<[1], [0], [0], [1], [0, 0, 1, 1], [], []>} : vector<8x32xbf16>, vector<32x64xbf16>, vector<8x64xf32> -> vector<8x64xf32>
    %c0_141 = arith.constant 0 : index
    %c0_142 = arith.constant 0 : index
    %303 = vector.load %arg36[%c0_141, %c0_142] : memref<1x64xf32, #tpu.memory_space<vmem>>, vector<1x64xf32>
    %304 = vector.broadcast %303 : vector<1x64xf32> to vector<8x64xf32>
    %305 = arith.addf %302, %304 : vector<8x64xf32>
    %cst_143 = arith.constant 0.000000e+00 : f32
    %306 = vector.broadcast %cst_143 : f32 to vector<8x64xf32>
    %307 = arith.maximumf %305, %306 : vector<8x64xf32>
    %c0_144 = arith.constant 0 : index
    %c0_145 = arith.constant 0 : index
    %308 = vector.load %arg37[%c0_144, %c0_145] : memref<64x32xbf16, #tpu.memory_space<vmem>>, vector<64x32xbf16>
    %309 = arith.truncf %307 : vector<8x64xf32> to vector<8x64xbf16>
    %cst_146 = arith.constant dense<0.000000e+00> : vector<8x32xf32>
    %310 = tpu.matmul %309, %308, %cst_146 {dimension_numbers = #tpu.dot_dimension_numbers<[1], [0], [0], [1], [0, 0, 1, 1], [], []>} : vector<8x64xbf16>, vector<64x32xbf16>, vector<8x32xf32> -> vector<8x32xf32>
    %c0_147 = arith.constant 0 : index
    %c0_148 = arith.constant 0 : index
    %311 = vector.load %arg38[%c0_147, %c0_148] : memref<1x32xf32, #tpu.memory_space<vmem>>, vector<1x32xf32>
    %312 = vector.broadcast %311 : vector<1x32xf32> to vector<8x32xf32>
    %313 = arith.addf %310, %312 : vector<8x32xf32>
    %cst_149 = arith.constant 5.000000e-01 : f32
    %314 = vector.broadcast %cst_149 : f32 to vector<8x32xf32>
    %315 = arith.mulf %314, %313 : vector<8x32xf32>
    %316 = arith.addf %275, %315 : vector<8x32xf32>
    %c0_150 = arith.constant 0 : index
    %c0_151 = arith.constant 0 : index
    %317 = vector.load %arg39[%c0_150, %c0_151] : memref<1x32xf32, #tpu.memory_space<vmem>>, vector<1x32xf32>
    %c0_152 = arith.constant 0 : index
    %c0_153 = arith.constant 0 : index
    %318 = vector.load %arg40[%c0_152, %c0_153] : memref<1x32xf32, #tpu.memory_space<vmem>>, vector<1x32xf32>
    %cst_154 = arith.constant dense<0.000000e+00> : vector<8xf32>
    %319 = vector.multi_reduction <add>, %316, %cst_154 [1] : vector<8x32xf32> to vector<8xf32>
    %320 = vector.shape_cast %319 : vector<8xf32> to vector<8x1xf32>
    %cst_155 = arith.constant 3.200000e+01 : f32
    %321 = vector.broadcast %cst_155 : f32 to vector<8x1xf32>
    %322 = arith.divf %320, %321 : vector<8x1xf32>
    %323 = vector.broadcast %322 : vector<8x1xf32> to vector<8x32xf32>
    %324 = arith.subf %316, %323 : vector<8x32xf32>
    %325 = arith.mulf %324, %324 : vector<8x32xf32>
    %cst_156 = arith.constant dense<0.000000e+00> : vector<8xf32>
    %326 = vector.multi_reduction <add>, %325, %cst_156 [1] : vector<8x32xf32> to vector<8xf32>
    %327 = vector.shape_cast %326 : vector<8xf32> to vector<8x1xf32>
    %cst_157 = arith.constant 3.200000e+01 : f32
    %328 = vector.broadcast %cst_157 : f32 to vector<8x1xf32>
    %329 = arith.divf %327, %328 : vector<8x1xf32>
    %330 = vector.broadcast %322 : vector<8x1xf32> to vector<8x32xf32>
    %331 = arith.subf %316, %330 : vector<8x32xf32>
    %cst_158 = arith.constant 9.99999996E-13 : f32
    %332 = vector.broadcast %cst_158 : f32 to vector<8x1xf32>
    %333 = arith.addf %329, %332 : vector<8x1xf32>
    %334 = math.rsqrt %333 : vector<8x1xf32>
    %335 = vector.broadcast %334 : vector<8x1xf32> to vector<8x32xf32>
    %336 = arith.mulf %331, %335 : vector<8x32xf32>
    %337 = vector.broadcast %317 : vector<1x32xf32> to vector<8x32xf32>
    %338 = arith.mulf %336, %337 : vector<8x32xf32>
    %339 = vector.broadcast %318 : vector<1x32xf32> to vector<8x32xf32>
    %340 = arith.addf %338, %339 : vector<8x32xf32>
    %c0_159 = arith.constant 0 : index
    %c0_160 = arith.constant 0 : index
    %c0_161 = arith.constant 0 : index
    %341 = vector.load %arg41[%c0_159, %c0_160, %c0_161] : memref<1x8x32xf32, #tpu.memory_space<vmem>>, vector<1x8x32xf32>
    %342 = vector.shape_cast %341 : vector<1x8x32xf32> to vector<8x32xf32>
    %343 = vector.shape_cast %340 : vector<8x32xf32> to vector<1x8x32xf32>
    tpu.vector_store %arg41[%c0_159, %c0_160, %c0_161], %343 {strides = array<i32>} : memref<1x8x32xf32, #tpu.memory_space<vmem>>, vector<1x8x32xf32>,
    return
  }
  func.func @transform_0(%arg0: i32) -> (i32, i32, i32) {
    %c0_i32 = arith.constant 0 : i32
    %c0_i32_0 = arith.constant 0 : i32
    %c0_i32_1 = arith.constant 0 : i32
    return %arg0, %c0_i32, %c0_i32_0 : i32, i32, i32
  }
  func.func @transform_1(%arg0: i32) -> (i32, i32, i32) {
    %c0_i32 = arith.constant 0 : i32
    %c0_i32_0 = arith.constant 0 : i32
    %c0_i32_1 = arith.constant 0 : i32
    return %arg0, %c0_i32, %c0_i32_0 : i32, i32, i32
  }
  func.func @transform_2(%arg0: i32) -> (i32, i32) {
    %c0_i32 = arith.constant 0 : i32
    %c0_i32_0 = arith.constant 0 : i32
    %c0_i32_1 = arith.constant 0 : i32
    return %c0_i32, %c0_i32_0 : i32, i32
  }
  func.func @transform_3(%arg0: i32) -> (i32, i32) {
    %c0_i32 = arith.constant 0 : i32
    %c0_i32_0 = arith.constant 0 : i32
    %c0_i32_1 = arith.constant 0 : i32
    return %c0_i32, %c0_i32_0 : i32, i32
  }
  func.func @transform_4(%arg0: i32) -> (i32, i32) {
    %c0_i32 = arith.constant 0 : i32
    %c0_i32_0 = arith.constant 0 : i32
    %c0_i32_1 = arith.constant 0 : i32
    return %c0_i32, %c0_i32_0 : i32, i32
  }
  func.func @transform_5(%arg0: i32) -> (i32, i32) {
    %c0_i32 = arith.constant 0 : i32
    %c0_i32_0 = arith.constant 0 : i32
    %c0_i32_1 = arith.constant 0 : i32
    return %c0_i32, %c0_i32_0 : i32, i32
  }
  func.func @transform_6(%arg0: i32) -> (i32, i32) {
    %c0_i32 = arith.constant 0 : i32
    %c0_i32_0 = arith.constant 0 : i32
    %c0_i32_1 = arith.constant 0 : i32
    return %c0_i32, %c0_i32_0 : i32, i32
  }
  func.func @transform_7(%arg0: i32) -> (i32, i32) {
    %c0_i32 = arith.constant 0 : i32
    %c0_i32_0 = arith.constant 0 : i32
    %c0_i32_1 = arith.constant 0 : i32
    return %c0_i32, %c0_i32_0 : i32, i32
  }
  func.func @transform_8(%arg0: i32) -> (i32, i32) {
    %c0_i32 = arith.constant 0 : i32
    %c0_i32_0 = arith.constant 0 : i32
    %c0_i32_1 = arith.constant 0 : i32
    return %c0_i32, %c0_i32_0 : i32, i32
  }
  func.func @transform_9(%arg0: i32) -> (i32, i32) {
    %c0_i32 = arith.constant 0 : i32
    %c0_i32_0 = arith.constant 0 : i32
    %c0_i32_1 = arith.constant 0 : i32
    return %c0_i32, %c0_i32_0 : i32, i32
  }
  func.func @transform_10(%arg0: i32) -> (i32, i32) {
    %c0_i32 = arith.constant 0 : i32
    %c0_i32_0 = arith.constant 0 : i32
    %c0_i32_1 = arith.constant 0 : i32
    return %c0_i32, %c0_i32_0 : i32, i32
  }
  func.func @transform_11(%arg0: i32) -> (i32, i32) {
    %c0_i32 = arith.constant 0 : i32
    %c0_i32_0 = arith.constant 0 : i32
    %c0_i32_1 = arith.constant 0 : i32
    return %c0_i32, %c0_i32_0 : i32, i32
  }
  func.func @transform_12(%arg0: i32) -> (i32, i32) {
    %c0_i32 = arith.constant 0 : i32
    %c0_i32_0 = arith.constant 0 : i32
    %c0_i32_1 = arith.constant 0 : i32
    return %c0_i32, %c0_i32_0 : i32, i32
  }
  func.func @transform_13(%arg0: i32) -> (i32, i32) {
    %c0_i32 = arith.constant 0 : i32
    %c0_i32_0 = arith.constant 0 : i32
    %c0_i32_1 = arith.constant 0 : i32
    return %c0_i32, %c0_i32_0 : i32, i32
  }
  func.func @transform_14(%arg0: i32) -> (i32, i32) {
    %c0_i32 = arith.constant 0 : i32
    %c0_i32_0 = arith.constant 0 : i32
    %c0_i32_1 = arith.constant 0 : i32
    return %c0_i32, %c0_i32_0 : i32, i32
  }
  func.func @transform_15(%arg0: i32) -> (i32, i32) {
    %c0_i32 = arith.constant 0 : i32
    %c0_i32_0 = arith.constant 0 : i32
    %c0_i32_1 = arith.constant 0 : i32
    return %c0_i32, %c0_i32_0 : i32, i32
  }
  func.func @transform_16(%arg0: i32) -> (i32, i32) {
    %c0_i32 = arith.constant 0 : i32
    %c0_i32_0 = arith.constant 0 : i32
    %c0_i32_1 = arith.constant 0 : i32
    return %c0_i32, %c0_i32_0 : i32, i32
  }
  func.func @transform_17(%arg0: i32) -> (i32, i32) {
    %c0_i32 = arith.constant 0 : i32
    %c0_i32_0 = arith.constant 0 : i32
    %c0_i32_1 = arith.constant 0 : i32
    return %c0_i32, %c0_i32_0 : i32, i32
  }
  func.func @transform_18(%arg0: i32) -> (i32, i32) {
    %c0_i32 = arith.constant 0 : i32
    %c0_i32_0 = arith.constant 0 : i32
    %c0_i32_1 = arith.constant 0 : i32
    return %c0_i32, %c0_i32_0 : i32, i32
  }
  func.func @transform_19(%arg0: i32) -> (i32, i32) {
    %c0_i32 = arith.constant 0 : i32
    %c0_i32_0 = arith.constant 0 : i32
    %c0_i32_1 = arith.constant 0 : i32
    return %c0_i32, %c0_i32_0 : i32, i32
  }
  func.func @transform_20(%arg0: i32) -> (i32, i32) {
    %c0_i32 = arith.constant 0 : i32
    %c0_i32_0 = arith.constant 0 : i32
    %c0_i32_1 = arith.constant 0 : i32
    return %c0_i32, %c0_i32_0 : i32, i32
  }
  func.func @transform_21(%arg0: i32) -> (i32, i32) {
    %c0_i32 = arith.constant 0 : i32
    %c0_i32_0 = arith.constant 0 : i32
    %c0_i32_1 = arith.constant 0 : i32
    return %c0_i32, %c0_i32_0 : i32, i32
  }
  func.func @transform_22(%arg0: i32) -> (i32, i32) {
    %c0_i32 = arith.constant 0 : i32
    %c0_i32_0 = arith.constant 0 : i32
    %c0_i32_1 = arith.constant 0 : i32
    return %c0_i32, %c0_i32_0 : i32, i32
  }
  func.func @transform_23(%arg0: i32) -> (i32, i32) {
    %c0_i32 = arith.constant 0 : i32
    %c0_i32_0 = arith.constant 0 : i32
    %c0_i32_1 = arith.constant 0 : i32
    return %c0_i32, %c0_i32_0 : i32, i32
  }
  func.func @transform_24(%arg0: i32) -> (i32, i32, i32) {
    %c0_i32 = arith.constant 0 : i32
    %c0_i32_0 = arith.constant 0 : i32
    %c0_i32_1 = arith.constant 0 : i32
    %c0_i32_2 = arith.constant 0 : i32
    return %c0_i32, %c0_i32_0, %c0_i32_1 : i32, i32, i32
  }
  func.func @transform_25(%arg0: i32) -> (i32, i32) {
    %c0_i32 = arith.constant 0 : i32
    %c0_i32_0 = arith.constant 0 : i32
    %c0_i32_1 = arith.constant 0 : i32
    return %c0_i32, %c0_i32_0 : i32, i32
  }
  func.func @transform_26(%arg0: i32) -> (i32, i32) {
    %c0_i32 = arith.constant 0 : i32
    %c0_i32_0 = arith.constant 0 : i32
    %c0_i32_1 = arith.constant 0 : i32
    return %c0_i32, %c0_i32_0 : i32, i32
  }
  func.func @transform_27(%arg0: i32) -> (i32, i32) {
    %c0_i32 = arith.constant 0 : i32
    %c0_i32_0 = arith.constant 0 : i32
    %c0_i32_1 = arith.constant 0 : i32
    return %c0_i32, %c0_i32_0 : i32, i32
  }
  func.func @transform_28(%arg0: i32) -> (i32, i32) {
    %c0_i32 = arith.constant 0 : i32
    %c0_i32_0 = arith.constant 0 : i32
    %c0_i32_1 = arith.constant 0 : i32
    return %c0_i32, %c0_i32_0 : i32, i32
  }
  func.func @transform_29(%arg0: i32) -> (i32, i32) {
    %c0_i32 = arith.constant 0 : i32
    %c0_i32_0 = arith.constant 0 : i32
    %c0_i32_1 = arith.constant 0 : i32
    return %c0_i32, %c0_i32_0 : i32, i32
  }
  func.func @transform_30(%arg0: i32) -> (i32, i32) {
    %c0_i32 = arith.constant 0 : i32
    %c0_i32_0 = arith.constant 0 : i32
    %c0_i32_1 = arith.constant 0 : i32
    return %c0_i32, %c0_i32_0 : i32, i32
  }
  func.func @transform_31(%arg0: i32) -> (i32, i32) {
    %c0_i32 = arith.constant 0 : i32
    %c0_i32_0 = arith.constant 0 : i32
    %c0_i32_1 = arith.constant 0 : i32
    return %c0_i32, %c0_i32_0 : i32, i32
  }
  func.func @transform_32(%arg0: i32) -> (i32, i32) {
    %c0_i32 = arith.constant 0 : i32
    %c0_i32_0 = arith.constant 0 : i32
    %c0_i32_1 = arith.constant 0 : i32
    return %c0_i32, %c0_i32_0 : i32, i32
  }
  func.func @transform_33(%arg0: i32) -> (i32, i32) {
    %c0_i32 = arith.constant 0 : i32
    %c0_i32_0 = arith.constant 0 : i32
    %c0_i32_1 = arith.constant 0 : i32
    return %c0_i32, %c0_i32_0 : i32, i32
  }
  func.func @transform_34(%arg0: i32) -> (i32, i32) {
    %c0_i32 = arith.constant 0 : i32
    %c0_i32_0 = arith.constant 0 : i32
    %c0_i32_1 = arith.constant 0 : i32
    return %c0_i32, %c0_i32_0 : i32, i32
  }
  func.func @transform_35(%arg0: i32) -> (i32, i32) {
    %c0_i32 = arith.constant 0 : i32
    %c0_i32_0 = arith.constant 0 : i32
    %c0_i32_1 = arith.constant 0 : i32
    return %c0_i32, %c0_i32_0 : i32, i32
  }
  func.func @transform_36(%arg0: i32) -> (i32, i32) {
    %c0_i32 = arith.constant 0 : i32
    %c0_i32_0 = arith.constant 0 : i32
    %c0_i32_1 = arith.constant 0 : i32
    return %c0_i32, %c0_i32_0 : i32, i32
  }
  func.func @transform_37(%arg0: i32) -> (i32, i32) {
    %c0_i32 = arith.constant 0 : i32
    %c0_i32_0 = arith.constant 0 : i32
    %c0_i32_1 = arith.constant 0 : i32
    return %c0_i32, %c0_i32_0 : i32, i32
  }
  func.func @transform_38(%arg0: i32) -> (i32, i32) {
    %c0_i32 = arith.constant 0 : i32
    %c0_i32_0 = arith.constant 0 : i32
    %c0_i32_1 = arith.constant 0 : i32
    return %c0_i32, %c0_i32_0 : i32, i32
  }
  func.func @transform_39(%arg0: i32) -> (i32, i32) {
    %c0_i32 = arith.constant 0 : i32
    %c0_i32_0 = arith.constant 0 : i32
    %c0_i32_1 = arith.constant 0 : i32
    return %c0_i32, %c0_i32_0 : i32, i32
  }
  func.func @transform_40(%arg0: i32) -> (i32, i32, i32) {
    %c0_i32 = arith.constant 0 : i32
    %c0_i32_0 = arith.constant 0 : i32
    %c0_i32_1 = arith.constant 0 : i32
    return %arg0, %c0_i32, %c0_i32_0 : i32, i32, i32
  }
}

</mosaic_0001>

<llo_original>
// kernel: tpu_custom_call.1
$region0: #{tpu_custom_call.1}
  #allocation0 [shape = 'u32[]', space=smem, size = 0x4, offset = 0x4, fixed_abs, tag = 'smem constant byte address 0x4 - core index']
  #allocation1 [shape = 'u32[144,128]{1,0:T(1,128)}', space=vmem, size = 0x12000, scoped, tag = 'internal scratch']
  #allocation2 [shape = 'f32[24,32]{1,0:T(8,128)}', space=vmem, size = 0x3000, scoped, tag = 'scratch operand']
  %s0 = inlined_call_operand.smem [shape: u32[41], index: -1, kind: input, shape index: {}]
  %s1 = sld [smem:[%s0]]
  %s2 = scalar_lea.smem %s0, 1
  %s3 = sld [smem:[%s2]]
  %s4 = scalar_lea.smem %s0, 2
  %s5 = sld [smem:[%s4]]
  %s6 = scalar_lea.smem %s0, 3
  %s7 = sld [smem:[%s6]]
  %s8 = scalar_lea.smem %s0, 4
  %s9 = sld [smem:[%s8]]
  %s10 = scalar_lea.smem %s0, 5
  %s11 = sld [smem:[%s10]]
  %s12 = scalar_lea.smem %s0, 6
  %s13 = sld [smem:[%s12]]
  %s14 = scalar_lea.smem %s0, 7
  %s15 = sld [smem:[%s14]]
  %s16 = scalar_lea.smem %s0, 8
  %s17 = sld [smem:[%s16]]
  %s18 = scalar_lea.smem %s0, 9
  %s19 = sld [smem:[%s18]]
  %s20 = scalar_lea.smem %s0, 10
  %s21 = sld [smem:[%s20]]
  %s22 = scalar_lea.smem %s0, 11
  %s23 = sld [smem:[%s22]]
  %s24 = scalar_lea.smem %s0, 12
  %s25 = sld [smem:[%s24]]
  %s26 = scalar_lea.smem %s0, 13
  %s27 = sld [smem:[%s26]]
  %s28 = scalar_lea.smem %s0, 14
  %s29 = sld [smem:[%s28]]
  %s30 = scalar_lea.smem %s0, 15
  %s31 = sld [smem:[%s30]]
  %s32 = scalar_lea.smem %s0, 16
  %s33 = sld [smem:[%s32]]
  %s34 = scalar_lea.smem %s0, 17
  %s35 = sld [smem:[%s34]]
  %s36 = scalar_lea.smem %s0, 18
  %s37 = sld [smem:[%s36]]
  %s38 = scalar_lea.smem %s0, 19
  %s39 = sld [smem:[%s38]]
  %s40 = scalar_lea.smem %s0, 20
  %s41 = sld [smem:[%s40]]
  %s42 = scalar_lea.smem %s0, 21
  %s43 = sld [smem:[%s42]]
  %s44 = scalar_lea.smem %s0, 22
  %s45 = sld [smem:[%s44]]
  %s46 = scalar_lea.smem %s0, 23
  %s47 = sld [smem:[%s46]]
  %s48 = scalar_lea.smem %s0, 24
  %s49 = sld [smem:[%s48]]
  %s50 = scalar_lea.smem %s0, 25
  %s51 = sld [smem:[%s50]]
  %s52 = scalar_lea.smem %s0, 26
  %s53 = sld [smem:[%s52]]
  %s54 = scalar_lea.smem %s0, 27
  %s55 = sld [smem:[%s54]]
  %s56 = scalar_lea.smem %s0, 28
  %s57 = sld [smem:[%s56]]
  %s58 = scalar_lea.smem %s0, 29
  %s59 = sld [smem:[%s58]]
  %s60 = scalar_lea.smem %s0, 30
  %s61 = sld [smem:[%s60]]
  %s62 = scalar_lea.smem %s0, 31
  %s63 = sld [smem:[%s62]]
  %s64 = scalar_lea.smem %s0, 32
  %s65 = sld [smem:[%s64]]
  %s66 = scalar_lea.smem %s0, 33
  %s67 = sld [smem:[%s66]]
  %s68 = scalar_lea.smem %s0, 34
  %s69 = sld [smem:[%s68]]
  %s70 = scalar_lea.smem %s0, 35
  %s71 = sld [smem:[%s70]]
  %s72 = scalar_lea.smem %s0, 36
  %s73 = sld [smem:[%s72]]
  %s74 = scalar_lea.smem %s0, 37
  %s75 = sld [smem:[%s74]]
  %s76 = scalar_lea.smem %s0, 38
  %s77 = sld [smem:[%s76]]
  %s78 = scalar_lea.smem %s0, 39
  %s79 = sld [smem:[%s78]]
  %s80 = scalar_lea.smem %s0, 40
  %s81 = sld [smem:[%s80]]
  %s82 = sld [smem:[#allocation0]]
  $region257: #{tpu_custom_call.1} parent=0
    _
  %s84 = ssub.s32 1, %s82
  %s85 = scalar_select 0, %s84, %s82
  $region1: #{tpu_custom_call.1} parent=0
    #allocation3 [shape = 'u8[1024]{0}', space=vmem, size = 0x400, scoped, tag = 'input window, operand 1']
    #allocation4 [shape = 's32[2]{0}', space=sflag, size = 0x8, scoped, tag = 'scoped memory for tpu_custom_call.1']
    #allocation5 [shape = 's32[2]{0}', space=sflag, size = 0x8, scoped, tag = 'scoped memory for tpu_custom_call.1']
    #allocation6 [shape = 'u8[512]{0}', space=vmem, size = 0x400, scoped, tag = 'input window, operand 2, single buffered']
    #allocation7 [shape = 's32[1]{0}', space=sflag, size = 0x4, scoped, tag = 'scoped memory for tpu_custom_call.1']
    #allocation8 [shape = 'u8[512]{0}', space=vmem, size = 0x400, scoped, tag = 'input window, operand 3, single buffered']
    #allocation9 [shape = 'u8[512]{0}', space=vmem, size = 0x400, scoped, tag = 'input window, operand 5, single buffered']
    #allocation10 [shape = 's32[1]{0}', space=sflag, size = 0x4, scoped, tag = 'scoped memory for tpu_custom_call.1']
    #allocation11 [shape = 'u8[512]{0}', space=vmem, size = 0x400, scoped, tag = 'input window, operand 7, single buffered']
    #allocation12 [shape = 'u8[512]{0}', space=vmem, size = 0x400, scoped, tag = 'input window, operand 8, single buffered']
    #allocation13 [shape = 's32[1]{0}', space=sflag, size = 0x4, scoped, tag = 'scoped memory for tpu_custom_call.1']
    #allocation14 [shape = 'u8[512]{0}', space=vmem, size = 0x400, scoped, tag = 'input window, operand 9, single buffered']
    #allocation15 [shape = 'u8[512]{0}', space=vmem, size = 0x400, scoped, tag = 'input window, operand 11, single buffered']
    #allocation16 [shape = 's32[1]{0}', space=sflag, size = 0x4, scoped, tag = 'scoped memory for tpu_custom_call.1']
    #allocation17 [shape = 'u8[512]{0}', space=vmem, size = 0x400, scoped, tag = 'input window, operand 13, single buffered']
    #allocation18 [shape = 'u8[512]{0}', space=vmem, size = 0x400, scoped, tag = 'input window, operand 15, single buffered']
    #allocation19 [shape = 's32[1]{0}', space=sflag, size = 0x4, scoped, tag = 'scoped memory for tpu_custom_call.1']
    #allocation20 [shape = 'u8[512]{0}', space=vmem, size = 0x400, scoped, tag = 'input window, operand 17, single buffered']
    #allocation21 [shape = 'u8[512]{0}', space=vmem, size = 0x400, scoped, tag = 'input window, operand 21, single buffered']
    #allocation22 [shape = 's32[1]{0}', space=sflag, size = 0x4, scoped, tag = 'scoped memory for tpu_custom_call.1']
    #allocation23 [shape = 'u8[512]{0}', space=vmem, size = 0x400, scoped, tag = 'input window, operand 23, single buffered']
    #allocation24 [shape = 'u8[1536]{0}', space=vmem, size = 0x800, scoped, tag = 'input window, operand 24, single buffered']
    #allocation25 [shape = 's32[1]{0}', space=sflag, size = 0x4, scoped, tag = 'scoped memory for tpu_custom_call.1']
    #allocation26 [shape = 'u8[512]{0}', space=vmem, size = 0x400, scoped, tag = 'input window, operand 25, single buffered']
    #allocation27 [shape = 'u8[512]{0}', space=vmem, size = 0x400, scoped, tag = 'input window, operand 26, single buffered']
    #allocation28 [shape = 's32[1]{0}', space=sflag, size = 0x4, scoped, tag = 'scoped memory for tpu_custom_call.1']
    #allocation29 [shape = 'u8[8192]{0}', space=vmem, size = 0x2000, scoped, tag = 'output window, operand 0']
    %86 = vsyncpa [#allocation4], 0
    %s87 = scalar_lea.sflag [#allocation4], 1
    %88 = vsyncpa %s87, 0
    %89 = vsyncpa [#allocation7], 0
    %90 = vsyncpa [#allocation10], 0
    %91 = vsyncpa [#allocation13], 0
    %92 = vsyncpa [#allocation16], 0
    %93 = vsyncpa [#allocation19], 0
    %94 = vsyncpa [#allocation22], 0
    %95 = vsyncpa [#allocation25], 0
    %96 = vsyncpa [#allocation28], 0
    %97 = vsyncpa [#allocation5], 0
    %s98 = scalar_lea.sflag [#allocation5], 1
    %99 = vsyncpa %s98, 0
    loop: start=0, step=1, limit=4
    $region2: #{tpu_custom_call.1} parent=1 // loop_pre_header
      _
    $region3: #{tpu_custom_call.1} parent=1 // loop_header
      %s101 = sphi 0, %s105
      %p102 = scmp.ge.s32.totalorder %s101, 4
      %s111 = sphi 0, %s113
      %s114 = sphi 0, %s111
      %s115 = sphi 0, %s114
      %s131 = sphi 0, %s115
      %s137 = sphi 0, %s139
      %s140 = sphi 0, %s137
      %s141 = sphi 0, %s140
      %s157 = sphi 0, %s141
      %s161 = sphi 0, %s161
      %s163 = sphi 0, %s161
      %s164 = sphi 0, %s163
      %s178 = sphi 0, %s164
      %s182 = sphi 0, %s182
      %s184 = sphi 0, %s182
      %s185 = sphi 0, %s184
      %s199 = sphi 0, %s185
      %s203 = sphi 0, %s203
      %s205 = sphi 0, %s203
      %s206 = sphi 0, %s205
      %s220 = sphi 0, %s206
      %s224 = sphi 0, %s224
      %s226 = sphi 0, %s224
      %s227 = sphi 0, %s226
      %s241 = sphi 0, %s227
      %s245 = sphi 0, %s245
      %s247 = sphi 0, %s245
      %s248 = sphi 0, %s247
      %s262 = sphi 0, %s248
      %s266 = sphi 0, %s266
      %s268 = sphi 0, %s266
      %s269 = sphi 0, %s268
      %s283 = sphi 0, %s269
      %s287 = sphi 0, %s287
      %s289 = sphi 0, %s287
      %s290 = sphi 0, %s289
      %s304 = sphi 0, %s290
      %s308 = sphi 0, %s308
      %s310 = sphi 0, %s308
      %s311 = sphi 0, %s310
      %s325 = sphi 0, %s311
      %s329 = sphi 0, %s329
      %s331 = sphi 0, %s329
      %s332 = sphi 0, %s331
      %s346 = sphi 0, %s332
      %s350 = sphi 0, %s350
      %s352 = sphi 0, %s350
      %s353 = sphi 0, %s352
      %s367 = sphi 0, %s353
      %s371 = sphi 0, %s371
      %s373 = sphi 0, %s371
      %s374 = sphi 0, %s373
      %s388 = sphi 0, %s374
      %s392 = sphi 0, %s392
      %s394 = sphi 0, %s392
      %s395 = sphi 0, %s394
      %s409 = sphi 0, %s395
      %s413 = sphi 0, %s413
      %s415 = sphi 0, %s413
      %s416 = sphi 0, %s415
      %s430 = sphi 0, %s416
      %s434 = sphi 0, %s434
      %s436 = sphi 0, %s434
      %s437 = sphi 0, %s436
      %s451 = sphi 0, %s437
      %s455 = sphi 0, %s455
      %s457 = sphi 0, %s455
      %s458 = sphi 0, %s457
      %s472 = sphi 0, %s458
      %s476 = sphi 0, %s476
      %s478 = sphi 0, %s476
      %s479 = sphi 0, %s478
      %s493 = sphi 0, %s479
      %s497 = sphi 0, %s497
      %s499 = sphi 0, %s497
      %s500 = sphi 0, %s499
      %s514 = sphi 0, %s500
      %s518 = sphi 0, %s518
      %s520 = sphi 0, %s518
      %s521 = sphi 0, %s520
      %s535 = sphi 0, %s521
      %s539 = sphi 0, %s539
      %s541 = sphi 0, %s539
      %s542 = sphi 0, %s541
      %s556 = sphi 0, %s542
      %s560 = sphi 0, %s560
      %s562 = sphi 0, %s560
      %s563 = sphi 0, %s562
      %s577 = sphi 0, %s563
      %s581 = sphi 0, %s581
      %s583 = sphi 0, %s581
      %s584 = sphi 0, %s583
      %s598 = sphi 0, %s584
      %s602 = sphi 0, %s602
      %s604 = sphi 0, %s602
      %s605 = sphi 0, %s604
      %s619 = sphi 0, %s605
      %s623 = sphi 0, %s623
      %s625 = sphi 0, %s623
      %s626 = sphi 0, %s625
      %s640 = sphi 0, %s626
      %s644 = sphi 0, %s644
      %s646 = sphi 0, %s644
      %s647 = sphi 0, %s646
      %s661 = sphi 0, %s647
      %s665 = sphi 0, %s665
      %s667 = sphi 0, %s665
      %s668 = sphi 0, %s667
      %s682 = sphi 0, %s668
      %s686 = sphi 0, %s686
      %s688 = sphi 0, %s686
      %s689 = sphi 0, %s688
      %s703 = sphi 0, %s689
      %s707 = sphi 0, %s707
      %s709 = sphi 0, %s707
      %s710 = sphi 0, %s709
      %s724 = sphi 0, %s710
      %s728 = sphi 0, %s728
      %s730 = sphi 0, %s728
      %s731 = sphi 0, %s730
      %s745 = sphi 0, %s731
      %s749 = sphi 0, %s749
      %s751 = sphi 0, %s749
      %s752 = sphi 0, %s751
      %s766 = sphi 0, %s752
      %s770 = sphi 0, %s770
      %s772 = sphi 0, %s770
      %s773 = sphi 0, %s772
      %s787 = sphi 0, %s773
      %s791 = sphi 0, %s791
      %s793 = sphi 0, %s791
      %s794 = sphi 0, %s793
      %s808 = sphi 0, %s794
      %s812 = sphi 0, %s812
      %s814 = sphi 0, %s812
      %s815 = sphi 0, %s814
      %s829 = sphi 0, %s815
      %s833 = sphi 0, %s833
      %s835 = sphi 0, %s833
      %s836 = sphi 0, %s835
      %s850 = sphi 0, %s836
      %s854 = sphi 0, %s854
      %s856 = sphi 0, %s854
      %s857 = sphi 0, %s856
      %s871 = sphi 0, %s857
      %s875 = sphi 0, %s875
      %s877 = sphi 0, %s875
      %s878 = sphi 0, %s877
      %s892 = sphi 0, %s878
      %s896 = sphi 0, %s896
      %s898 = sphi 0, %s896
      %s899 = sphi 0, %s898
      %s913 = sphi 0, %s899
      %s917 = sphi 0, %s917
      %s919 = sphi 0, %s917
      %s920 = sphi 0, %s919
      %s934 = sphi 0, %s920
      %s938 = sphi 0, %s938
      %s940 = sphi 0, %s938
      %s941 = sphi 0, %s940
      %s955 = sphi 0, %s941
      %s961 = sphi 0, %s963
      %s964 = sphi 0, %s961
      %s965 = sphi 0, %s964
      %s981 = sphi 0, %s965
    $region4: #{tpu_custom_call.1} parent=1 // loop_header_branch
      %104 = sbr.rel (%p102) target = $region8
    $region5: #{tpu_custom_call.1} parent=1 // loop_body
      %s106 = ssub.s32 %s101, 1
      %s107 = ssub.s32 %s101, 2
      %s108 = sadd.s32 %s101, 1
      %s109 = ssub.s32 %s101, %s108
      %p110 = scmp.eq.s32.totalorder %s109, 0
      %s112 = sadd.s32 %s111, 1
      %s113 = scalar_select %p110, %s111, %s112
      %p116 = pneg %p110
      %p117 = scmp.eq.s32.totalorder %s101, 1
      %p118 = por %p116, %p117
      %p119 = scmp.ne.s32.totalorder %s111, %s114
      %p120 = scmp.eq.s32.totalorder %s101, 0
      %p121 = por %p119, %p120
      %p122 = scmp.ne.s32.totalorder %s111, %s114
      %p123 = scmp.eq.s32.totalorder %s106, 1
      %p124 = por %p122, %p123
      %p125 = scmp.ne.s32.totalorder %s114, %s115
      %p126 = scmp.eq.s32.totalorder %s106, 0
      %p127 = por %p125, %p126
      %p128 = scmp.ne.s32.totalorder %s114, %s115
      %p129 = scmp.eq.s32.totalorder %s107, 1
      %p130 = por %p128, %p129
      %p132 = scmp.ne.s32.totalorder %s115, %s131
      %p133 = scmp.eq.s32.totalorder %s107, 0
      %p134 = por %p132, %p133
      %s135 = ssub.s32 %s101, %s108
      %p136 = scmp.eq.s32.totalorder %s135, 0
      %s138 = sadd.s32 %s137, 1
      %s139 = scalar_select %p136, %s137, %s138
      %p142 = pneg %p136
      %p143 = scmp.eq.s32.totalorder %s101, 1
      %p144 = por %p142, %p143
      %p145 = scmp.ne.s32.totalorder %s137, %s140
      %p146 = scmp.eq.s32.totalorder %s101, 0
      %p147 = por %p145, %p146
      %p148 = scmp.ne.s32.totalorder %s137, %s140
      %p149 = scmp.eq.s32.totalorder %s106, 1
      %p150 = por %p148, %p149
      %p151 = scmp.ne.s32.totalorder %s140, %s141
      %p152 = scmp.eq.s32.totalorder %s106, 0
      %p153 = por %p151, %p152
      %p154 = scmp.ne.s32.totalorder %s140, %s141
      %p155 = scmp.eq.s32.totalorder %s107, 1
      %p156 = por %p154, %p155
      %p158 = scmp.ne.s32.totalorder %s141, %s157
      %p159 = scmp.eq.s32.totalorder %s107, 0
      %p160 = por %p158, %p159
      %s162 = sadd.s32 %s161, 1
      %p165 = scmp.eq.s32.totalorder %s101, 1
      %p166 = scmp.ne.s32.totalorder %s161, %s163
      %p167 = scmp.eq.s32.totalorder %s101, 0
      %p168 = por %p166, %p167
      %p169 = scmp.ne.s32.totalorder %s161, %s163
      %p170 = scmp.eq.s32.totalorder %s106, 1
      %p171 = por %p169, %p170
      %p172 = scmp.ne.s32.totalorder %s163, %s164
      %p173 = scmp.eq.s32.totalorder %s106, 0
      %p174 = por %p172, %p173
      %p175 = scmp.ne.s32.totalorder %s163, %s164
      %p176 = scmp.eq.s32.totalorder %s107, 1
      %p177 = por %p175, %p176
      %p179 = scmp.ne.s32.totalorder %s164, %s178
      %p180 = scmp.eq.s32.totalorder %s107, 0
      %p181 = por %p179, %p180
      %s183 = sadd.s32 %s182, 1
      %p186 = scmp.eq.s32.totalorder %s101, 1
      %p187 = scmp.ne.s32.totalorder %s182, %s184
      %p188 = scmp.eq.s32.totalorder %s101, 0
      %p189 = por %p187, %p188
      %p190 = scmp.ne.s32.totalorder %s182, %s184
      %p191 = scmp.eq.s32.totalorder %s106, 1
      %p192 = por %p190, %p191
      %p193 = scmp.ne.s32.totalorder %s184, %s185
      %p194 = scmp.eq.s32.totalorder %s106, 0
      %p195 = por %p193, %p194
      %p196 = scmp.ne.s32.totalorder %s184, %s185
      %p197 = scmp.eq.s32.totalorder %s107, 1
      %p198 = por %p196, %p197
      %p200 = scmp.ne.s32.totalorder %s185, %s199
      %p201 = scmp.eq.s32.totalorder %s107, 0
      %p202 = por %p200, %p201
      %s204 = sadd.s32 %s203, 1
      %p207 = scmp.eq.s32.totalorder %s101, 1
      %p208 = scmp.ne.s32.totalorder %s203, %s205
      %p209 = scmp.eq.s32.totalorder %s101, 0
      %p210 = por %p208, %p209
      %p211 = scmp.ne.s32.totalorder %s203, %s205
      %p212 = scmp.eq.s32.totalorder %s106, 1
      %p213 = por %p211, %p212
      %p214 = scmp.ne.s32.totalorder %s205, %s206
      %p215 = scmp.eq.s32.totalorder %s106, 0
      %p216 = por %p214, %p215
      %p217 = scmp.ne.s32.totalorder %s205, %s206
      %p218 = scmp.eq.s32.totalorder %s107, 1
      %p219 = por %p217, %p218
      %p221 = scmp.ne.s32.totalorder %s206, %s220
      %p222 = scmp.eq.s32.totalorder %s107, 0
      %p223 = por %p221, %p222
      %s225 = sadd.s32 %s224, 1
      %p228 = scmp.eq.s32.totalorder %s101, 1
      %p229 = scmp.ne.s32.totalorder %s224, %s226
      %p230 = scmp.eq.s32.totalorder %s101, 0
      %p231 = por %p229, %p230
      %p232 = scmp.ne.s32.totalorder %s224, %s226
      %p233 = scmp.eq.s32.totalorder %s106, 1
      %p234 = por %p232, %p233
      %p235 = scmp.ne.s32.totalorder %s226, %s227
      %p236 = scmp.eq.s32.totalorder %s106, 0
      %p237 = por %p235, %p236
      %p238 = scmp.ne.s32.totalorder %s226, %s227
      %p239 = scmp.eq.s32.totalorder %s107, 1
      %p240 = por %p238, %p239
      %p242 = scmp.ne.s32.totalorder %s227, %s241
      %p243 = scmp.eq.s32.totalorder %s107, 0
      %p244 = por %p242, %p243
      %s246 = sadd.s32 %s245, 1
      %p249 = scmp.eq.s32.totalorder %s101, 1
      %p250 = scmp.ne.s32.totalorder %s245, %s247
      %p251 = scmp.eq.s32.totalorder %s101, 0
      %p252 = por %p250, %p251
      %p253 = scmp.ne.s32.totalorder %s245, %s247
      %p254 = scmp.eq.s32.totalorder %s106, 1
      %p255 = por %p253, %p254
      %p256 = scmp.ne.s32.totalorder %s247, %s248
      %p257 = scmp.eq.s32.totalorder %s106, 0
      %p258 = por %p256, %p257
      %p259 = scmp.ne.s32.totalorder %s247, %s248
      %p260 = scmp.eq.s32.totalorder %s107, 1
      %p261 = por %p259, %p260
      %p263 = scmp.ne.s32.totalorder %s248, %s262
      %p264 = scmp.eq.s32.totalorder %s107, 0
      %p265 = por %p263, %p264
      %s267 = sadd.s32 %s266, 1
      %p270 = scmp.eq.s32.totalorder %s101, 1
      %p271 = scmp.ne.s32.totalorder %s266, %s268
      %p272 = scmp.eq.s32.totalorder %s101, 0
      %p273 = por %p271, %p272
      %p274 = scmp.ne.s32.totalorder %s266, %s268
      %p275 = scmp.eq.s32.totalorder %s106, 1
      %p276 = por %p274, %p275
      %p277 = scmp.ne.s32.totalorder %s268, %s269
      %p278 = scmp.eq.s32.totalorder %s106, 0
      %p279 = por %p277, %p278
      %p280 = scmp.ne.s32.totalorder %s268, %s269
      %p281 = scmp.eq.s32.totalorder %s107, 1
      %p282 = por %p280, %p281
      %p284 = scmp.ne.s32.totalorder %s269, %s283
      %p285 = scmp.eq.s32.totalorder %s107, 0
      %p286 = por %p284, %p285
      %s288 = sadd.s32 %s287, 1
      %p291 = scmp.eq.s32.totalorder %s101, 1
      %p292 = scmp.ne.s32.totalorder %s287, %s289
      %p293 = scmp.eq.s32.totalorder %s101, 0
      %p294 = por %p292, %p293
      %p295 = scmp.ne.s32.totalorder %s287, %s289
      %p296 = scmp.eq.s32.totalorder %s106, 1
      %p297 = por %p295, %p296
      %p298 = scmp.ne.s32.totalorder %s289, %s290
      %p299 = scmp.eq.s32.totalorder %s106, 0
      %p300 = por %p298, %p299
      %p301 = scmp.ne.s32.totalorder %s289, %s290
      %p302 = scmp.eq.s32.totalorder %s107, 1
      %p303 = por %p301, %p302
      %p305 = scmp.ne.s32.totalorder %s290, %s304
      %p306 = scmp.eq.s32.totalorder %s107, 0
      %p307 = por %p305, %p306
      %s309 = sadd.s32 %s308, 1
      %p312 = scmp.eq.s32.totalorder %s101, 1
      %p313 = scmp.ne.s32.totalorder %s308, %s310
      %p314 = scmp.eq.s32.totalorder %s101, 0
      %p315 = por %p313, %p314
      %p316 = scmp.ne.s32.totalorder %s308, %s310
      %p317 = scmp.eq.s32.totalorder %s106, 1
      %p318 = por %p316, %p317
      %p319 = scmp.ne.s32.totalorder %s310, %s311
      %p320 = scmp.eq.s32.totalorder %s106, 0
      %p321 = por %p319, %p320
      %p322 = scmp.ne.s32.totalorder %s310, %s311
      %p323 = scmp.eq.s32.totalorder %s107, 1
      %p324 = por %p322, %p323
      %p326 = scmp.ne.s32.totalorder %s311, %s325
      %p327 = scmp.eq.s32.totalorder %s107, 0
      %p328 = por %p326, %p327
      %s330 = sadd.s32 %s329, 1
      %p333 = scmp.eq.s32.totalorder %s101, 1
      %p334 = scmp.ne.s32.totalorder %s329, %s331
      %p335 = scmp.eq.s32.totalorder %s101, 0
      %p336 = por %p334, %p335
      %p337 = scmp.ne.s32.totalorder %s329, %s331
      %p338 = scmp.eq.s32.totalorder %s106, 1
      %p339 = por %p337, %p338
      %p340 = scmp.ne.s32.totalorder %s331, %s332
      %p341 = scmp.eq.s32.totalorder %s106, 0
      %p342 = por %p340, %p341
      %p343 = scmp.ne.s32.totalorder %s331, %s332
      %p344 = scmp.eq.s32.totalorder %s107, 1
      %p345 = por %p343, %p344
      %p347 = scmp.ne.s32.totalorder %s332, %s346
      %p348 = scmp.eq.s32.totalorder %s107, 0
      %p349 = por %p347, %p348
      %s351 = sadd.s32 %s350, 1
      %p354 = scmp.eq.s32.totalorder %s101, 1
      %p355 = scmp.ne.s32.totalorder %s350, %s352
      %p356 = scmp.eq.s32.totalorder %s101, 0
      %p357 = por %p355, %p356
      %p358 = scmp.ne.s32.totalorder %s350, %s352
      %p359 = scmp.eq.s32.totalorder %s106, 1
      %p360 = por %p358, %p359
      %p361 = scmp.ne.s32.totalorder %s352, %s353
      %p362 = scmp.eq.s32.totalorder %s106, 0
      %p363 = por %p361, %p362
      %p364 = scmp.ne.s32.totalorder %s352, %s353
      %p365 = scmp.eq.s32.totalorder %s107, 1
      %p366 = por %p364, %p365
      %p368 = scmp.ne.s32.totalorder %s353, %s367
      %p369 = scmp.eq.s32.totalorder %s107, 0
      %p370 = por %p368, %p369
      %s372 = sadd.s32 %s371, 1
      %p375 = scmp.eq.s32.totalorder %s101, 1
      %p376 = scmp.ne.s32.totalorder %s371, %s373
      %p377 = scmp.eq.s32.totalorder %s101, 0
      %p378 = por %p376, %p377
      %p379 = scmp.ne.s32.totalorder %s371, %s373
      %p380 = scmp.eq.s32.totalorder %s106, 1
      %p381 = por %p379, %p380
      %p382 = scmp.ne.s32.totalorder %s373, %s374
      %p383 = scmp.eq.s32.totalorder %s106, 0
      %p384 = por %p382, %p383
      %p385 = scmp.ne.s32.totalorder %s373, %s374
      %p386 = scmp.eq.s32.totalorder %s107, 1
      %p387 = por %p385, %p386
      %p389 = scmp.ne.s32.totalorder %s374, %s388
      %p390 = scmp.eq.s32.totalorder %s107, 0
      %p391 = por %p389, %p390
      %s393 = sadd.s32 %s392, 1
      %p396 = scmp.eq.s32.totalorder %s101, 1
      %p397 = scmp.ne.s32.totalorder %s392, %s394
      %p398 = scmp.eq.s32.totalorder %s101, 0
      %p399 = por %p397, %p398
      %p400 = scmp.ne.s32.totalorder %s392, %s394
      %p401 = scmp.eq.s32.totalorder %s106, 1
      %p402 = por %p400, %p401
      %p403 = scmp.ne.s32.totalorder %s394, %s395
      %p404 = scmp.eq.s32.totalorder %s106, 0
      %p405 = por %p403, %p404
      %p406 = scmp.ne.s32.totalorder %s394, %s395
      %p407 = scmp.eq.s32.totalorder %s107, 1
      %p408 = por %p406, %p407
      %p410 = scmp.ne.s32.totalorder %s395, %s409
      %p411 = scmp.eq.s32.totalorder %s107, 0
      %p412 = por %p410, %p411
      %s414 = sadd.s32 %s413, 1
      %p417 = scmp.eq.s32.totalorder %s101, 1
      %p418 = scmp.ne.s32.totalorder %s413, %s415
      %p419 = scmp.eq.s32.totalorder %s101, 0
      %p420 = por %p418, %p419
      %p421 = scmp.ne.s32.totalorder %s413, %s415
      %p422 = scmp.eq.s32.totalorder %s106, 1
      %p423 = por %p421, %p422
      %p424 = scmp.ne.s32.totalorder %s415, %s416
      %p425 = scmp.eq.s32.totalorder %s106, 0
      %p426 = por %p424, %p425
      %p427 = scmp.ne.s32.totalorder %s415, %s416
      %p428 = scmp.eq.s32.totalorder %s107, 1
      %p429 = por %p427, %p428
      %p431 = scmp.ne.s32.totalorder %s416, %s430
      %p432 = scmp.eq.s32.totalorder %s107, 0
      %p433 = por %p431, %p432
      %s435 = sadd.s32 %s434, 1
      %p438 = scmp.eq.s32.totalorder %s101, 1
      %p439 = scmp.ne.s32.totalorder %s434, %s436
      %p440 = scmp.eq.s32.totalorder %s101, 0
      %p441 = por %p439, %p440
      %p442 = scmp.ne.s32.totalorder %s434, %s436
      %p443 = scmp.eq.s32.totalorder %s106, 1
      %p444 = por %p442, %p443
      %p445 = scmp.ne.s32.totalorder %s436, %s437
      %p446 = scmp.eq.s32.totalorder %s106, 0
      %p447 = por %p445, %p446
      %p448 = scmp.ne.s32.totalorder %s436, %s437
      %p449 = scmp.eq.s32.totalorder %s107, 1
      %p450 = por %p448, %p449
      %p452 = scmp.ne.s32.totalorder %s437, %s451
      %p453 = scmp.eq.s32.totalorder %s107, 0
      %p454 = por %p452, %p453
      %s456 = sadd.s32 %s455, 1
      %p459 = scmp.eq.s32.totalorder %s101, 1
      %p460 = scmp.ne.s32.totalorder %s455, %s457
      %p461 = scmp.eq.s32.totalorder %s101, 0
      %p462 = por %p460, %p461
      %p463 = scmp.ne.s32.totalorder %s455, %s457
      %p464 = scmp.eq.s32.totalorder %s106, 1
      %p465 = por %p463, %p464
      %p466 = scmp.ne.s32.totalorder %s457, %s458
      %p467 = scmp.eq.s32.totalorder %s106, 0
      %p468 = por %p466, %p467
      %p469 = scmp.ne.s32.totalorder %s457, %s458
      %p470 = scmp.eq.s32.totalorder %s107, 1
      %p471 = por %p469, %p470
      %p473 = scmp.ne.s32.totalorder %s458, %s472
      %p474 = scmp.eq.s32.totalorder %s107, 0
      %p475 = por %p473, %p474
      %s477 = sadd.s32 %s476, 1
      %p480 = scmp.eq.s32.totalorder %s101, 1
      %p481 = scmp.ne.s32.totalorder %s476, %s478
      %p482 = scmp.eq.s32.totalorder %s101, 0
      %p483 = por %p481, %p482
      %p484 = scmp.ne.s32.totalorder %s476, %s478
      %p485 = scmp.eq.s32.totalorder %s106, 1
      %p486 = por %p484, %p485
      %p487 = scmp.ne.s32.totalorder %s478, %s479
      %p488 = scmp.eq.s32.totalorder %s106, 0
      %p489 = por %p487, %p488
      %p490 = scmp.ne.s32.totalorder %s478, %s479
      %p491 = scmp.eq.s32.totalorder %s107, 1
      %p492 = por %p490, %p491
      %p494 = scmp.ne.s32.totalorder %s479, %s493
      %p495 = scmp.eq.s32.totalorder %s107, 0
      %p496 = por %p494, %p495
      %s498 = sadd.s32 %s497, 1
      %p501 = scmp.eq.s32.totalorder %s101, 1
      %p502 = scmp.ne.s32.totalorder %s497, %s499
      %p503 = scmp.eq.s32.totalorder %s101, 0
      %p504 = por %p502, %p503
      %p505 = scmp.ne.s32.totalorder %s497, %s499
      %p506 = scmp.eq.s32.totalorder %s106, 1
      %p507 = por %p505, %p506
      %p508 = scmp.ne.s32.totalorder %s499, %s500
      %p509 = scmp.eq.s32.totalorder %s106, 0
      %p510 = por %p508, %p509
      %p511 = scmp.ne.s32.totalorder %s499, %s500
      %p512 = scmp.eq.s32.totalorder %s107, 1
      %p513 = por %p511, %p512
      %p515 = scmp.ne.s32.totalorder %s500, %s514
      %p516 = scmp.eq.s32.totalorder %s107, 0
      %p517 = por %p515, %p516
      %s519 = sadd.s32 %s518, 1
      %p522 = scmp.eq.s32.totalorder %s101, 1
      %p523 = scmp.ne.s32.totalorder %s518, %s520
      %p524 = scmp.eq.s32.totalorder %s101, 0
      %p525 = por %p523, %p524
      %p526 = scmp.ne.s32.totalorder %s518, %s520
      %p527 = scmp.eq.s32.totalorder %s106, 1
      %p528 = por %p526, %p527
      %p529 = scmp.ne.s32.totalorder %s520, %s521
      %p530 = scmp.eq.s32.totalorder %s106, 0
      %p531 = por %p529, %p530
      %p532 = scmp.ne.s32.totalorder %s520, %s521
      %p533 = scmp.eq.s32.totalorder %s107, 1
      %p534 = por %p532, %p533
      %p536 = scmp.ne.s32.totalorder %s521, %s535
      %p537 = scmp.eq.s32.totalorder %s107, 0
      %p538 = por %p536, %p537
      %s540 = sadd.s32 %s539, 1
      %p543 = scmp.eq.s32.totalorder %s101, 1
      %p544 = scmp.ne.s32.totalorder %s539, %s541
      %p545 = scmp.eq.s32.totalorder %s101, 0
      %p546 = por %p544, %p545
      %p547 = scmp.ne.s32.totalorder %s539, %s541
      %p548 = scmp.eq.s32.totalorder %s106, 1
      %p549 = por %p547, %p548
      %p550 = scmp.ne.s32.totalorder %s541, %s542
      %p551 = scmp.eq.s32.totalorder %s106, 0
      %p552 = por %p550, %p551
      %p553 = scmp.ne.s32.totalorder %s541, %s542
      %p554 = scmp.eq.s32.totalorder %s107, 1
      %p555 = por %p553, %p554
      %p557 = scmp.ne.s32.totalorder %s542, %s556
      %p558 = scmp.eq.s32.totalorder %s107, 0
      %p559 = por %p557, %p558
      %s561 = sadd.s32 %s560, 1
      %p564 = scmp.eq.s32.totalorder %s101, 1
      %p565 = scmp.ne.s32.totalorder %s560, %s562
      %p566 = scmp.eq.s32.totalorder %s101, 0
      %p567 = por %p565, %p566
      %p568 = scmp.ne.s32.totalorder %s560, %s562
      %p569 = scmp.eq.s32.totalorder %s106, 1
      %p570 = por %p568, %p569
      %p571 = scmp.ne.s32.totalorder %s562, %s563
      %p572 = scmp.eq.s32.totalorder %s106, 0
      %p573 = por %p571, %p572
      %p574 = scmp.ne.s32.totalorder %s562, %s563
      %p575 = scmp.eq.s32.totalorder %s107, 1
      %p576 = por %p574, %p575
      %p578 = scmp.ne.s32.totalorder %s563, %s577
      %p579 = scmp.eq.s32.totalorder %s107, 0
      %p580 = por %p578, %p579
      %s582 = sadd.s32 %s581, 1
      %p585 = scmp.eq.s32.totalorder %s101, 1
      %p586 = scmp.ne.s32.totalorder %s581, %s583
      %p587 = scmp.eq.s32.totalorder %s101, 0
      %p588 = por %p586, %p587
      %p589 = scmp.ne.s32.totalorder %s581, %s583
      %p590 = scmp.eq.s32.totalorder %s106, 1
      %p591 = por %p589, %p590
      %p592 = scmp.ne.s32.totalorder %s583, %s584
      %p593 = scmp.eq.s32.totalorder %s106, 0
      %p594 = por %p592, %p593
      %p595 = scmp.ne.s32.totalorder %s583, %s584
      %p596 = scmp.eq.s32.totalorder %s107, 1
      %p597 = por %p595, %p596
      %p599 = scmp.ne.s32.totalorder %s584, %s598
      %p600 = scmp.eq.s32.totalorder %s107, 0
      %p601 = por %p599, %p600
      %s603 = sadd.s32 %s602, 1
      %p606 = scmp.eq.s32.totalorder %s101, 1
      %p607 = scmp.ne.s32.totalorder %s602, %s604
      %p608 = scmp.eq.s32.totalorder %s101, 0
      %p609 = por %p607, %p608
      %p610 = scmp.ne.s32.totalorder %s602, %s604
      %p611 = scmp.eq.s32.totalorder %s106, 1
      %p612 = por %p610, %p611
      %p613 = scmp.ne.s32.totalorder %s604, %s605
      %p614 = scmp.eq.s32.totalorder %s106, 0
      %p615 = por %p613, %p614
      %p616 = scmp.ne.s32.totalorder %s604, %s605
      %p617 = scmp.eq.s32.totalorder %s107, 1
      %p618 = por %p616, %p617
      %p620 = scmp.ne.s32.totalorder %s605, %s619
      %p621 = scmp.eq.s32.totalorder %s107, 0
      %p622 = por %p620, %p621
      %s624 = sadd.s32 %s623, 1
      %p627 = scmp.eq.s32.totalorder %s101, 1
      %p628 = scmp.ne.s32.totalorder %s623, %s625
      %p629 = scmp.eq.s32.totalorder %s101, 0
      %p630 = por %p628, %p629
      %p631 = scmp.ne.s32.totalorder %s623, %s625
      %p632 = scmp.eq.s32.totalorder %s106, 1
      %p633 = por %p631, %p632
      %p634 = scmp.ne.s32.totalorder %s625, %s626
      %p635 = scmp.eq.s32.totalorder %s106, 0
      %p636 = por %p634, %p635
      %p637 = scmp.ne.s32.totalorder %s625, %s626
      %p638 = scmp.eq.s32.totalorder %s107, 1
      %p639 = por %p637, %p638
      %p641 = scmp.ne.s32.totalorder %s626, %s640
      %p642 = scmp.eq.s32.totalorder %s107, 0
      %p643 = por %p641, %p642
      %s645 = sadd.s32 %s644, 1
      %p648 = scmp.eq.s32.totalorder %s101, 1
      %p649 = scmp.ne.s32.totalorder %s644, %s646
      %p650 = scmp.eq.s32.totalorder %s101, 0
      %p651 = por %p649, %p650
      %p652 = scmp.ne.s32.totalorder %s644, %s646
      %p653 = scmp.eq.s32.totalorder %s106, 1
      %p654 = por %p652, %p653
      %p655 = scmp.ne.s32.totalorder %s646, %s647
      %p656 = scmp.eq.s32.totalorder %s106, 0
      %p657 = por %p655, %p656
      %p658 = scmp.ne.s32.totalorder %s646, %s647
      %p659 = scmp.eq.s32.totalorder %s107, 1
      %p660 = por %p658, %p659
      %p662 = scmp.ne.s32.totalorder %s647, %s661
      %p663 = scmp.eq.s32.totalorder %s107, 0
      %p664 = por %p662, %p663
      %s666 = sadd.s32 %s665, 1
      %p669 = scmp.eq.s32.totalorder %s101, 1
      %p670 = scmp.ne.s32.totalorder %s665, %s667
      %p671 = scmp.eq.s32.totalorder %s101, 0
      %p672 = por %p670, %p671
      %p673 = scmp.ne.s32.totalorder %s665, %s667
      %p674 = scmp.eq.s32.totalorder %s106, 1
      %p675 = por %p673, %p674
      %p676 = scmp.ne.s32.totalorder %s667, %s668
      %p677 = scmp.eq.s32.totalorder %s106, 0
      %p678 = por %p676, %p677
      %p679 = scmp.ne.s32.totalorder %s667, %s668
      %p680 = scmp.eq.s32.totalorder %s107, 1
      %p681 = por %p679, %p680
      %p683 = scmp.ne.s32.totalorder %s668, %s682
      %p684 = scmp.eq.s32.totalorder %s107, 0
      %p685 = por %p683, %p684
      %s687 = sadd.s32 %s686, 1
      %p690 = scmp.eq.s32.totalorder %s101, 1
      %p691 = scmp.ne.s32.totalorder %s686, %s688
      %p692 = scmp.eq.s32.totalorder %s101, 0
      %p693 = por %p691, %p692
      %p694 = scmp.ne.s32.totalorder %s686, %s688
      %p695 = scmp.eq.s32.totalorder %s106, 1
      %p696 = por %p694, %p695
      %p697 = scmp.ne.s32.totalorder %s688, %s689
      %p698 = scmp.eq.s32.totalorder %s106, 0
      %p699 = por %p697, %p698
      %p700 = scmp.ne.s32.totalorder %s688, %s689
      %p701 = scmp.eq.s32.totalorder %s107, 1
      %p702 = por %p700, %p701
      %p704 = scmp.ne.s32.totalorder %s689, %s703
      %p705 = scmp.eq.s32.totalorder %s107, 0
      %p706 = por %p704, %p705
      %s708 = sadd.s32 %s707, 1
      %p711 = scmp.eq.s32.totalorder %s101, 1
      %p712 = scmp.ne.s32.totalorder %s707, %s709
      %p713 = scmp.eq.s32.totalorder %s101, 0
      %p714 = por %p712, %p713
      %p715 = scmp.ne.s32.totalorder %s707, %s709
      %p716 = scmp.eq.s32.totalorder %s106, 1
      %p717 = por %p715, %p716
      %p718 = scmp.ne.s32.totalorder %s709, %s710
      %p719 = scmp.eq.s32.totalorder %s106, 0
      %p720 = por %p718, %p719
      %p721 = scmp.ne.s32.totalorder %s709, %s710
      %p722 = scmp.eq.s32.totalorder %s107, 1
      %p723 = por %p721, %p722
      %p725 = scmp.ne.s32.totalorder %s710, %s724
      %p726 = scmp.eq.s32.totalorder %s107, 0
      %p727 = por %p725, %p726
      %s729 = sadd.s32 %s728, 1
      %p732 = scmp.eq.s32.totalorder %s101, 1
      %p733 = scmp.ne.s32.totalorder %s728, %s730
      %p734 = scmp.eq.s32.totalorder %s101, 0
      %p735 = por %p733, %p734
      %p736 = scmp.ne.s32.totalorder %s728, %s730
      %p737 = scmp.eq.s32.totalorder %s106, 1
      %p738 = por %p736, %p737
      %p739 = scmp.ne.s32.totalorder %s730, %s731
      %p740 = scmp.eq.s32.totalorder %s106, 0
      %p741 = por %p739, %p740
      %p742 = scmp.ne.s32.totalorder %s730, %s731
      %p743 = scmp.eq.s32.totalorder %s107, 1
      %p744 = por %p742, %p743
      %p746 = scmp.ne.s32.totalorder %s731, %s745
      %p747 = scmp.eq.s32.totalorder %s107, 0
      %p748 = por %p746, %p747
      %s750 = sadd.s32 %s749, 1
      %p753 = scmp.eq.s32.totalorder %s101, 1
      %p754 = scmp.ne.s32.totalorder %s749, %s751
      %p755 = scmp.eq.s32.totalorder %s101, 0
      %p756 = por %p754, %p755
      %p757 = scmp.ne.s32.totalorder %s749, %s751
      %p758 = scmp.eq.s32.totalorder %s106, 1
      %p759 = por %p757, %p758
      %p760 = scmp.ne.s32.totalorder %s751, %s752
      %p761 = scmp.eq.s32.totalorder %s106, 0
      %p762 = por %p760, %p761
      %p763 = scmp.ne.s32.totalorder %s751, %s752
      %p764 = scmp.eq.s32.totalorder %s107, 1
      %p765 = por %p763, %p764
      %p767 = scmp.ne.s32.totalorder %s752, %s766
      %p768 = scmp.eq.s32.totalorder %s107, 0
      %p769 = por %p767, %p768
      %s771 = sadd.s32 %s770, 1
      %p774 = scmp.eq.s32.totalorder %s101, 1
      %p775 = scmp.ne.s32.totalorder %s770, %s772
      %p776 = scmp.eq.s32.totalorder %s101, 0
      %p777 = por %p775, %p776
      %p778 = scmp.ne.s32.totalorder %s770, %s772
      %p779 = scmp.eq.s32.totalorder %s106, 1
      %p780 = por %p778, %p779
      %p781 = scmp.ne.s32.totalorder %s772, %s773
      %p782 = scmp.eq.s32.totalorder %s106, 0
      %p783 = por %p781, %p782
      %p784 = scmp.ne.s32.totalorder %s772, %s773
      %p785 = scmp.eq.s32.totalorder %s107, 1
      %p786 = por %p784, %p785
      %p788 = scmp.ne.s32.totalorder %s773, %s787
      %p789 = scmp.eq.s32.totalorder %s107, 0
      %p790 = por %p788, %p789
      %s792 = sadd.s32 %s791, 1
      %p795 = scmp.eq.s32.totalorder %s101, 1
      %p796 = scmp.ne.s32.totalorder %s791, %s793
      %p797 = scmp.eq.s32.totalorder %s101, 0
      %p798 = por %p796, %p797
      %p799 = scmp.ne.s32.totalorder %s791, %s793
      %p800 = scmp.eq.s32.totalorder %s106, 1
      %p801 = por %p799, %p800
      %p802 = scmp.ne.s32.totalorder %s793, %s794
      %p803 = scmp.eq.s32.totalorder %s106, 0
      %p804 = por %p802, %p803
      %p805 = scmp.ne.s32.totalorder %s793, %s794
      %p806 = scmp.eq.s32.totalorder %s107, 1
      %p807 = por %p805, %p806
      %p809 = scmp.ne.s32.totalorder %s794, %s808
      %p810 = scmp.eq.s32.totalorder %s107, 0
      %p811 = por %p809, %p810
      %s813 = sadd.s32 %s812, 1
      %p816 = scmp.eq.s32.totalorder %s101, 1
      %p817 = scmp.ne.s32.totalorder %s812, %s814
      %p818 = scmp.eq.s32.totalorder %s101, 0
      %p819 = por %p817, %p818
      %p820 = scmp.ne.s32.totalorder %s812, %s814
      %p821 = scmp.eq.s32.totalorder %s106, 1
      %p822 = por %p820, %p821
      %p823 = scmp.ne.s32.totalorder %s814, %s815
      %p824 = scmp.eq.s32.totalorder %s106, 0
      %p825 = por %p823, %p824
      %p826 = scmp.ne.s32.totalorder %s814, %s815
      %p827 = scmp.eq.s32.totalorder %s107, 1
      %p828 = por %p826, %p827
      %p830 = scmp.ne.s32.totalorder %s815, %s829
      %p831 = scmp.eq.s32.totalorder %s107, 0
      %p832 = por %p830, %p831
      %s834 = sadd.s32 %s833, 1
      %p837 = scmp.eq.s32.totalorder %s101, 1
      %p838 = scmp.ne.s32.totalorder %s833, %s835
      %p839 = scmp.eq.s32.totalorder %s101, 0
      %p840 = por %p838, %p839
      %p841 = scmp.ne.s32.totalorder %s833, %s835
      %p842 = scmp.eq.s32.totalorder %s106, 1
      %p843 = por %p841, %p842
      %p844 = scmp.ne.s32.totalorder %s835, %s836
      %p845 = scmp.eq.s32.totalorder %s106, 0
      %p846 = por %p844, %p845
      %p847 = scmp.ne.s32.totalorder %s835, %s836
      %p848 = scmp.eq.s32.totalorder %s107, 1
      %p849 = por %p847, %p848
      %p851 = scmp.ne.s32.totalorder %s836, %s850
      %p852 = scmp.eq.s32.totalorder %s107, 0
      %p853 = por %p851, %p852
      %s855 = sadd.s32 %s854, 1
      %p858 = scmp.eq.s32.totalorder %s101, 1
      %p859 = scmp.ne.s32.totalorder %s854, %s856
      %p860 = scmp.eq.s32.totalorder %s101, 0
      %p861 = por %p859, %p860
      %p862 = scmp.ne.s32.totalorder %s854, %s856
      %p863 = scmp.eq.s32.totalorder %s106, 1
      %p864 = por %p862, %p863
      %p865 = scmp.ne.s32.totalorder %s856, %s857
      %p866 = scmp.eq.s32.totalorder %s106, 0
      %p867 = por %p865, %p866
      %p868 = scmp.ne.s32.totalorder %s856, %s857
      %p869 = scmp.eq.s32.totalorder %s107, 1
      %p870 = por %p868, %p869
      %p872 = scmp.ne.s32.totalorder %s857, %s871
      %p873 = scmp.eq.s32.totalorder %s107, 0
      %p874 = por %p872, %p873
      %s876 = sadd.s32 %s875, 1
      %p879 = scmp.eq.s32.totalorder %s101, 1
      %p880 = scmp.ne.s32.totalorder %s875, %s877
      %p881 = scmp.eq.s32.totalorder %s101, 0
      %p882 = por %p880, %p881
      %p883 = scmp.ne.s32.totalorder %s875, %s877
      %p884 = scmp.eq.s32.totalorder %s106, 1
      %p885 = por %p883, %p884
      %p886 = scmp.ne.s32.totalorder %s877, %s878
      %p887 = scmp.eq.s32.totalorder %s106, 0
      %p888 = por %p886, %p887
      %p889 = scmp.ne.s32.totalorder %s877, %s878
      %p890 = scmp.eq.s32.totalorder %s107, 1
      %p891 = por %p889, %p890
      %p893 = scmp.ne.s32.totalorder %s878, %s892
      %p894 = scmp.eq.s32.totalorder %s107, 0
      %p895 = por %p893, %p894
      %s897 = sadd.s32 %s896, 1
      %p900 = scmp.eq.s32.totalorder %s101, 1
      %p901 = scmp.ne.s32.totalorder %s896, %s898
      %p902 = scmp.eq.s32.totalorder %s101, 0
      %p903 = por %p901, %p902
      %p904 = scmp.ne.s32.totalorder %s896, %s898
      %p905 = scmp.eq.s32.totalorder %s106, 1
      %p906 = por %p904, %p905
      %p907 = scmp.ne.s32.totalorder %s898, %s899
      %p908 = scmp.eq.s32.totalorder %s106, 0
      %p909 = por %p907, %p908
      %p910 = scmp.ne.s32.totalorder %s898, %s899
      %p911 = scmp.eq.s32.totalorder %s107, 1
      %p912 = por %p910, %p911
      %p914 = scmp.ne.s32.totalorder %s899, %s913
      %p915 = scmp.eq.s32.totalorder %s107, 0
      %p916 = por %p914, %p915
      %s918 = sadd.s32 %s917, 1
      %p921 = scmp.eq.s32.totalorder %s101, 1
      %p922 = scmp.ne.s32.totalorder %s917, %s919
      %p923 = scmp.eq.s32.totalorder %s101, 0
      %p924 = por %p922, %p923
      %p925 = scmp.ne.s32.totalorder %s917, %s919
      %p926 = scmp.eq.s32.totalorder %s106, 1
      %p927 = por %p925, %p926
      %p928 = scmp.ne.s32.totalorder %s919, %s920
      %p929 = scmp.eq.s32.totalorder %s106, 0
      %p930 = por %p928, %p929
      %p931 = scmp.ne.s32.totalorder %s919, %s920
      %p932 = scmp.eq.s32.totalorder %s107, 1
      %p933 = por %p931, %p932
      %p935 = scmp.ne.s32.totalorder %s920, %s934
      %p936 = scmp.eq.s32.totalorder %s107, 0
      %p937 = por %p935, %p936
      %s939 = sadd.s32 %s938, 1
      %p942 = scmp.eq.s32.totalorder %s101, 1
      %p943 = scmp.ne.s32.totalorder %s938, %s940
      %p944 = scmp.eq.s32.totalorder %s101, 0
      %p945 = por %p943, %p944
      %p946 = scmp.ne.s32.totalorder %s938, %s940
      %p947 = scmp.eq.s32.totalorder %s106, 1
      %p948 = por %p946, %p947
      %p949 = scmp.ne.s32.totalorder %s940, %s941
      %p950 = scmp.eq.s32.totalorder %s106, 0
      %p951 = por %p949, %p950
      %p952 = scmp.ne.s32.totalorder %s940, %s941
      %p953 = scmp.eq.s32.totalorder %s107, 1
      %p954 = por %p952, %p953
      %p956 = scmp.ne.s32.totalorder %s941, %s955
      %p957 = scmp.eq.s32.totalorder %s107, 0
      %p958 = por %p956, %p957
      %s959 = ssub.s32 %s101, %s108
      %p960 = scmp.eq.s32.totalorder %s959, 0
      %s962 = sadd.s32 %s961, 1
      %s963 = scalar_select %p960, %s961, %s962
      %p966 = pneg %p960
      %p967 = scmp.eq.s32.totalorder %s101, 1
      %p968 = por %p966, %p967
      %p969 = scmp.ne.s32.totalorder %s961, %s964
      %p970 = scmp.eq.s32.totalorder %s101, 0
      %p971 = por %p969, %p970
      %p972 = scmp.ne.s32.totalorder %s961, %s964
      %p973 = scmp.eq.s32.totalorder %s106, 1
      %p974 = por %p972, %p973
      %p975 = scmp.ne.s32.totalorder %s964, %s965
      %p976 = scmp.eq.s32.totalorder %s106, 0
      %p977 = por %p975, %p976
      %p978 = scmp.ne.s32.totalorder %s964, %s965
      %p979 = scmp.eq.s32.totalorder %s107, 1
      %p980 = por %p978, %p979
      %p982 = scmp.ne.s32.totalorder %s965, %s981
      %p983 = scmp.eq.s32.totalorder %s107, 0
      %p984 = por %p982, %p983
      %p985 = scmp.le.s32.totalorder 1, %s101
      %p986 = scmp.lt.s32.totalorder %s101, 3
      %p987 = pnand %p985, %p986
      %p988 = pneg %p987
      // Predicated region
      $region9: #{tpu_custom_call.1} parent=5 // pred_check
        _
      $region10: #{tpu_custom_call.1} parent=5 // pred_check_branch
        %990 = sbr.rel (%p987) target = $region12
      $region11: #{tpu_custom_call.1} parent=5 // pred_region
        %s991 = ssub.s32 %s101, 1
        // Predicated region
        $region13: #{tpu_custom_call.1} parent=11 // pred_check
          %p992 = pneg %p174
        $region14: #{tpu_custom_call.1} parent=11 // pred_check_branch
          %994 = sbr.rel (%p992) target = $region16
        $region15: #{tpu_custom_call.1} parent=11 // pred_region
          %s996 = ssub.s32 16, 16
          %997 = vsyncadd [#allocation7], %s996
          %s999 = sshll.u32 [#allocation6], 4
          %s1000 = int_to_ptr.vmem [resolvable:$true] %s999
          %1002 = dma.hbm_to_vmem [thread:$0]  %s5, 16, %s1000, [#allocation7]
        $region16: #{tpu_custom_call.1} parent=11 // pred_fallthru
          _
        // Predicated region
        $region17: #{tpu_custom_call.1} parent=11 // pred_check
          %p1003 = pneg %p195
        $region18: #{tpu_custom_call.1} parent=11 // pred_check_branch
          %1005 = sbr.rel (%p1003) target = $region20
        $region19: #{tpu_custom_call.1} parent=11 // pred_region
          %s1007 = ssub.s32 16, 16
          %1008 = vsyncadd [#allocation7], %s1007
          %s1010 = sshll.u32 [#allocation8], 4
          %s1011 = int_to_ptr.vmem [resolvable:$true] %s1010
          %1013 = dma.hbm_to_vmem [thread:$0]  %s7, 16, %s1011, [#allocation7]
        $region20: #{tpu_custom_call.1} parent=11 // pred_fallthru
          _
        // Predicated region
        $region21: #{tpu_custom_call.1} parent=11 // pred_check
          %p1014 = pneg %p216
        $region22: #{tpu_custom_call.1} parent=11 // pred_check_branch
          %1016 = sbr.rel (%p1014) target = $region24
        $region23: #{tpu_custom_call.1} parent=11 // pred_region
          _
        $region24: #{tpu_custom_call.1} parent=11 // pred_fallthru
          _
        // Predicated region
        $region25: #{tpu_custom_call.1} parent=11 // pred_check
          %p1017 = pneg %p237
        $region26: #{tpu_custom_call.1} parent=11 // pred_check_branch
          %1019 = sbr.rel (%p1017) target = $region28
        $region27: #{tpu_custom_call.1} parent=11 // pred_region
          %s1021 = ssub.s32 16, 16
          %1022 = vsyncadd [#allocation10], %s1021
          %s1024 = sshll.u32 [#allocation9], 4
          %s1025 = int_to_ptr.vmem [resolvable:$true] %s1024
          %1027 = dma.hbm_to_vmem [thread:$0]  %s11, 16, %s1025, [#allocation10]
        $region28: #{tpu_custom_call.1} parent=11 // pred_fallthru
          _
        // Predicated region
        $region29: #{tpu_custom_call.1} parent=11 // pred_check
          %p1028 = pneg %p258
        $region30: #{tpu_custom_call.1} parent=11 // pred_check_branch
          %1030 = sbr.rel (%p1028) target = $region32
        $region31: #{tpu_custom_call.1} parent=11 // pred_region
          _
        $region32: #{tpu_custom_call.1} parent=11 // pred_fallthru
          _
        // Predicated region
        $region33: #{tpu_custom_call.1} parent=11 // pred_check
          %p1031 = pneg %p279
        $region34: #{tpu_custom_call.1} parent=11 // pred_check_branch
          %1033 = sbr.rel (%p1031) target = $region36
        $region35: #{tpu_custom_call.1} parent=11 // pred_region
          %s1035 = ssub.s32 16, 16
          %1036 = vsyncadd [#allocation10], %s1035
          %s1038 = sshll.u32 [#allocation11], 4
          %s1039 = int_to_ptr.vmem [resolvable:$true] %s1038
          %1041 = dma.hbm_to_vmem [thread:$0]  %s15, 16, %s1039, [#allocation10]
        $region36: #{tpu_custom_call.1} parent=11 // pred_fallthru
          _
        // Predicated region
        $region37: #{tpu_custom_call.1} parent=11 // pred_check
          %p1042 = pneg %p300
        $region38: #{tpu_custom_call.1} parent=11 // pred_check_branch
          %1044 = sbr.rel (%p1042) target = $region40
        $region39: #{tpu_custom_call.1} parent=11 // pred_region
          %s1046 = ssub.s32 16, 16
          %1047 = vsyncadd [#allocation13], %s1046
          %s1049 = sshll.u32 [#allocation12], 4
          %s1050 = int_to_ptr.vmem [resolvable:$true] %s1049
          %1052 = dma.hbm_to_vmem [thread:$0]  %s17, 16, %s1050, [#allocation13]
        $region40: #{tpu_custom_call.1} parent=11 // pred_fallthru
          _
        // Predicated region
        $region41: #{tpu_custom_call.1} parent=11 // pred_check
          %p1053 = pneg %p321
        $region42: #{tpu_custom_call.1} parent=11 // pred_check_branch
          %1055 = sbr.rel (%p1053) target = $region44
        $region43: #{tpu_custom_call.1} parent=11 // pred_region
          %s1057 = ssub.s32 16, 16
          %1058 = vsyncadd [#allocation13], %s1057
          %s1060 = sshll.u32 [#allocation14], 4
          %s1061 = int_to_ptr.vmem [resolvable:$true] %s1060
          %1063 = dma.hbm_to_vmem [thread:$0]  %s19, 16, %s1061, [#allocation13]
        $region44: #{tpu_custom_call.1} parent=11 // pred_fallthru
          _
        // Predicated region
        $region45: #{tpu_custom_call.1} parent=11 // pred_check
          %p1064 = pneg %p342
        $region46: #{tpu_custom_call.1} parent=11 // pred_check_branch
          %1066 = sbr.rel (%p1064) target = $region48
        $region47: #{tpu_custom_call.1} parent=11 // pred_region
          _
        $region48: #{tpu_custom_call.1} parent=11 // pred_fallthru
          _
        // Predicated region
        $region49: #{tpu_custom_call.1} parent=11 // pred_check
          %p1067 = pneg %p363
        $region50: #{tpu_custom_call.1} parent=11 // pred_check_branch
          %1069 = sbr.rel (%p1067) target = $region52
        $region51: #{tpu_custom_call.1} parent=11 // pred_region
          %s1071 = ssub.s32 16, 16
          %1072 = vsyncadd [#allocation16], %s1071
          %s1074 = sshll.u32 [#allocation15], 4
          %s1075 = int_to_ptr.vmem [resolvable:$true] %s1074
          %1077 = dma.hbm_to_vmem [thread:$0]  %s23, 16, %s1075, [#allocation16]
        $region52: #{tpu_custom_call.1} parent=11 // pred_fallthru
          _
        // Predicated region
        $region53: #{tpu_custom_call.1} parent=11 // pred_check
          %p1078 = pneg %p384
        $region54: #{tpu_custom_call.1} parent=11 // pred_check_branch
          %1080 = sbr.rel (%p1078) target = $region56
        $region55: #{tpu_custom_call.1} parent=11 // pred_region
          _
        $region56: #{tpu_custom_call.1} parent=11 // pred_fallthru
          _
        // Predicated region
        $region57: #{tpu_custom_call.1} parent=11 // pred_check
          %p1081 = pneg %p405
        $region58: #{tpu_custom_call.1} parent=11 // pred_check_branch
          %1083 = sbr.rel (%p1081) target = $region60
        $region59: #{tpu_custom_call.1} parent=11 // pred_region
          %s1085 = ssub.s32 16, 16
          %1086 = vsyncadd [#allocation16], %s1085
          %s1088 = sshll.u32 [#allocation17], 4
          %s1089 = int_to_ptr.vmem [resolvable:$true] %s1088
          %1091 = dma.hbm_to_vmem [thread:$0]  %s27, 16, %s1089, [#allocation16]
        $region60: #{tpu_custom_call.1} parent=11 // pred_fallthru
          _
        // Predicated region
        $region61: #{tpu_custom_call.1} parent=11 // pred_check
          %p1092 = pneg %p426
        $region62: #{tpu_custom_call.1} parent=11 // pred_check_branch
          %1094 = sbr.rel (%p1092) target = $region64
        $region63: #{tpu_custom_call.1} parent=11 // pred_region
          _
        $region64: #{tpu_custom_call.1} parent=11 // pred_fallthru
          _
        // Predicated region
        $region65: #{tpu_custom_call.1} parent=11 // pred_check
          %p1095 = pneg %p447
        $region66: #{tpu_custom_call.1} parent=11 // pred_check_branch
          %1097 = sbr.rel (%p1095) target = $region68
        $region67: #{tpu_custom_call.1} parent=11 // pred_region
          %s1099 = ssub.s32 16, 16
          %1100 = vsyncadd [#allocation19], %s1099
          %s1102 = sshll.u32 [#allocation18], 4
          %s1103 = int_to_ptr.vmem [resolvable:$true] %s1102
          %1105 = dma.hbm_to_vmem [thread:$0]  %s31, 16, %s1103, [#allocation19]
        $region68: #{tpu_custom_call.1} parent=11 // pred_fallthru
          _
        // Predicated region
        $region69: #{tpu_custom_call.1} parent=11 // pred_check
          %p1106 = pneg %p468
        $region70: #{tpu_custom_call.1} parent=11 // pred_check_branch
          %1108 = sbr.rel (%p1106) target = $region72
        $region71: #{tpu_custom_call.1} parent=11 // pred_region
          _
        $region72: #{tpu_custom_call.1} parent=11 // pred_fallthru
          _
        // Predicated region
        $region73: #{tpu_custom_call.1} parent=11 // pred_check
          %p1109 = pneg %p489
        $region74: #{tpu_custom_call.1} parent=11 // pred_check_branch
          %1111 = sbr.rel (%p1109) target = $region76
        $region75: #{tpu_custom_call.1} parent=11 // pred_region
          %s1113 = ssub.s32 16, 16
          %1114 = vsyncadd [#allocation19], %s1113
          %s1116 = sshll.u32 [#allocation20], 4
          %s1117 = int_to_ptr.vmem [resolvable:$true] %s1116
          %1119 = dma.hbm_to_vmem [thread:$0]  %s35, 16, %s1117, [#allocation19]
        $region76: #{tpu_custom_call.1} parent=11 // pred_fallthru
          _
        // Predicated region
        $region77: #{tpu_custom_call.1} parent=11 // pred_check
          %p1120 = pneg %p510
        $region78: #{tpu_custom_call.1} parent=11 // pred_check_branch
          %1122 = sbr.rel (%p1120) target = $region80
        $region79: #{tpu_custom_call.1} parent=11 // pred_region
          _
        $region80: #{tpu_custom_call.1} parent=11 // pred_fallthru
          _
        // Predicated region
        $region81: #{tpu_custom_call.1} parent=11 // pred_check
          %p1123 = pneg %p531
        $region82: #{tpu_custom_call.1} parent=11 // pred_check_branch
          %1125 = sbr.rel (%p1123) target = $region84
        $region83: #{tpu_custom_call.1} parent=11 // pred_region
          _
        $region84: #{tpu_custom_call.1} parent=11 // pred_fallthru
          _
        // Predicated region
        $region85: #{tpu_custom_call.1} parent=11 // pred_check
          %p1126 = pneg %p552
        $region86: #{tpu_custom_call.1} parent=11 // pred_check_branch
          %1128 = sbr.rel (%p1126) target = $region88
        $region87: #{tpu_custom_call.1} parent=11 // pred_region
          _
        $region88: #{tpu_custom_call.1} parent=11 // pred_fallthru
          _
        // Predicated region
        $region89: #{tpu_custom_call.1} parent=11 // pred_check
          %p1129 = pneg %p573
        $region90: #{tpu_custom_call.1} parent=11 // pred_check_branch
          %1131 = sbr.rel (%p1129) target = $region92
        $region91: #{tpu_custom_call.1} parent=11 // pred_region
          %s1133 = ssub.s32 16, 16
          %1134 = vsyncadd [#allocation22], %s1133
          %s1136 = sshll.u32 [#allocation21], 4
          %s1137 = int_to_ptr.vmem [resolvable:$true] %s1136
          %1139 = dma.hbm_to_vmem [thread:$0]  %s43, 16, %s1137, [#allocation22]
        $region92: #{tpu_custom_call.1} parent=11 // pred_fallthru
          _
        // Predicated region
        $region93: #{tpu_custom_call.1} parent=11 // pred_check
          %p1140 = pneg %p594
        $region94: #{tpu_custom_call.1} parent=11 // pred_check_branch
          %1142 = sbr.rel (%p1140) target = $region96
        $region95: #{tpu_custom_call.1} parent=11 // pred_region
          _
        $region96: #{tpu_custom_call.1} parent=11 // pred_fallthru
          _
        // Predicated region
        $region97: #{tpu_custom_call.1} parent=11 // pred_check
          %p1143 = pneg %p615
        $region98: #{tpu_custom_call.1} parent=11 // pred_check_branch
          %1145 = sbr.rel (%p1143) target = $region100
        $region99: #{tpu_custom_call.1} parent=11 // pred_region
          %s1147 = ssub.s32 16, 16
          %1148 = vsyncadd [#allocation22], %s1147
          %s1150 = sshll.u32 [#allocation23], 4
          %s1151 = int_to_ptr.vmem [resolvable:$true] %s1150
          %1153 = dma.hbm_to_vmem [thread:$0]  %s47, 16, %s1151, [#allocation22]
        $region100: #{tpu_custom_call.1} parent=11 // pred_fallthru
          _
        // Predicated region
        $region101: #{tpu_custom_call.1} parent=11 // pred_check
          %p1154 = pneg %p636
        $region102: #{tpu_custom_call.1} parent=11 // pred_check_branch
          %1156 = sbr.rel (%p1154) target = $region104
        $region103: #{tpu_custom_call.1} parent=11 // pred_region
          %s1158 = ssub.s32 48, 48
          %1159 = vsyncadd [#allocation25], %s1158
          %s1160 = sshll.u32 [#allocation24], 4
          %s1161 = int_to_ptr.vmem [resolvable:$true] %s1160
          %1166 = dma.hbm_to_vmem [thread:$0]  %s49, 48, %s1161, [#allocation25], 16, 16, 1
        $region104: #{tpu_custom_call.1} parent=11 // pred_fallthru
          _
        // Predicated region
        $region105: #{tpu_custom_call.1} parent=11 // pred_check
          %p1167 = pneg %p657
        $region106: #{tpu_custom_call.1} parent=11 // pred_check_branch
          %1169 = sbr.rel (%p1167) target = $region108
        $region107: #{tpu_custom_call.1} parent=11 // pred_region
          %s1171 = ssub.s32 16, 16
          %1172 = vsyncadd [#allocation25], %s1171
          %s1174 = sshll.u32 [#allocation26], 4
          %s1175 = int_to_ptr.vmem [resolvable:$true] %s1174
          %1177 = dma.hbm_to_vmem [thread:$0]  %s51, 16, %s1175, [#allocation25]
        $region108: #{tpu_custom_call.1} parent=11 // pred_fallthru
          _
        // Predicated region
        $region109: #{tpu_custom_call.1} parent=11 // pred_check
          %p1178 = pneg %p678
        $region110: #{tpu_custom_call.1} parent=11 // pred_check_branch
          %1180 = sbr.rel (%p1178) target = $region112
        $region111: #{tpu_custom_call.1} parent=11 // pred_region
          %s1182 = ssub.s32 16, 16
          %1183 = vsyncadd [#allocation28], %s1182
          %s1185 = sshll.u32 [#allocation27], 4
          %s1186 = int_to_ptr.vmem [resolvable:$true] %s1185
          %1188 = dma.hbm_to_vmem [thread:$0]  %s53, 16, %s1186, [#allocation28]
        $region112: #{tpu_custom_call.1} parent=11 // pred_fallthru
          _
        // Predicated region
        $region113: #{tpu_custom_call.1} parent=11 // pred_check
          %p1189 = pneg %p699
        $region114: #{tpu_custom_call.1} parent=11 // pred_check_branch
          %1191 = sbr.rel (%p1189) target = $region116
        $region115: #{tpu_custom_call.1} parent=11 // pred_region
          _
        $region116: #{tpu_custom_call.1} parent=11 // pred_fallthru
          _
        // Predicated region
        $region117: #{tpu_custom_call.1} parent=11 // pred_check
          %p1192 = pneg %p720
        $region118: #{tpu_custom_call.1} parent=11 // pred_check_branch
          %1194 = sbr.rel (%p1192) target = $region120
        $region119: #{tpu_custom_call.1} parent=11 // pred_region
          _
        $region120: #{tpu_custom_call.1} parent=11 // pred_fallthru
          _
        // Predicated region
        $region121: #{tpu_custom_call.1} parent=11 // pred_check
          %p1195 = pneg %p741
        $region122: #{tpu_custom_call.1} parent=11 // pred_check_branch
          %1197 = sbr.rel (%p1195) target = $region124
        $region123: #{tpu_custom_call.1} parent=11 // pred_region
          _
        $region124: #{tpu_custom_call.1} parent=11 // pred_fallthru
          _
        // Predicated region
        $region125: #{tpu_custom_call.1} parent=11 // pred_check
          %p1198 = pneg %p762
        $region126: #{tpu_custom_call.1} parent=11 // pred_check_branch
          %1200 = sbr.rel (%p1198) target = $region128
        $region127: #{tpu_custom_call.1} parent=11 // pred_region
          _
        $region128: #{tpu_custom_call.1} parent=11 // pred_fallthru
          _
        // Predicated region
        $region129: #{tpu_custom_call.1} parent=11 // pred_check
          %p1201 = pneg %p783
        $region130: #{tpu_custom_call.1} parent=11 // pred_check_branch
          %1203 = sbr.rel (%p1201) target = $region132
        $region131: #{tpu_custom_call.1} parent=11 // pred_region
          _
        $region132: #{tpu_custom_call.1} parent=11 // pred_fallthru
          _
        // Predicated region
        $region133: #{tpu_custom_call.1} parent=11 // pred_check
          %p1204 = pneg %p804
        $region134: #{tpu_custom_call.1} parent=11 // pred_check_branch
          %1206 = sbr.rel (%p1204) target = $region136
        $region135: #{tpu_custom_call.1} parent=11 // pred_region
          _
        $region136: #{tpu_custom_call.1} parent=11 // pred_fallthru
          _
        // Predicated region
        $region137: #{tpu_custom_call.1} parent=11 // pred_check
          %p1207 = pneg %p825
        $region138: #{tpu_custom_call.1} parent=11 // pred_check_branch
          %1209 = sbr.rel (%p1207) target = $region140
        $region139: #{tpu_custom_call.1} parent=11 // pred_region
          _
        $region140: #{tpu_custom_call.1} parent=11 // pred_fallthru
          _
        // Predicated region
        $region141: #{tpu_custom_call.1} parent=11 // pred_check
          %p1210 = pneg %p846
        $region142: #{tpu_custom_call.1} parent=11 // pred_check_branch
          %1212 = sbr.rel (%p1210) target = $region144
        $region143: #{tpu_custom_call.1} parent=11 // pred_region
          _
        $region144: #{tpu_custom_call.1} parent=11 // pred_fallthru
          _
        // Predicated region
        $region145: #{tpu_custom_call.1} parent=11 // pred_check
          %p1213 = pneg %p867
        $region146: #{tpu_custom_call.1} parent=11 // pred_check_branch
          %1215 = sbr.rel (%p1213) target = $region148
        $region147: #{tpu_custom_call.1} parent=11 // pred_region
          _
        $region148: #{tpu_custom_call.1} parent=11 // pred_fallthru
          _
        // Predicated region
        $region149: #{tpu_custom_call.1} parent=11 // pred_check
          %p1216 = pneg %p888
        $region150: #{tpu_custom_call.1} parent=11 // pred_check_branch
          %1218 = sbr.rel (%p1216) target = $region152
        $region151: #{tpu_custom_call.1} parent=11 // pred_region
          _
        $region152: #{tpu_custom_call.1} parent=11 // pred_fallthru
          _
        // Predicated region
        $region153: #{tpu_custom_call.1} parent=11 // pred_check
          %p1219 = pneg %p909
        $region154: #{tpu_custom_call.1} parent=11 // pred_check_branch
          %1221 = sbr.rel (%p1219) target = $region156
        $region155: #{tpu_custom_call.1} parent=11 // pred_region
          _
        $region156: #{tpu_custom_call.1} parent=11 // pred_fallthru
          _
        // Predicated region
        $region157: #{tpu_custom_call.1} parent=11 // pred_check
          %p1222 = pneg %p930
        $region158: #{tpu_custom_call.1} parent=11 // pred_check_branch
          %1224 = sbr.rel (%p1222) target = $region160
        $region159: #{tpu_custom_call.1} parent=11 // pred_region
          _
        $region160: #{tpu_custom_call.1} parent=11 // pred_fallthru
          _
        // Predicated region
        $region161: #{tpu_custom_call.1} parent=11 // pred_check
          %p1225 = pneg %p951
        $region162: #{tpu_custom_call.1} parent=11 // pred_check_branch
          %1227 = sbr.rel (%p1225) target = $region164
        $region163: #{tpu_custom_call.1} parent=11 // pred_region
          _
        $region164: #{tpu_custom_call.1} parent=11 // pred_fallthru
          _
      $region12: #{tpu_custom_call.1} parent=5 // pred_fallthru
        _
      %p1228 = scmp.lt.s32.totalorder %s101, 2
      // Predicated region
      $region165: #{tpu_custom_call.1} parent=5 // pred_check
        %p1229 = pneg %p1228
      $region166: #{tpu_custom_call.1} parent=5 // pred_check_branch
        %1231 = sbr.rel (%p1229) target = $region168
      $region167: #{tpu_custom_call.1} parent=5 // pred_region
        // Predicated region
        $region169: #{tpu_custom_call.1} parent=167 // pred_check
          %p1232 = pneg %p121
        $region170: #{tpu_custom_call.1} parent=167 // pred_check_branch
          %1234 = sbr.rel (%p1232) target = $region172
        $region171: #{tpu_custom_call.1} parent=167 // pred_region
          %p1235 = scmp.lt.s32.totalorder %s101, 1
          %s1236 = scalar_select %p1235, %s101, 1
          %s1237 = smul.addr %s1236, 8
          %s1238 = scalar_lea.vmem %s1, %s1237
        $region172: #{tpu_custom_call.1} parent=167 // pred_fallthru
          _
        // Predicated region
        $region173: #{tpu_custom_call.1} parent=167 // pred_check
          %p1239 = pneg %p147
        $region174: #{tpu_custom_call.1} parent=167 // pred_check_branch
          %1241 = sbr.rel (%p1239) target = $region176
        $region175: #{tpu_custom_call.1} parent=167 // pred_region
          %s1242 = sand.u32 %s137, 1
          %s1243 = scalar_lea.sflag [#allocation4], %s1242
          %s1244 = sand.u32 %s137, 1
          %s1245 = scalar_lea.vmem [#allocation3], %s1244
          %s1247 = ssub.s32 16, 16
          %1248 = vsyncadd %s1243, %s1247
          %s1249 = smul.addr %s101, 16
          %s1250 = scalar_lea.hbm %s3, %s1249
          %s1252 = sshll.u32 %s1245, 4
          %s1253 = int_to_ptr.vmem [resolvable:$true] %s1252
          %1255 = dma.hbm_to_vmem [thread:$0]  %s1250, 16, %s1253, %s1243
        $region176: #{tpu_custom_call.1} parent=167 // pred_fallthru
          _
      $region168: #{tpu_custom_call.1} parent=5 // pred_fallthru
        _
      %p1256 = scmp.le.s32.totalorder 1, %s101
      %p1257 = scmp.lt.s32.totalorder %s101, 3
      %p1258 = pnand %p1256, %p1257
      %p1259 = pneg %p1258
      // Predicated region
      $region177: #{tpu_custom_call.1} parent=5 // pred_check
        _
      $region178: #{tpu_custom_call.1} parent=5 // pred_check_branch
        %1261 = sbr.rel (%p1258) target = $region180
      $region179: #{tpu_custom_call.1} parent=5 // pred_region
        %s1262 = ssub.s32 %s101, 1
        %s1263 = sand.u32 %s140, 1
        %s1264 = scalar_lea.sflag [#allocation4], %s1263
        %s1265 = sand.u32 %s140, 1
        %s1266 = scalar_lea.vmem [#allocation3], %s1265
        // Predicated region
        $region181: #{tpu_custom_call.1} parent=179 // pred_check
          %p1267 = pneg %p153
        $region182: #{tpu_custom_call.1} parent=179 // pred_check_branch
          %1269 = sbr.rel (%p1267) target = $region184
        $region183: #{tpu_custom_call.1} parent=179 // pred_region
          %1270 = dma.done %s1264, 16
        $region184: #{tpu_custom_call.1} parent=179 // pred_fallthru
          _
        // Predicated region
        $region185: #{tpu_custom_call.1} parent=179 // pred_check
          %p1271 = pneg %p174
        $region186: #{tpu_custom_call.1} parent=179 // pred_check_branch
          %1273 = sbr.rel (%p1271) target = $region188
        $region187: #{tpu_custom_call.1} parent=179 // pred_region
          %1274 = dma.done [#allocation7], 16
        $region188: #{tpu_custom_call.1} parent=179 // pred_fallthru
          _
        // Predicated region
        $region189: #{tpu_custom_call.1} parent=179 // pred_check
          %p1275 = pneg %p195
        $region190: #{tpu_custom_call.1} parent=179 // pred_check_branch
          %1277 = sbr.rel (%p1275) target = $region192
        $region191: #{tpu_custom_call.1} parent=179 // pred_region
          %1278 = dma.done [#allocation7], 16
        $region192: #{tpu_custom_call.1} parent=179 // pred_fallthru
          _
        // Predicated region
        $region193: #{tpu_custom_call.1} parent=179 // pred_check
          %p1279 = pneg %p237
        $region194: #{tpu_custom_call.1} parent=179 // pred_check_branch
          %1281 = sbr.rel (%p1279) target = $region196
        $region195: #{tpu_custom_call.1} parent=179 // pred_region
          %1282 = dma.done [#allocation10], 16
        $region196: #{tpu_custom_call.1} parent=179 // pred_fallthru
          _
        // Predicated region
        $region197: #{tpu_custom_call.1} parent=179 // pred_check
          %p1283 = pneg %p279
        $region198: #{tpu_custom_call.1} parent=179 // pred_check_branch
          %1285 = sbr.rel (%p1283) target = $region200
        $region199: #{tpu_custom_call.1} parent=179 // pred_region
          %1286 = dma.done [#allocation10], 16
        $region200: #{tpu_custom_call.1} parent=179 // pred_fallthru
          _
        // Predicated region
        $region201: #{tpu_custom_call.1} parent=179 // pred_check
          %p1287 = pneg %p300
        $region202: #{tpu_custom_call.1} parent=179 // pred_check_branch
          %1289 = sbr.rel (%p1287) target = $region204
        $region203: #{tpu_custom_call.1} parent=179 // pred_region
          %1290 = dma.done [#allocation13], 16
        $region204: #{tpu_custom_call.1} parent=179 // pred_fallthru
          _
        // Predicated region
        $region205: #{tpu_custom_call.1} parent=179 // pred_check
          %p1291 = pneg %p321
        $region206: #{tpu_custom_call.1} parent=179 // pred_check_branch
          %1293 = sbr.rel (%p1291) target = $region208
        $region207: #{tpu_custom_call.1} parent=179 // pred_region
          %1294 = dma.done [#allocation13], 16
        $region208: #{tpu_custom_call.1} parent=179 // pred_fallthru
          _
        // Predicated region
        $region209: #{tpu_custom_call.1} parent=179 // pred_check
          %p1295 = pneg %p363
        $region210: #{tpu_custom_call.1} parent=179 // pred_check_branch
          %1297 = sbr.rel (%p1295) target = $region212
        $region211: #{tpu_custom_call.1} parent=179 // pred_region
          %1298 = dma.done [#allocation16], 16
        $region212: #{tpu_custom_call.1} parent=179 // pred_fallthru
          _
        // Predicated region
        $region213: #{tpu_custom_call.1} parent=179 // pred_check
          %p1299 = pneg %p405
        $region214: #{tpu_custom_call.1} parent=179 // pred_check_branch
          %1301 = sbr.rel (%p1299) target = $region216
        $region215: #{tpu_custom_call.1} parent=179 // pred_region
          %1302 = dma.done [#allocation16], 16
        $region216: #{tpu_custom_call.1} parent=179 // pred_fallthru
          _
        // Predicated region
        $region217: #{tpu_custom_call.1} parent=179 // pred_check
          %p1303 = pneg %p447
        $region218: #{tpu_custom_call.1} parent=179 // pred_check_branch
          %1305 = sbr.rel (%p1303) target = $region220
        $region219: #{tpu_custom_call.1} parent=179 // pred_region
          %1306 = dma.done [#allocation19], 16
        $region220: #{tpu_custom_call.1} parent=179 // pred_fallthru
          _
        // Predicated region
        $region221: #{tpu_custom_call.1} parent=179 // pred_check
          %p1307 = pneg %p489
        $region222: #{tpu_custom_call.1} parent=179 // pred_check_branch
          %1309 = sbr.rel (%p1307) target = $region224
        $region223: #{tpu_custom_call.1} parent=179 // pred_region
          %1310 = dma.done [#allocation19], 16
        $region224: #{tpu_custom_call.1} parent=179 // pred_fallthru
          _
        // Predicated region
        $region225: #{tpu_custom_call.1} parent=179 // pred_check
          %p1311 = pneg %p573
        $region226: #{tpu_custom_call.1} parent=179 // pred_check_branch
          %1313 = sbr.rel (%p1311) target = $region228
        $region227: #{tpu_custom_call.1} parent=179 // pred_region
          %1314 = dma.done [#allocation22], 16
        $region228: #{tpu_custom_call.1} parent=179 // pred_fallthru
          _
        // Predicated region
        $region229: #{tpu_custom_call.1} parent=179 // pred_check
          %p1315 = pneg %p615
        $region230: #{tpu_custom_call.1} parent=179 // pred_check_branch
          %1317 = sbr.rel (%p1315) target = $region232
        $region231: #{tpu_custom_call.1} parent=179 // pred_region
          %1318 = dma.done [#allocation22], 16
        $region232: #{tpu_custom_call.1} parent=179 // pred_fallthru
          _
        // Predicated region
        $region233: #{tpu_custom_call.1} parent=179 // pred_check
          %p1319 = pneg %p636
        $region234: #{tpu_custom_call.1} parent=179 // pred_check_branch
          %1321 = sbr.rel (%p1319) target = $region236
        $region235: #{tpu_custom_call.1} parent=179 // pred_region
          %1322 = dma.done [#allocation25], 48
        $region236: #{tpu_custom_call.1} parent=179 // pred_fallthru
          _
        // Predicated region
        $region237: #{tpu_custom_call.1} parent=179 // pred_check
          %p1323 = pneg %p657
        $region238: #{tpu_custom_call.1} parent=179 // pred_check_branch
          %1325 = sbr.rel (%p1323) target = $region240
        $region239: #{tpu_custom_call.1} parent=179 // pred_region
          %1326 = dma.done [#allocation25], 16
        $region240: #{tpu_custom_call.1} parent=179 // pred_fallthru
          _
        // Predicated region
        $region241: #{tpu_custom_call.1} parent=179 // pred_check
          %p1327 = pneg %p678
        $region242: #{tpu_custom_call.1} parent=179 // pred_check_branch
          %1329 = sbr.rel (%p1327) target = $region244
        $region243: #{tpu_custom_call.1} parent=179 // pred_region
          %1330 = dma.done [#allocation28], 16
        $region244: #{tpu_custom_call.1} parent=179 // pred_fallthru
          _
        %p1331 = scmp.lt.s32.totalorder %s106, 1
        %s1332 = scalar_select %p1331, %s106, 1
        %s1333 = smul.addr %s1332, 8
        %s1334 = scalar_lea.vmem %s1, %s1333
        %p1335 = pneg %p127
        %p1336 = pneg %p124
        %s1337 = sand.u32 %s140, 1
        %s1338 = scalar_lea.sflag [#allocation4], %s1337
        %s1339 = sand.u32 %s140, 1
        %s1340 = scalar_lea.vmem [#allocation3], %s1339
        %p1341 = pneg %p153
        %p1342 = pneg %p150
        %p1343 = pneg %p174
        %p1344 = pneg %p171
        %p1345 = pneg %p195
        %p1346 = pneg %p192
        %p1347 = pneg %p216
        %p1348 = pneg %p213
        %p1349 = pneg %p237
        %p1350 = pneg %p234
        %p1351 = pneg %p258
        %p1352 = pneg %p255
        %p1353 = pneg %p279
        %p1354 = pneg %p276
        %p1355 = pneg %p300
        %p1356 = pneg %p297
        %p1357 = pneg %p321
        %p1358 = pneg %p318
        %p1359 = pneg %p342
        %p1360 = pneg %p339
        %p1361 = pneg %p363
        %p1362 = pneg %p360
        %p1363 = pneg %p384
        %p1364 = pneg %p381
        %p1365 = pneg %p405
        %p1366 = pneg %p402
        %p1367 = pneg %p426
        %p1368 = pneg %p423
        %p1369 = pneg %p447
        %p1370 = pneg %p444
        %p1371 = pneg %p468
        %p1372 = pneg %p465
        %p1373 = pneg %p489
        %p1374 = pneg %p486
        %p1375 = pneg %p510
        %p1376 = pneg %p507
        %p1377 = pneg %p531
        %p1378 = pneg %p528
        %p1379 = pneg %p552
        %p1380 = pneg %p549
        %p1381 = pneg %p573
        %p1382 = pneg %p570
        %p1383 = pneg %p594
        %p1384 = pneg %p591
        %p1385 = pneg %p615
        %p1386 = pneg %p612
        %p1387 = pneg %p636
        %p1388 = pneg %p633
        %p1389 = pneg %p657
        %p1390 = pneg %p654
        %p1391 = pneg %p678
        %p1392 = pneg %p675
        %p1393 = pneg %p699
        %p1394 = pneg %p696
        %p1395 = pneg %p720
        %p1396 = pneg %p717
        %p1397 = pneg %p741
        %p1398 = pneg %p738
        %p1399 = pneg %p762
        %p1400 = pneg %p759
        %p1401 = pneg %p783
        %p1402 = pneg %p780
        %p1403 = pneg %p804
        %p1404 = pneg %p801
        %p1405 = pneg %p825
        %p1406 = pneg %p822
        %p1407 = pneg %p846
        %p1408 = pneg %p843
        %p1409 = pneg %p867
        %p1410 = pneg %p864
        %p1411 = pneg %p888
        %p1412 = pneg %p885
        %p1413 = pneg %p909
        %p1414 = pneg %p906
        %p1415 = pneg %p930
        %p1416 = pneg %p927
        %p1417 = pneg %p951
        %p1418 = pneg %p948
        %p1419 = pneg %p977
        %p1420 = pneg %p974
        %s1421 = sand.u32 %s964, 1
        %s1422 = scalar_lea.sflag [#allocation5], %s1421
        %s1423 = sand.u32 %s964, 1
        %s1424 = smul.addr %s1423, 8
        %s1425 = scalar_lea.vmem [#allocation29], %s1424
        %p1426 = scmp.lt.s32.totalorder %s106, 1
        %s1427 = scalar_select %p1426, %s106, 1
        %s1428 = smul.addr %s1427, 8
        %s1429 = scalar_lea.vmem %s1, %s1428
        %v1431 = vld [vmem:[%s1429] sm:$0xff]
        %v1432 = vld [vmem:[#allocation6] sm:$0x1]
        %v1433 = vld [vmem:[#allocation8] sm:$0x1]
        %vm1434 = vcmask 261120
        %v1435 = vsel %vm1434, %v1431, 0.0
        %1436 = vadd.xlane.f32.xlu0 %v1435
        %v1437 = vpop.xlane.xlu0 %1436
        %v1438 = vrcp.pop 32.0
        %v1439 = vmul.f32 %v1437, %v1438
        %v1440 = vsub.f32 %v1431, %v1439
        %v1441 = vmul.f32 %v1440, %v1440
        %v1442 = vsel %vm1434, %v1441, 0.0
        %1443 = vadd.xlane.f32.xlu0 %v1442
        %v1444 = vpop.xlane.xlu0 %1443
        %v1445 = vmul.f32 %v1444, %v1438
        %v1446 = vadd.f32 %v1445, 1e-12
        %v1447 = vrsqrt.pop %v1446
        %v1448 = vmul.f32 %v1440, %v1447
        %v1450 = vlaneseq
        %v1451 = vshrl.u32 %v1450, 7
        %v1452 = vsub.s32 0, %v1451
        %v1453 = vrot.slane %v1432, %v1452
        %v1455 = vmul.f32 %v1448, %v1453
        %v1457 = vlaneseq
        %v1458 = vshrl.u32 %v1457, 7
        %v1459 = vsub.s32 0, %v1458
        %v1460 = vrot.slane %v1433, %v1459
        %v1462 = vadd.f32 %v1455, %v1460
        %v1463 = vld [vmem:[%s9] sm:$0xf]
        %v1464 = vld [vmem:[%s9 + $0x4] sm:$0xf]
        %v1465 = vld [vmem:[%s9 + $0x8] sm:$0xf]
        %v1466 = vld [vmem:[%s9 + $0xc] sm:$0xf]
        %v1467 = vpack.c.bf16 %v1462, %v1462
        %v1468 = vld [vmem:[#allocation9] sm:$0x1]
        %v1470 = vlaneseq
        %v1471 = vshrl.u32 %v1470, 7
        %v1472 = vsub.s32 0, %v1471
        %v1473 = vrot.slane %v1468, %v1472
        %v1479 = vunpack.c.l.b16 %v1463
        %v1480 = vunpack.c.l.b16 %v1464
        %v1481 = vunpack.c.l.b16 %v1465
        %v1482 = vunpack.c.l.b16 %v1466
        %v1483 = vpack.c.b16 %v1480, %v1479
        %v1484 = vpack.c.b16 %v1482, %v1481
        %v1488 = vsel %vm1434, %v1467, 0
        %1490 = vmatprep.subr.bf16.mxu0 0
        %1491 = vmatpush1.bf16.msra.mxu0 %v1483
        %1492 = vmatprep.subr.bf16.mxu0 0
        %1493 = vmatpush1.bf16.msra.mxu0 %v1484
        %1494 = vmatprep.subr.bf16.mxu0 0
        %1495 = vmatpush1.bf16.msra.mxu0 0
        %1496 = vmatprep.subr.bf16.mxu0 0
        %1497 = vmatpush1.bf16.msra.mxu0 0
        %1498 = vmatprep.subr.bf16.mxu0 0
        %1499 = vmatpush1.bf16.msra.mxu0 0
        %1500 = vmatprep.subr.bf16.mxu0 0
        %1501 = vmatpush1.bf16.msra.mxu0 0
        %1502 = vmatprep.subr.bf16.mxu0 0
        %1503 = vmatpush1.bf16.msra.mxu0 0
        %1504 = vmatprep.subr.bf16.mxu0 0
        %1505 = vmatpush1.bf16.msra.mxu0 0
        %1506 = vmatprep.subr.bf16.mxu0 0
        %1507 = vmatpush1.bf16.msra.mxu0 0
        %1508 = vmatprep.subr.bf16.mxu0 0
        %1509 = vmatpush1.bf16.msra.mxu0 0
        %1510 = vmatprep.subr.bf16.mxu0 0
        %1511 = vmatpush1.bf16.msra.mxu0 0
        %1512 = vmatprep.subr.bf16.mxu0 0
        %1513 = vmatpush1.bf16.msra.mxu0 0
        %1514 = vmatprep.subr.bf16.mxu0 0
        %1515 = vmatpush1.bf16.msra.mxu0 0
        %1516 = vmatprep.subr.bf16.mxu0 0
        %1517 = vmatpush1.bf16.msra.mxu0 0
        %1518 = vmatprep.subr.bf16.mxu0 0
        %1519 = vmatpush1.bf16.msra.mxu0 0
        %1520 = vmatprep.subr.bf16.mxu0 0
        %1521 = vmatpush1.bf16.msra.mxu0 0
        %1522 = vmatprep.mubr.bf16.mxu0 0
        %1523 = vmatmul.mubr.bf16.gmra.mrb[0].mxu0 %v1488
        %v1524 = vpop.f32.mrb[0].mxu0
        %v1525 = vadd.f32 %v1473, %v1524
        %v1526 = vpop.f32.mrb[0].mxu0
        %v1527 = vpop.f32.mrb[0].mxu0
        %v1528 = vpop.f32.mrb[0].mxu0
        %1529 = vdwg.mxu0
        %v1530 = vmax.f32 %v1525, 0.0
        %v1531 = vld [vmem:[%s13] sm:$0xf]
        %v1532 = vld [vmem:[%s13 + $0x4] sm:$0xf]
        %v1533 = vld [vmem:[%s13 + $0x8] sm:$0xf]
        %v1534 = vld [vmem:[%s13 + $0xc] sm:$0xf]
        %v1535 = vld [vmem:[%s13 + $0x10] sm:$0xf]
        %v1536 = vld [vmem:[%s13 + $0x14] sm:$0xf]
        %v1537 = vld [vmem:[%s13 + $0x18] sm:$0xf]
        %v1538 = vld [vmem:[%s13 + $0x1c] sm:$0xf]
        %v1539 = vpack.c.bf16 %v1530, %v1530
        %v1540 = vld [vmem:[#allocation11] sm:$0x1]
        %v1542 = vlaneseq
        %v1543 = vshrl.u32 %v1542, 7
        %v1544 = vsub.s32 0, %v1543
        %v1545 = vrot.slane %v1540, %v1544
        %v1555 = vunpack.c.l.b16 %v1531
        %v1556 = vunpack.c.l.b16 %v1532
        %v1557 = vunpack.c.l.b16 %v1533
        %v1558 = vunpack.c.l.b16 %v1534
        %v1559 = vunpack.c.l.b16 %v1535
        %v1560 = vunpack.c.l.b16 %v1536
        %v1561 = vunpack.c.l.b16 %v1537
        %v1562 = vunpack.c.l.b16 %v1538
        %v1563 = vpack.c.b16 %v1556, %v1555
        %v1564 = vpack.c.b16 %v1558, %v1557
        %v1565 = vpack.c.b16 %v1560, %v1559
        %v1566 = vpack.c.b16 %v1562, %v1561
        %vm1571 = vcmask 523264
        %v1573 = vsel %vm1571, %v1539, 0
        %1575 = vmatprep.subr.bf16.mxu0 0
        %1576 = vmatpush1.bf16.msra.mxu0 %v1563
        %1577 = vmatprep.subr.bf16.mxu0 0
        %1578 = vmatpush1.bf16.msra.mxu0 %v1564
        %1579 = vmatprep.subr.bf16.mxu0 0
        %1580 = vmatpush1.bf16.msra.mxu0 %v1565
        %1581 = vmatprep.subr.bf16.mxu0 0
        %1582 = vmatpush1.bf16.msra.mxu0 %v1566
        %1583 = vmatprep.subr.bf16.mxu0 0
        %1584 = vmatpush1.bf16.msra.mxu0 0
        %1585 = vmatprep.subr.bf16.mxu0 0
        %1586 = vmatpush1.bf16.msra.mxu0 0
        %1587 = vmatprep.subr.bf16.mxu0 0
        %1588 = vmatpush1.bf16.msra.mxu0 0
        %1589 = vmatprep.subr.bf16.mxu0 0
        %1590 = vmatpush1.bf16.msra.mxu0 0
        %1591 = vmatprep.subr.bf16.mxu0 0
        %1592 = vmatpush1.bf16.msra.mxu0 0
        %1593 = vmatprep.subr.bf16.mxu0 0
        %1594 = vmatpush1.bf16.msra.mxu0 0
        %1595 = vmatprep.subr.bf16.mxu0 0
        %1596 = vmatpush1.bf16.msra.mxu0 0
        %1597 = vmatprep.subr.bf16.mxu0 0
        %1598 = vmatpush1.bf16.msra.mxu0 0
        %1599 = vmatprep.subr.bf16.mxu0 0
        %1600 = vmatpush1.bf16.msra.mxu0 0
        %1601 = vmatprep.subr.bf16.mxu0 0
        %1602 = vmatpush1.bf16.msra.mxu0 0
        %1603 = vmatprep.subr.bf16.mxu0 0
        %1604 = vmatpush1.bf16.msra.mxu0 0
        %1605 = vmatprep.subr.bf16.mxu0 0
        %1606 = vmatpush1.bf16.msra.mxu0 0
        %1607 = vmatprep.mubr.bf16.mxu0 0
        %1608 = vmatmul.mubr.bf16.gmra.mrb[0].mxu0 %v1573
        %v1609 = vpop.f32.mrb[0].mxu0
        %v1610 = vadd.f32 %v1545, %v1609
        %v1611 = vpop.f32.mrb[0].mxu0
        %v1612 = vpop.f32.mrb[0].mxu0
        %v1613 = vpop.f32.mrb[0].mxu0
        %1614 = vdwg.mxu0
        %v1615 = vmul.f32 %v1610, 0.5
        %v1616 = vadd.f32 %v1431, %v1615
        %v1617 = vld [vmem:[#allocation12] sm:$0x1]
        %v1618 = vld [vmem:[#allocation14] sm:$0x1]
        %v1619 = vsel %vm1434, %v1616, 0.0
        %1620 = vadd.xlane.f32.xlu0 %v1619
        %v1621 = vpop.xlane.xlu0 %1620
        %v1622 = vmul.f32 %v1621, %v1438
        %v1623 = vsub.f32 %v1616, %v1622
        %v1624 = vmul.f32 %v1623, %v1623
        %v1625 = vsel %vm1434, %v1624, 0.0
        %1626 = vadd.xlane.f32.xlu0 %v1625
        %v1627 = vpop.xlane.xlu0 %1626
        %v1628 = vmul.f32 %v1627, %v1438
        %v1629 = vadd.f32 %v1628, 1e-12
        %v1630 = vrsqrt.pop %v1629
        %v1631 = vmul.f32 %v1623, %v1630
        %v1633 = vlaneseq
        %v1634 = vshrl.u32 %v1633, 7
        %v1635 = vsub.s32 0, %v1634
        %v1636 = vrot.slane %v1617, %v1635
        %v1638 = vmul.f32 %v1631, %v1636
        %v1640 = vlaneseq
        %v1641 = vshrl.u32 %v1640, 7
        %v1642 = vsub.s32 0, %v1641
        %v1643 = vrot.slane %v1618, %v1642
        %v1645 = vadd.f32 %v1638, %v1643
        %v1646 = vpack.c.bf16 %v1645, %v1645
        %v1647 = vld [vmem:[%s21] sm:$0xf]
        %v1648 = vld [vmem:[%s21 + $0x4] sm:$0xf]
        %v1649 = vld [vmem:[%s21 + $0x8] sm:$0xf]
        %v1650 = vld [vmem:[%s21 + $0xc] sm:$0xf]
        %v1651 = vld [vmem:[#allocation15] sm:$0x1]
        %v1653 = vlaneseq
        %v1654 = vshrl.u32 %v1653, 7
        %v1655 = vsub.s32 0, %v1654
        %v1656 = vrot.slane %v1651, %v1655
        %v1662 = vunpack.c.l.b16 %v1647
        %v1663 = vunpack.c.l.b16 %v1648
        %v1664 = vunpack.c.l.b16 %v1649
        %v1665 = vunpack.c.l.b16 %v1650
        %v1666 = vpack.c.b16 %v1663, %v1662
        %v1667 = vpack.c.b16 %v1665, %v1664
        %v1671 = vsel %vm1434, %v1646, 0
        %1673 = vmatprep.subr.bf16.mxu0 0
        %1674 = vmatpush1.bf16.msra.mxu0 %v1666
        %1675 = vmatprep.subr.bf16.mxu0 0
        %1676 = vmatpush1.bf16.msra.mxu0 %v1667
        %1677 = vmatprep.subr.bf16.mxu0 0
        %1678 = vmatpush1.bf16.msra.mxu0 0
        %1679 = vmatprep.subr.bf16.mxu0 0
        %1680 = vmatpush1.bf16.msra.mxu0 0
        %1681 = vmatprep.subr.bf16.mxu0 0
        %1682 = vmatpush1.bf16.msra.mxu0 0
        %1683 = vmatprep.subr.bf16.mxu0 0
        %1684 = vmatpush1.bf16.msra.mxu0 0
        %1685 = vmatprep.subr.bf16.mxu0 0
        %1686 = vmatpush1.bf16.msra.mxu0 0
        %1687 = vmatprep.subr.bf16.mxu0 0
        %1688 = vmatpush1.bf16.msra.mxu0 0
        %1689 = vmatprep.subr.bf16.mxu0 0
        %1690 = vmatpush1.bf16.msra.mxu0 0
        %1691 = vmatprep.subr.bf16.mxu0 0
        %1692 = vmatpush1.bf16.msra.mxu0 0
        %1693 = vmatprep.subr.bf16.mxu0 0
        %1694 = vmatpush1.bf16.msra.mxu0 0
        %1695 = vmatprep.subr.bf16.mxu0 0
        %1696 = vmatpush1.bf16.msra.mxu0 0
        %1697 = vmatprep.subr.bf16.mxu0 0
        %1698 = vmatpush1.bf16.msra.mxu0 0
        %1699 = vmatprep.subr.bf16.mxu0 0
        %1700 = vmatpush1.bf16.msra.mxu0 0
        %1701 = vmatprep.subr.bf16.mxu0 0
        %1702 = vmatpush1.bf16.msra.mxu0 0
        %1703 = vmatprep.subr.bf16.mxu0 0
        %1704 = vmatpush1.bf16.msra.mxu0 0
        %1705 = vmatprep.mubr.bf16.mxu0 0
        %1706 = vmatmul.mubr.bf16.gmra.mrb[0].mxu0 %v1671
        %v1707 = vpop.f32.mrb[0].mxu0
        %v1708 = vadd.f32 %v1656, %v1707
        %v1709 = vpop.f32.mrb[0].mxu0
        %v1710 = vpop.f32.mrb[0].mxu0
        %v1711 = vpop.f32.mrb[0].mxu0
        %1712 = vdwg.mxu0
        %v1713 = vpack.c.bf16 %v1708, %v1708
        %v1714 = vld [vmem:[%s25] sm:$0xf]
        %v1715 = vld [vmem:[%s25 + $0x4] sm:$0xf]
        %v1716 = vld [vmem:[%s25 + $0x8] sm:$0xf]
        %v1717 = vld [vmem:[%s25 + $0xc] sm:$0xf]
        %v1718 = vld [vmem:[#allocation17] sm:$0x1]
        %v1720 = vlaneseq
        %v1721 = vshrl.u32 %v1720, 7
        %v1722 = vsub.s32 0, %v1721
        %v1723 = vrot.slane %v1718, %v1722
        %v1729 = vunpack.c.l.b16 %v1714
        %v1730 = vunpack.c.l.b16 %v1715
        %v1731 = vunpack.c.l.b16 %v1716
        %v1732 = vunpack.c.l.b16 %v1717
        %v1733 = vpack.c.b16 %v1730, %v1729
        %v1734 = vpack.c.b16 %v1732, %v1731
        %1737 = vmatprep.subr.bf16.mxu0 0
        %1738 = vmatpush1.bf16.msra.mxu0 %v1733
        %1739 = vmatprep.subr.bf16.mxu0 0
        %1740 = vmatpush1.bf16.msra.mxu0 %v1734
        %1741 = vmatprep.subr.bf16.mxu0 0
        %1742 = vmatpush1.bf16.msra.mxu0 0
        %1743 = vmatprep.subr.bf16.mxu0 0
        %1744 = vmatpush1.bf16.msra.mxu0 0
        %1745 = vmatprep.subr.bf16.mxu0 0
        %1746 = vmatpush1.bf16.msra.mxu0 0
        %1747 = vmatprep.subr.bf16.mxu0 0
        %1748 = vmatpush1.bf16.msra.mxu0 0
        %1749 = vmatprep.subr.bf16.mxu0 0
        %1750 = vmatpush1.bf16.msra.mxu0 0
        %1751 = vmatprep.subr.bf16.mxu0 0
        %1752 = vmatpush1.bf16.msra.mxu0 0
        %1753 = vmatprep.subr.bf16.mxu0 0
        %1754 = vmatpush1.bf16.msra.mxu0 0
        %1755 = vmatprep.subr.bf16.mxu0 0
        %1756 = vmatpush1.bf16.msra.mxu0 0
        %1757 = vmatprep.subr.bf16.mxu0 0
        %1758 = vmatpush1.bf16.msra.mxu0 0
        %1759 = vmatprep.subr.bf16.mxu0 0
        %1760 = vmatpush1.bf16.msra.mxu0 0
        %1761 = vmatprep.subr.bf16.mxu0 0
        %1762 = vmatpush1.bf16.msra.mxu0 0
        %1763 = vmatprep.subr.bf16.mxu0 0
        %1764 = vmatpush1.bf16.msra.mxu0 0
        %1765 = vmatprep.subr.bf16.mxu0 0
        %1766 = vmatpush1.bf16.msra.mxu0 0
        %1767 = vmatprep.subr.bf16.mxu0 0
        %1768 = vmatpush1.bf16.msra.mxu0 0
        %1769 = vmatprep.mubr.bf16.mxu0 0
        %1770 = vmatmul.mubr.bf16.gmra.mrb[0].mxu0 %v1671
        %v1771 = vpop.f32.mrb[0].mxu0
        %v1772 = vadd.f32 %v1723, %v1771
        %v1773 = vpop.f32.mrb[0].mxu0
        %v1774 = vpop.f32.mrb[0].mxu0
        %v1775 = vpop.f32.mrb[0].mxu0
        %1776 = vdwg.mxu0
        %v1777 = vpack.c.bf16 %v1772, %v1772
        %v1778 = vld [vmem:[%s29] sm:$0xf]
        %v1779 = vld [vmem:[%s29 + $0x4] sm:$0xf]
        %v1780 = vld [vmem:[%s29 + $0x8] sm:$0xf]
        %v1781 = vld [vmem:[%s29 + $0xc] sm:$0xf]
        %v1782 = vld [vmem:[#allocation18] sm:$0x1]
        %v1784 = vlaneseq
        %v1785 = vshrl.u32 %v1784, 7
        %v1786 = vsub.s32 0, %v1785
        %v1787 = vrot.slane %v1782, %v1786
        %v1793 = vunpack.c.l.b16 %v1778
        %v1794 = vunpack.c.l.b16 %v1779
        %v1795 = vunpack.c.l.b16 %v1780
        %v1796 = vunpack.c.l.b16 %v1781
        %v1797 = vpack.c.b16 %v1794, %v1793
        %v1798 = vpack.c.b16 %v1796, %v1795
        %1801 = vmatprep.subr.bf16.mxu0 0
        %1802 = vmatpush1.bf16.msra.mxu0 %v1797
        %1803 = vmatprep.subr.bf16.mxu0 0
        %1804 = vmatpush1.bf16.msra.mxu0 %v1798
        %1805 = vmatprep.subr.bf16.mxu0 0
        %1806 = vmatpush1.bf16.msra.mxu0 0
        %1807 = vmatprep.subr.bf16.mxu0 0
        %1808 = vmatpush1.bf16.msra.mxu0 0
        %1809 = vmatprep.subr.bf16.mxu0 0
        %1810 = vmatpush1.bf16.msra.mxu0 0
        %1811 = vmatprep.subr.bf16.mxu0 0
        %1812 = vmatpush1.bf16.msra.mxu0 0
        %1813 = vmatprep.subr.bf16.mxu0 0
        %1814 = vmatpush1.bf16.msra.mxu0 0
        %1815 = vmatprep.subr.bf16.mxu0 0
        %1816 = vmatpush1.bf16.msra.mxu0 0
        %1817 = vmatprep.subr.bf16.mxu0 0
        %1818 = vmatpush1.bf16.msra.mxu0 0
        %1819 = vmatprep.subr.bf16.mxu0 0
        %1820 = vmatpush1.bf16.msra.mxu0 0
        %1821 = vmatprep.subr.bf16.mxu0 0
        %1822 = vmatpush1.bf16.msra.mxu0 0
        %1823 = vmatprep.subr.bf16.mxu0 0
        %1824 = vmatpush1.bf16.msra.mxu0 0
        %1825 = vmatprep.subr.bf16.mxu0 0
        %1826 = vmatpush1.bf16.msra.mxu0 0
        %1827 = vmatprep.subr.bf16.mxu0 0
        %1828 = vmatpush1.bf16.msra.mxu0 0
        %1829 = vmatprep.subr.bf16.mxu0 0
        %1830 = vmatpush1.bf16.msra.mxu0 0
        %1831 = vmatprep.subr.bf16.mxu0 0
        %1832 = vmatpush1.bf16.msra.mxu0 0
        %1833 = vmatprep.mubr.bf16.mxu0 0
        %1834 = vmatmul.mubr.bf16.gmra.mrb[0].mxu0 %v1671
        %v1835 = vpop.f32.mrb[0].mxu0
        %v1836 = vadd.f32 %v1787, %v1835
        %v1837 = vpop.f32.mrb[0].mxu0
        %v1838 = vpop.f32.mrb[0].mxu0
        %v1839 = vpop.f32.mrb[0].mxu0
        %1840 = vdwg.mxu0
        %v1841 = vpack.c.bf16 %v1836, %v1836
        %v1842 = vld [vmem:[%s1266] sm:$0x1]
        %vm1843 = vcmp.eq.f32.partialorder %v1842, 0.0
        %v1844 = vsel %vm1843, -1e+30, 0.0
        %v1846 = vlaneseq
        %v1847 = vshrl.u32 %v1846, 7
        %v1848 = vsub.s32 0, %v1847
        %v1849 = vrot.slane %v1844, %v1848
        %vm1851 = vcmask 64512
        %v1853 = vsel %vm1851, %v1713, 0
        %v1856 = vsel %vm1851, %v1777, 0
        %1858 = vmatprep.subr.bf16.mxu0 0
        %1859 = vmatpush1.bf16.xpose.msra.mxu0 %v1856
        %1860 = vmatprep.subr.bf16.mxu0 0
        %1861 = vmatpush1.bf16.xpose.msra.mxu0 0
        %1862 = vmatprep.subr.bf16.mxu0 0
        %1863 = vmatpush1.bf16.xpose.msra.mxu0 0
        %1864 = vmatprep.subr.bf16.mxu0 0
        %1865 = vmatpush1.bf16.xpose.msra.mxu0 0
        %1866 = vmatprep.subr.bf16.mxu0 0
        %1867 = vmatpush1.bf16.xpose.msra.mxu0 0
        %1868 = vmatprep.subr.bf16.mxu0 0
        %1869 = vmatpush1.bf16.xpose.msra.mxu0 0
        %1870 = vmatprep.subr.bf16.mxu0 0
        %1871 = vmatpush1.bf16.xpose.msra.mxu0 0
        %1872 = vmatprep.subr.bf16.mxu0 0
        %1873 = vmatpush1.bf16.xpose.msra.mxu0 0
        %1874 = vmatprep.subr.bf16.mxu0 0
        %1875 = vmatpush1.bf16.xpose.msra.mxu0 0
        %1876 = vmatprep.subr.bf16.mxu0 0
        %1877 = vmatpush1.bf16.xpose.msra.mxu0 0
        %1878 = vmatprep.subr.bf16.mxu0 0
        %1879 = vmatpush1.bf16.xpose.msra.mxu0 0
        %1880 = vmatprep.subr.bf16.mxu0 0
        %1881 = vmatpush1.bf16.xpose.msra.mxu0 0
        %1882 = vmatprep.subr.bf16.mxu0 0
        %1883 = vmatpush1.bf16.xpose.msra.mxu0 0
        %1884 = vmatprep.subr.bf16.mxu0 0
        %1885 = vmatpush1.bf16.xpose.msra.mxu0 0
        %1886 = vmatprep.subr.bf16.mxu0 0
        %1887 = vmatpush1.bf16.xpose.msra.mxu0 0
        %1888 = vmatprep.subr.bf16.mxu0 0
        %1889 = vmatpush1.bf16.xpose.msra.mxu0 0
        %1890 = vmatprep.mubr.bf16.mxu0 0
        %1891 = vmatmul.mubr.bf16.gmra.mrb[0].mxu0 %v1853
        %v1892 = vpop.f32.mrb[0].mxu0
        %v1893 = vadd.f32 %v1849, %v1892
        %v1894 = vpop.f32.mrb[0].mxu0
        %v1895 = vpop.f32.mrb[0].mxu0
        %v1896 = vpop.f32.mrb[0].mxu0
        %1897 = vdwg.mxu0
        %v1898 = vsel %vm1851, %v1893, -inf
        %1899 = vmax.xlane.f32.xlu0 %v1898
        %v1900 = vpop.xlane.xlu0 %1899
        %v1901 = vsub.f32 %v1893, %v1900
        %v1902 = vmul.f32 %v1901, 1.442695
        %v1903 = vpow.pop %v1902
        %v1904 = vsel %vm1851, %v1903, 0.0
        %1905 = vadd.xlane.f32.xlu0 %v1904
        %v1906 = vpop.xlane.xlu0 %1905
        %v1907 = vrcp.pop %v1906
        %v1908 = vpack.c.bf16 %v1903, %v1903
        %v1910 = vsel %vm1851, %v1908, 0
        %vm1912 = vcmask 1043456
        %v1914 = vsel %vm1912, %v1841, 0
        %1916 = vmatprep.subr.bf16.mxu0 0
        %1917 = vmatpush1.bf16.msra.mxu0 %v1914
        %1918 = vmatprep.subr.bf16.mxu0 0
        %1919 = vmatpush1.bf16.msra.mxu0 0
        %1920 = vmatprep.subr.bf16.mxu0 0
        %1921 = vmatpush1.bf16.msra.mxu0 0
        %1922 = vmatprep.subr.bf16.mxu0 0
        %1923 = vmatpush1.bf16.msra.mxu0 0
        %1924 = vmatprep.subr.bf16.mxu0 0
        %1925 = vmatpush1.bf16.msra.mxu0 0
        %1926 = vmatprep.subr.bf16.mxu0 0
        %1927 = vmatpush1.bf16.msra.mxu0 0
        %1928 = vmatprep.subr.bf16.mxu0 0
        %1929 = vmatpush1.bf16.msra.mxu0 0
        %1930 = vmatprep.subr.bf16.mxu0 0
        %1931 = vmatpush1.bf16.msra.mxu0 0
        %1932 = vmatprep.subr.bf16.mxu0 0
        %1933 = vmatpush1.bf16.msra.mxu0 0
        %1934 = vmatprep.subr.bf16.mxu0 0
        %1935 = vmatpush1.bf16.msra.mxu0 0
        %1936 = vmatprep.subr.bf16.mxu0 0
        %1937 = vmatpush1.bf16.msra.mxu0 0
        %1938 = vmatprep.subr.bf16.mxu0 0
        %1939 = vmatpush1.bf16.msra.mxu0 0
        %1940 = vmatprep.subr.bf16.mxu0 0
        %1941 = vmatpush1.bf16.msra.mxu0 0
        %1942 = vmatprep.subr.bf16.mxu0 0
        %1943 = vmatpush1.bf16.msra.mxu0 0
        %1944 = vmatprep.subr.bf16.mxu0 0
        %1945 = vmatpush1.bf16.msra.mxu0 0
        %1946 = vmatprep.subr.bf16.mxu0 0
        %1947 = vmatpush1.bf16.msra.mxu0 0
        %1948 = vmatprep.mubr.bf16.mxu0 0
        %1949 = vmatmul.mubr.bf16.gmra.mrb[0].mxu0 %v1910
        %v1950 = vpop.f32.mrb[0].mxu0
        %v1951 = vadd.f32 0.0, %v1950
        %v1952 = vpop.f32.mrb[0].mxu0
        %v1953 = vpop.f32.mrb[0].mxu0
        %v1954 = vpop.f32.mrb[0].mxu0
        %1955 = vdwg.mxu0
        %v1956 = vmul.f32 %v1951, %v1907
        %1958 = vrot.lane.b32.xlu0 %v1713, 120
        %v1959 = vpop.permute.xlu0 %1958
        %1961 = vrot.lane.b32.xlu0 %v1777, 120
        %v1962 = vpop.permute.xlu0 %1961
        %v1964 = vsel %vm1851, %v1959, 0
        %v1967 = vsel %vm1851, %v1962, 0
        %1969 = vmatprep.subr.bf16.mxu0 0
        %1970 = vmatpush1.bf16.xpose.msra.mxu0 %v1967
        %1971 = vmatprep.subr.bf16.mxu0 0
        %1972 = vmatpush1.bf16.xpose.msra.mxu0 0
        %1973 = vmatprep.subr.bf16.mxu0 0
        %1974 = vmatpush1.bf16.xpose.msra.mxu0 0
        %1975 = vmatprep.subr.bf16.mxu0 0
        %1976 = vmatpush1.bf16.xpose.msra.mxu0 0
        %1977 = vmatprep.subr.bf16.mxu0 0
        %1978 = vmatpush1.bf16.xpose.msra.mxu0 0
        %1979 = vmatprep.subr.bf16.mxu0 0
        %1980 = vmatpush1.bf16.xpose.msra.mxu0 0
        %1981 = vmatprep.subr.bf16.mxu0 0
        %1982 = vmatpush1.bf16.xpose.msra.mxu0 0
        %1983 = vmatprep.subr.bf16.mxu0 0
        %1984 = vmatpush1.bf16.xpose.msra.mxu0 0
        %1985 = vmatprep.subr.bf16.mxu0 0
        %1986 = vmatpush1.bf16.xpose.msra.mxu0 0
        %1987 = vmatprep.subr.bf16.mxu0 0
        %1988 = vmatpush1.bf16.xpose.msra.mxu0 0
        %1989 = vmatprep.subr.bf16.mxu0 0
        %1990 = vmatpush1.bf16.xpose.msra.mxu0 0
        %1991 = vmatprep.subr.bf16.mxu0 0
        %1992 = vmatpush1.bf16.xpose.msra.mxu0 0
        %1993 = vmatprep.subr.bf16.mxu0 0
        %1994 = vmatpush1.bf16.xpose.msra.mxu0 0
        %1995 = vmatprep.subr.bf16.mxu0 0
        %1996 = vmatpush1.bf16.xpose.msra.mxu0 0
        %1997 = vmatprep.subr.bf16.mxu0 0
        %1998 = vmatpush1.bf16.xpose.msra.mxu0 0
        %1999 = vmatprep.subr.bf16.mxu0 0
        %2000 = vmatpush1.bf16.xpose.msra.mxu0 0
        %2001 = vmatprep.mubr.bf16.mxu0 0
        %2002 = vmatmul.mubr.bf16.gmra.mrb[0].mxu0 %v1964
        %v2003 = vpop.f32.mrb[0].mxu0
        %v2004 = vadd.f32 %v1849, %v2003
        %v2005 = vpop.f32.mrb[0].mxu0
        %v2006 = vpop.f32.mrb[0].mxu0
        %v2007 = vpop.f32.mrb[0].mxu0
        %2008 = vdwg.mxu0
        %v2009 = vsel %vm1851, %v2004, -inf
        %2010 = vmax.xlane.f32.xlu0 %v2009
        %v2011 = vpop.xlane.xlu0 %2010
        %v2012 = vsub.f32 %v2004, %v2011
        %v2013 = vmul.f32 %v2012, 1.442695
        %v2014 = vpow.pop %v2013
        %v2015 = vsel %vm1851, %v2014, 0.0
        %2016 = vadd.xlane.f32.xlu0 %v2015
        %v2017 = vpop.xlane.xlu0 %2016
        %v2018 = vrcp.pop %v2017
        %v2019 = vpack.c.bf16 %v2014, %v2014
        %2021 = vrot.lane.b32.xlu0 %v1841, 120
        %v2022 = vpop.permute.xlu0 %2021
        %v2024 = vsel %vm1851, %v2019, 0
        %v2027 = vsel %vm1912, %v2022, 0
        %2029 = vmatprep.subr.bf16.mxu0 0
        %2030 = vmatpush1.bf16.msra.mxu0 %v2027
        %2031 = vmatprep.subr.bf16.mxu0 0
        %2032 = vmatpush1.bf16.msra.mxu0 0
        %2033 = vmatprep.subr.bf16.mxu0 0
        %2034 = vmatpush1.bf16.msra.mxu0 0
        %2035 = vmatprep.subr.bf16.mxu0 0
        %2036 = vmatpush1.bf16.msra.mxu0 0
        %2037 = vmatprep.subr.bf16.mxu0 0
        %2038 = vmatpush1.bf16.msra.mxu0 0
        %2039 = vmatprep.subr.bf16.mxu0 0
        %2040 = vmatpush1.bf16.msra.mxu0 0
        %2041 = vmatprep.subr.bf16.mxu0 0
        %2042 = vmatpush1.bf16.msra.mxu0 0
        %2043 = vmatprep.subr.bf16.mxu0 0
        %2044 = vmatpush1.bf16.msra.mxu0 0
        %2045 = vmatprep.subr.bf16.mxu0 0
        %2046 = vmatpush1.bf16.msra.mxu0 0
        %2047 = vmatprep.subr.bf16.mxu0 0
        %2048 = vmatpush1.bf16.msra.mxu0 0
        %2049 = vmatprep.subr.bf16.mxu0 0
        %2050 = vmatpush1.bf16.msra.mxu0 0
        %2051 = vmatprep.subr.bf16.mxu0 0
        %2052 = vmatpush1.bf16.msra.mxu0 0
        %2053 = vmatprep.subr.bf16.mxu0 0
        %2054 = vmatpush1.bf16.msra.mxu0 0
        %2055 = vmatprep.subr.bf16.mxu0 0
        %2056 = vmatpush1.bf16.msra.mxu0 0
        %2057 = vmatprep.subr.bf16.mxu0 0
        %2058 = vmatpush1.bf16.msra.mxu0 0
        %2059 = vmatprep.subr.bf16.mxu0 0
        %2060 = vmatpush1.bf16.msra.mxu0 0
        %2061 = vmatprep.mubr.bf16.mxu0 0
        %2062 = vmatmul.mubr.bf16.gmra.mrb[0].mxu0 %v2024
        %v2063 = vpop.f32.mrb[0].mxu0
        %v2064 = vadd.f32 0.0, %v2063
        %v2065 = vpop.f32.mrb[0].mxu0
        %v2066 = vpop.f32.mrb[0].mxu0
        %v2067 = vpop.f32.mrb[0].mxu0
        %2068 = vdwg.mxu0
        %v2069 = vmul.f32 %v2064, %v2018
        %2070 = vrot.lane.b32.xlu0 %v1713, 112
        %v2071 = vpop.permute.xlu0 %2070
        %2072 = vrot.lane.b32.xlu0 %v1777, 112
        %v2073 = vpop.permute.xlu0 %2072
        %v2075 = vsel %vm1851, %v2071, 0
        %v2078 = vsel %vm1851, %v2073, 0
        %2080 = vmatprep.subr.bf16.mxu0 0
        %2081 = vmatpush1.bf16.xpose.msra.mxu0 %v2078
        %2082 = vmatprep.subr.bf16.mxu0 0
        %2083 = vmatpush1.bf16.xpose.msra.mxu0 0
        %2084 = vmatprep.subr.bf16.mxu0 0
        %2085 = vmatpush1.bf16.xpose.msra.mxu0 0
        %2086 = vmatprep.subr.bf16.mxu0 0
        %2087 = vmatpush1.bf16.xpose.msra.mxu0 0
        %2088 = vmatprep.subr.bf16.mxu0 0
        %2089 = vmatpush1.bf16.xpose.msra.mxu0 0
        %2090 = vmatprep.subr.bf16.mxu0 0
        %2091 = vmatpush1.bf16.xpose.msra.mxu0 0
        %2092 = vmatprep.subr.bf16.mxu0 0
        %2093 = vmatpush1.bf16.xpose.msra.mxu0 0
        %2094 = vmatprep.subr.bf16.mxu0 0
        %2095 = vmatpush1.bf16.xpose.msra.mxu0 0
        %2096 = vmatprep.subr.bf16.mxu0 0
        %2097 = vmatpush1.bf16.xpose.msra.mxu0 0
        %2098 = vmatprep.subr.bf16.mxu0 0
        %2099 = vmatpush1.bf16.xpose.msra.mxu0 0
        %2100 = vmatprep.subr.bf16.mxu0 0
        %2101 = vmatpush1.bf16.xpose.msra.mxu0 0
        %2102 = vmatprep.subr.bf16.mxu0 0
        %2103 = vmatpush1.bf16.xpose.msra.mxu0 0
        %2104 = vmatprep.subr.bf16.mxu0 0
        %2105 = vmatpush1.bf16.xpose.msra.mxu0 0
        %2106 = vmatprep.subr.bf16.mxu0 0
        %2107 = vmatpush1.bf16.xpose.msra.mxu0 0
        %2108 = vmatprep.subr.bf16.mxu0 0
        %2109 = vmatpush1.bf16.xpose.msra.mxu0 0
        %2110 = vmatprep.subr.bf16.mxu0 0
        %2111 = vmatpush1.bf16.xpose.msra.mxu0 0
        %2112 = vmatprep.mubr.bf16.mxu0 0
        %2113 = vmatmul.mubr.bf16.gmra.mrb[0].mxu0 %v2075
        %v2114 = vpop.f32.mrb[0].mxu0
        %v2115 = vadd.f32 %v1849, %v2114
        %v2116 = vpop.f32.mrb[0].mxu0
        %v2117 = vpop.f32.mrb[0].mxu0
        %v2118 = vpop.f32.mrb[0].mxu0
        %2119 = vdwg.mxu0
        %v2120 = vsel %vm1851, %v2115, -inf
        %2121 = vmax.xlane.f32.xlu0 %v2120
        %v2122 = vpop.xlane.xlu0 %2121
        %v2123 = vsub.f32 %v2115, %v2122
        %v2124 = vmul.f32 %v2123, 1.442695
        %v2125 = vpow.pop %v2124
        %v2126 = vsel %vm1851, %v2125, 0.0
        %2127 = vadd.xlane.f32.xlu0 %v2126
        %v2128 = vpop.xlane.xlu0 %2127
        %v2129 = vrcp.pop %v2128
        %v2130 = vpack.c.bf16 %v2125, %v2125
        %2131 = vrot.lane.b32.xlu0 %v1841, 112
        %v2132 = vpop.permute.xlu0 %2131
        %v2134 = vsel %vm1851, %v2130, 0
        %v2137 = vsel %vm1912, %v2132, 0
        %2139 = vmatprep.subr.bf16.mxu0 0
        %2140 = vmatpush1.bf16.msra.mxu0 %v2137
        %2141 = vmatprep.subr.bf16.mxu0 0
        %2142 = vmatpush1.bf16.msra.mxu0 0
        %2143 = vmatprep.subr.bf16.mxu0 0
        %2144 = vmatpush1.bf16.msra.mxu0 0
        %2145 = vmatprep.subr.bf16.mxu0 0
        %2146 = vmatpush1.bf16.msra.mxu0 0
        %2147 = vmatprep.subr.bf16.mxu0 0
        %2148 = vmatpush1.bf16.msra.mxu0 0
        %2149 = vmatprep.subr.bf16.mxu0 0
        %2150 = vmatpush1.bf16.msra.mxu0 0
        %2151 = vmatprep.subr.bf16.mxu0 0
        %2152 = vmatpush1.bf16.msra.mxu0 0
        %2153 = vmatprep.subr.bf16.mxu0 0
        %2154 = vmatpush1.bf16.msra.mxu0 0
        %2155 = vmatprep.subr.bf16.mxu0 0
        %2156 = vmatpush1.bf16.msra.mxu0 0
        %2157 = vmatprep.subr.bf16.mxu0 0
        %2158 = vmatpush1.bf16.msra.mxu0 0
        %2159 = vmatprep.subr.bf16.mxu0 0
        %2160 = vmatpush1.bf16.msra.mxu0 0
        %2161 = vmatprep.subr.bf16.mxu0 0
        %2162 = vmatpush1.bf16.msra.mxu0 0
        %2163 = vmatprep.subr.bf16.mxu0 0
        %2164 = vmatpush1.bf16.msra.mxu0 0
        %2165 = vmatprep.subr.bf16.mxu0 0
        %2166 = vmatpush1.bf16.msra.mxu0 0
        %2167 = vmatprep.subr.bf16.mxu0 0
        %2168 = vmatpush1.bf16.msra.mxu0 0
        %2169 = vmatprep.subr.bf16.mxu0 0
        %2170 = vmatpush1.bf16.msra.mxu0 0
        %2171 = vmatprep.mubr.bf16.mxu0 0
        %2172 = vmatmul.mubr.bf16.gmra.mrb[0].mxu0 %v2134
        %v2173 = vpop.f32.mrb[0].mxu0
        %v2174 = vadd.f32 0.0, %v2173
        %v2175 = vpop.f32.mrb[0].mxu0
        %v2176 = vpop.f32.mrb[0].mxu0
        %v2177 = vpop.f32.mrb[0].mxu0
        %2178 = vdwg.mxu0
        %v2179 = vmul.f32 %v2174, %v2129
        %2180 = vrot.lane.b32.xlu0 %v1713, 104
        %v2181 = vpop.permute.xlu0 %2180
        %2182 = vrot.lane.b32.xlu0 %v1777, 104
        %v2183 = vpop.permute.xlu0 %2182
        %v2185 = vsel %vm1851, %v2181, 0
        %v2188 = vsel %vm1851, %v2183, 0
        %2190 = vmatprep.subr.bf16.mxu0 0
        %2191 = vmatpush1.bf16.xpose.msra.mxu0 %v2188
        %2192 = vmatprep.subr.bf16.mxu0 0
        %2193 = vmatpush1.bf16.xpose.msra.mxu0 0
        %2194 = vmatprep.subr.bf16.mxu0 0
        %2195 = vmatpush1.bf16.xpose.msra.mxu0 0
        %2196 = vmatprep.subr.bf16.mxu0 0
        %2197 = vmatpush1.bf16.xpose.msra.mxu0 0
        %2198 = vmatprep.subr.bf16.mxu0 0
        %2199 = vmatpush1.bf16.xpose.msra.mxu0 0
        %2200 = vmatprep.subr.bf16.mxu0 0
        %2201 = vmatpush1.bf16.xpose.msra.mxu0 0
        %2202 = vmatprep.subr.bf16.mxu0 0
        %2203 = vmatpush1.bf16.xpose.msra.mxu0 0
        %2204 = vmatprep.subr.bf16.mxu0 0
        %2205 = vmatpush1.bf16.xpose.msra.mxu0 0
        %2206 = vmatprep.subr.bf16.mxu0 0
        %2207 = vmatpush1.bf16.xpose.msra.mxu0 0
        %2208 = vmatprep.subr.bf16.mxu0 0
        %2209 = vmatpush1.bf16.xpose.msra.mxu0 0
        %2210 = vmatprep.subr.bf16.mxu0 0
        %2211 = vmatpush1.bf16.xpose.msra.mxu0 0
        %2212 = vmatprep.subr.bf16.mxu0 0
        %2213 = vmatpush1.bf16.xpose.msra.mxu0 0
        %2214 = vmatprep.subr.bf16.mxu0 0
        %2215 = vmatpush1.bf16.xpose.msra.mxu0 0
        %2216 = vmatprep.subr.bf16.mxu0 0
        %2217 = vmatpush1.bf16.xpose.msra.mxu0 0
        %2218 = vmatprep.subr.bf16.mxu0 0
        %2219 = vmatpush1.bf16.xpose.msra.mxu0 0
        %2220 = vmatprep.subr.bf16.mxu0 0
        %2221 = vmatpush1.bf16.xpose.msra.mxu0 0
        %2222 = vmatprep.mubr.bf16.mxu0 0
        %2223 = vmatmul.mubr.bf16.gmra.mrb[0].mxu0 %v2185
        %v2224 = vpop.f32.mrb[0].mxu0
        %v2225 = vadd.f32 %v1849, %v2224
        %v2226 = vpop.f32.mrb[0].mxu0
        %v2227 = vpop.f32.mrb[0].mxu0
        %v2228 = vpop.f32.mrb[0].mxu0
        %2229 = vdwg.mxu0
        %v2230 = vsel %vm1851, %v2225, -inf
        %2231 = vmax.xlane.f32.xlu0 %v2230
        %v2232 = vpop.xlane.xlu0 %2231
        %v2233 = vsub.f32 %v2225, %v2232
        %v2234 = vmul.f32 %v2233, 1.442695
        %v2235 = vpow.pop %v2234
        %v2236 = vsel %vm1851, %v2235, 0.0
        %2237 = vadd.xlane.f32.xlu0 %v2236
        %v2238 = vpop.xlane.xlu0 %2237
        %v2239 = vrcp.pop %v2238
        %v2240 = vpack.c.bf16 %v2235, %v2235
        %2241 = vrot.lane.b32.xlu0 %v1841, 104
        %v2242 = vpop.permute.xlu0 %2241
        %v2244 = vsel %vm1851, %v2240, 0
        %v2247 = vsel %vm1912, %v2242, 0
        %2249 = vmatprep.subr.bf16.mxu0 0
        %2250 = vmatpush1.bf16.msra.mxu0 %v2247
        %2251 = vmatprep.subr.bf16.mxu0 0
        %2252 = vmatpush1.bf16.msra.mxu0 0
        %2253 = vmatprep.subr.bf16.mxu0 0
        %2254 = vmatpush1.bf16.msra.mxu0 0
        %2255 = vmatprep.subr.bf16.mxu0 0
        %2256 = vmatpush1.bf16.msra.mxu0 0
        %2257 = vmatprep.subr.bf16.mxu0 0
        %2258 = vmatpush1.bf16.msra.mxu0 0
        %2259 = vmatprep.subr.bf16.mxu0 0
        %2260 = vmatpush1.bf16.msra.mxu0 0
        %2261 = vmatprep.subr.bf16.mxu0 0
        %2262 = vmatpush1.bf16.msra.mxu0 0
        %2263 = vmatprep.subr.bf16.mxu0 0
        %2264 = vmatpush1.bf16.msra.mxu0 0
        %2265 = vmatprep.subr.bf16.mxu0 0
        %2266 = vmatpush1.bf16.msra.mxu0 0
        %2267 = vmatprep.subr.bf16.mxu0 0
        %2268 = vmatpush1.bf16.msra.mxu0 0
        %2269 = vmatprep.subr.bf16.mxu0 0
        %2270 = vmatpush1.bf16.msra.mxu0 0
        %2271 = vmatprep.subr.bf16.mxu0 0
        %2272 = vmatpush1.bf16.msra.mxu0 0
        %2273 = vmatprep.subr.bf16.mxu0 0
        %2274 = vmatpush1.bf16.msra.mxu0 0
        %2275 = vmatprep.subr.bf16.mxu0 0
        %2276 = vmatpush1.bf16.msra.mxu0 0
        %2277 = vmatprep.subr.bf16.mxu0 0
        %2278 = vmatpush1.bf16.msra.mxu0 0
        %2279 = vmatprep.subr.bf16.mxu0 0
        %2280 = vmatpush1.bf16.msra.mxu0 0
        %2281 = vmatprep.mubr.bf16.mxu0 0
        %2282 = vmatmul.mubr.bf16.gmra.mrb[0].mxu0 %v2244
        %v2283 = vpop.f32.mrb[0].mxu0
        %v2284 = vadd.f32 0.0, %v2283
        %v2285 = vpop.f32.mrb[0].mxu0
        %v2286 = vpop.f32.mrb[0].mxu0
        %v2287 = vpop.f32.mrb[0].mxu0
        %2288 = vdwg.mxu0
        %v2289 = vmul.f32 %v2284, %v2239
        %2291 = vrot.lane.b32.xlu0 %v2069, 8
        %v2292 = vpop.permute.xlu0 %2291
        %2295 = vrot.lane.b32.xlu0 %v2179, 16
        %v2296 = vpop.permute.xlu0 %2295
        %2299 = vrot.lane.b32.xlu0 %v2289, 24
        %v2300 = vpop.permute.xlu0 %2299
        %v2302 = vsel %vm1851, %v1956, %v2292
        %vm2303 = vcmask 130048
        %v2304 = vsel %vm2303, %v2302, %v2296
        %vm2305 = vcmask 195584
        %v2306 = vsel %vm2305, %v2304, %v2300
        %vm2307 = vcmask 57344
        %v2308 = vsel %vm2307, %v1842, -inf
        %2309 = vmax.xlane.f32.xlu0 %v2308
        %v2310 = vpop.xlane.xlu0 %2309
        %vm2311 = vcmp.gt.f32.partialorder %v2310, 0.0
        %v2312 = vsel %vm2311, 1, 0
        %v2313 = vcvt.s32.f32 %v2312
        %v2314 = vlaneseq
        %v2315 = vshrl.u32 %v2314, 7
        %v2316 = vsub.s32 0, %v2315
        %v2317 = vrot.slane %v2313, %v2316
        %v2318 = vmul.f32 %v2306, %v2317
        %v2319 = vld [vmem:[%s33] sm:$0xf]
        %v2320 = vld [vmem:[%s33 + $0x4] sm:$0xf]
        %v2321 = vld [vmem:[%s33 + $0x8] sm:$0xf]
        %v2322 = vld [vmem:[%s33 + $0xc] sm:$0xf]
        %v2323 = vpack.c.bf16 %v2318, %v2318
        %v2328 = vunpack.c.l.b16 %v2319
        %v2329 = vunpack.c.l.b16 %v2320
        %v2330 = vunpack.c.l.b16 %v2321
        %v2331 = vunpack.c.l.b16 %v2322
        %v2332 = vpack.c.b16 %v2329, %v2328
        %v2333 = vpack.c.b16 %v2331, %v2330
        %v2337 = vsel %vm1434, %v2323, 0
        %2339 = vmatprep.subr.bf16.mxu0 0
        %2340 = vmatpush1.bf16.msra.mxu0 %v2332
        %2341 = vmatprep.subr.bf16.mxu0 0
        %2342 = vmatpush1.bf16.msra.mxu0 %v2333
        %2343 = vmatprep.subr.bf16.mxu0 0
        %2344 = vmatpush1.bf16.msra.mxu0 0
        %2345 = vmatprep.subr.bf16.mxu0 0
        %2346 = vmatpush1.bf16.msra.mxu0 0
        %2347 = vmatprep.subr.bf16.mxu0 0
        %2348 = vmatpush1.bf16.msra.mxu0 0
        %2349 = vmatprep.subr.bf16.mxu0 0
        %2350 = vmatpush1.bf16.msra.mxu0 0
        %2351 = vmatprep.subr.bf16.mxu0 0
        %2352 = vmatpush1.bf16.msra.mxu0 0
        %2353 = vmatprep.subr.bf16.mxu0 0
        %2354 = vmatpush1.bf16.msra.mxu0 0
        %2355 = vmatprep.subr.bf16.mxu0 0
        %2356 = vmatpush1.bf16.msra.mxu0 0
        %2357 = vmatprep.subr.bf16.mxu0 0
        %2358 = vmatpush1.bf16.msra.mxu0 0
        %2359 = vmatprep.subr.bf16.mxu0 0
        %2360 = vmatpush1.bf16.msra.mxu0 0
        %2361 = vmatprep.subr.bf16.mxu0 0
        %2362 = vmatpush1.bf16.msra.mxu0 0
        %2363 = vmatprep.subr.bf16.mxu0 0
        %2364 = vmatpush1.bf16.msra.mxu0 0
        %2365 = vmatprep.subr.bf16.mxu0 0
        %2366 = vmatpush1.bf16.msra.mxu0 0
        %2367 = vmatprep.subr.bf16.mxu0 0
        %2368 = vmatpush1.bf16.msra.mxu0 0
        %2369 = vmatprep.subr.bf16.mxu0 0
        %2370 = vmatpush1.bf16.msra.mxu0 0
        %2371 = vmatprep.mubr.bf16.mxu0 0
        %2372 = vmatmul.mubr.bf16.gmra.mrb[0].mxu0 %v2337
        %v2373 = vpop.f32.mrb[0].mxu0
        %v2374 = vadd.f32 0.0, %v2373
        %v2375 = vpop.f32.mrb[0].mxu0
        %v2376 = vpop.f32.mrb[0].mxu0
        %v2377 = vpop.f32.mrb[0].mxu0
        %2378 = vdwg.mxu0
        %v2379 = vadd.f32 %v1616, %v2374
        %v2380 = vld [vmem:[#allocation20] sm:$0x1]
        %v2382 = vlaneseq
        %v2383 = vshrl.u32 %v2382, 7
        %v2384 = vsub.s32 0, %v2383
        %v2385 = vrot.slane %v2380, %v2384
        %v2387 = vadd.f32 %v2379, %v2385
        %v2388 = vld [vmem:[%s37] sm:$0x1]
        %v2389 = vld [vmem:[%s39] sm:$0x1]
        %v2390 = vsel %vm1434, %v2387, 0.0
        %2391 = vadd.xlane.f32.xlu0 %v2390
        %v2392 = vpop.xlane.xlu0 %2391
        %v2393 = vmul.f32 %v2392, %v1438
        %v2394 = vsub.f32 %v2387, %v2393
        %v2395 = vmul.f32 %v2394, %v2394
        %v2396 = vsel %vm1434, %v2395, 0.0
        %2397 = vadd.xlane.f32.xlu0 %v2396
        %v2398 = vpop.xlane.xlu0 %2397
        %v2399 = vmul.f32 %v2398, %v1438
        %v2400 = vadd.f32 %v2399, 1e-12
        %v2401 = vrsqrt.pop %v2400
        %v2402 = vmul.f32 %v2394, %v2401
        %v2404 = vlaneseq
        %v2405 = vshrl.u32 %v2404, 7
        %v2406 = vsub.s32 0, %v2405
        %v2407 = vrot.slane %v2388, %v2406
        %v2409 = vmul.f32 %v2402, %v2407
        %v2411 = vlaneseq
        %v2412 = vshrl.u32 %v2411, 7
        %v2413 = vsub.s32 0, %v2412
        %v2414 = vrot.slane %v2389, %v2413
        %v2416 = vadd.f32 %v2409, %v2414
        %v2417 = vpack.c.bf16 %v2416, %v2416
        %v2418 = vld [vmem:[%s41] sm:$0xf]
        %v2419 = vld [vmem:[%s41 + $0x4] sm:$0xf]
        %v2420 = vld [vmem:[%s41 + $0x8] sm:$0xf]
        %v2421 = vld [vmem:[%s41 + $0xc] sm:$0xf]
        %v2422 = vld [vmem:[#allocation21] sm:$0x1]
        %v2424 = vlaneseq
        %v2425 = vshrl.u32 %v2424, 7
        %v2426 = vsub.s32 0, %v2425
        %v2427 = vrot.slane %v2422, %v2426
        %v2433 = vunpack.c.l.b16 %v2418
        %v2434 = vunpack.c.l.b16 %v2419
        %v2435 = vunpack.c.l.b16 %v2420
        %v2436 = vunpack.c.l.b16 %v2421
        %v2437 = vpack.c.b16 %v2434, %v2433
        %v2438 = vpack.c.b16 %v2436, %v2435
        %v2442 = vsel %vm1434, %v2417, 0
        %2444 = vmatprep.subr.bf16.mxu0 0
        %2445 = vmatpush1.bf16.msra.mxu0 %v2437
        %2446 = vmatprep.subr.bf16.mxu0 0
        %2447 = vmatpush1.bf16.msra.mxu0 %v2438
        %2448 = vmatprep.subr.bf16.mxu0 0
        %2449 = vmatpush1.bf16.msra.mxu0 0
        %2450 = vmatprep.subr.bf16.mxu0 0
        %2451 = vmatpush1.bf16.msra.mxu0 0
        %2452 = vmatprep.subr.bf16.mxu0 0
        %2453 = vmatpush1.bf16.msra.mxu0 0
        %2454 = vmatprep.subr.bf16.mxu0 0
        %2455 = vmatpush1.bf16.msra.mxu0 0
        %2456 = vmatprep.subr.bf16.mxu0 0
        %2457 = vmatpush1.bf16.msra.mxu0 0
        %2458 = vmatprep.subr.bf16.mxu0 0
        %2459 = vmatpush1.bf16.msra.mxu0 0
        %2460 = vmatprep.subr.bf16.mxu0 0
        %2461 = vmatpush1.bf16.msra.mxu0 0
        %2462 = vmatprep.subr.bf16.mxu0 0
        %2463 = vmatpush1.bf16.msra.mxu0 0
        %2464 = vmatprep.subr.bf16.mxu0 0
        %2465 = vmatpush1.bf16.msra.mxu0 0
        %2466 = vmatprep.subr.bf16.mxu0 0
        %2467 = vmatpush1.bf16.msra.mxu0 0
        %2468 = vmatprep.subr.bf16.mxu0 0
        %2469 = vmatpush1.bf16.msra.mxu0 0
        %2470 = vmatprep.subr.bf16.mxu0 0
        %2471 = vmatpush1.bf16.msra.mxu0 0
        %2472 = vmatprep.subr.bf16.mxu0 0
        %2473 = vmatpush1.bf16.msra.mxu0 0
        %2474 = vmatprep.subr.bf16.mxu0 0
        %2475 = vmatpush1.bf16.msra.mxu0 0
        %2476 = vmatprep.mubr.bf16.mxu0 0
        %2477 = vmatmul.mubr.bf16.gmra.mrb[0].mxu0 %v2442
        %v2478 = vpop.f32.mrb[0].mxu0
        %v2479 = vadd.f32 %v2427, %v2478
        %v2480 = vpop.f32.mrb[0].mxu0
        %v2481 = vpop.f32.mrb[0].mxu0
        %v2482 = vpop.f32.mrb[0].mxu0
        %2483 = vdwg.mxu0
        %v2484 = vld [vmem:[%s45] sm:$0xf]
        %v2485 = vld [vmem:[%s45 + $0x4] sm:$0xf]
        %v2486 = vld [vmem:[%s45 + $0x8] sm:$0xf]
        %v2487 = vld [vmem:[%s45 + $0xc] sm:$0xf]
        %v2488 = vld [vmem:[#allocation23] sm:$0x1]
        %v2490 = vlaneseq
        %v2491 = vshrl.u32 %v2490, 7
        %v2492 = vsub.s32 0, %v2491
        %v2493 = vrot.slane %v2488, %v2492
        %v2499 = vunpack.c.l.b16 %v2484
        %v2500 = vunpack.c.l.b16 %v2485
        %v2501 = vunpack.c.l.b16 %v2486
        %v2502 = vunpack.c.l.b16 %v2487
        %v2503 = vpack.c.b16 %v2500, %v2499
        %v2504 = vpack.c.b16 %v2502, %v2501
        %2507 = vmatprep.subr.bf16.mxu0 0
        %2508 = vmatpush1.bf16.msra.mxu0 %v2503
        %2509 = vmatprep.subr.bf16.mxu0 0
        %2510 = vmatpush1.bf16.msra.mxu0 %v2504
        %2511 = vmatprep.subr.bf16.mxu0 0
        %2512 = vmatpush1.bf16.msra.mxu0 0
        %2513 = vmatprep.subr.bf16.mxu0 0
        %2514 = vmatpush1.bf16.msra.mxu0 0
        %2515 = vmatprep.subr.bf16.mxu0 0
        %2516 = vmatpush1.bf16.msra.mxu0 0
        %2517 = vmatprep.subr.bf16.mxu0 0
        %2518 = vmatpush1.bf16.msra.mxu0 0
        %2519 = vmatprep.subr.bf16.mxu0 0
        %2520 = vmatpush1.bf16.msra.mxu0 0
        %2521 = vmatprep.subr.bf16.mxu0 0
        %2522 = vmatpush1.bf16.msra.mxu0 0
        %2523 = vmatprep.subr.bf16.mxu0 0
        %2524 = vmatpush1.bf16.msra.mxu0 0
        %2525 = vmatprep.subr.bf16.mxu0 0
        %2526 = vmatpush1.bf16.msra.mxu0 0
        %2527 = vmatprep.subr.bf16.mxu0 0
        %2528 = vmatpush1.bf16.msra.mxu0 0
        %2529 = vmatprep.subr.bf16.mxu0 0
        %2530 = vmatpush1.bf16.msra.mxu0 0
        %2531 = vmatprep.subr.bf16.mxu0 0
        %2532 = vmatpush1.bf16.msra.mxu0 0
        %2533 = vmatprep.subr.bf16.mxu0 0
        %2534 = vmatpush1.bf16.msra.mxu0 0
        %2535 = vmatprep.subr.bf16.mxu0 0
        %2536 = vmatpush1.bf16.msra.mxu0 0
        %2537 = vmatprep.subr.bf16.mxu0 0
        %2538 = vmatpush1.bf16.msra.mxu0 0
        %2539 = vmatprep.mubr.bf16.mxu0 0
        %2540 = vmatmul.mubr.bf16.gmra.mrb[0].mxu0 %v2442
        %v2541 = vpop.f32.mrb[0].mxu0
        %v2542 = vadd.f32 %v2493, %v2541
        %v2543 = vpop.f32.mrb[0].mxu0
        %v2544 = vpop.f32.mrb[0].mxu0
        %v2545 = vpop.f32.mrb[0].mxu0
        %2546 = vdwg.mxu0
        %v2547 = vxor.u32 %v2542, 2147483648
        %v2548 = vmul.f32 %v2547, 1.442695
        %v2549 = vpow.pop %v2548
        %v2550 = vadd.f32 %v2549, 1.0
        %v2551 = vrcp.pop %v2550
        %v2552 = vmul.f32 1.0, %v2551
        %v2553 = vmul.f32 %v2479, %v2552
        %vm2554 = vcmask 253952
        %2555 = vst.msk [vmem:[#allocation2 + $0x7] sm:$0x1] %vm2554, 0.0
        %2556 = vst.msk [vmem:[#allocation2 + $0x10] sm:$0x1] %vm2554, 0.0
        %2557 = vst.msk [vmem:[#allocation2 + $0x8] sm:$0xff] %vm1434, %v2553
        %v2558 = vld [vmem:[#allocation2 + $0x7] sm:$0xff]
        %v2559 = vld [vmem:[#allocation24] sm:$0x1]
        %v2561 = vlaneseq
        %v2562 = vshrl.u32 %v2561, 7
        %v2563 = vsub.s32 0, %v2562
        %v2564 = vrot.slane %v2559, %v2563
        %v2566 = vmul.f32 %v2558, %v2564
        %v2567 = vadd.f32 %v2566, 0.0
        %v2568 = vld [vmem:[#allocation2 + $0x8] sm:$0xff]
        %s2569 = scalar_lea.vmem [#allocation24], 1
        %v2570 = vld [vmem:[%s2569] sm:$0x1]
        %v2572 = vlaneseq
        %v2573 = vshrl.u32 %v2572, 7
        %v2574 = vsub.s32 0, %v2573
        %v2575 = vrot.slane %v2570, %v2574
        %v2577 = vmul.f32 %v2568, %v2575
        %v2578 = vadd.f32 %v2567, %v2577
        %v2579 = vld [vmem:[#allocation2 + $0x9] sm:$0xff]
        %s2580 = scalar_lea.vmem [#allocation24], 2
        %v2581 = vld [vmem:[%s2580] sm:$0x1]
        %v2583 = vlaneseq
        %v2584 = vshrl.u32 %v2583, 7
        %v2585 = vsub.s32 0, %v2584
        %v2586 = vrot.slane %v2581, %v2585
        %v2588 = vmul.f32 %v2579, %v2586
        %v2589 = vadd.f32 %v2578, %v2588
        %v2590 = vld [vmem:[#allocation26] sm:$0x1]
        %v2592 = vlaneseq
        %v2593 = vshrl.u32 %v2592, 7
        %v2594 = vsub.s32 0, %v2593
        %v2595 = vrot.slane %v2590, %v2594
        %v2597 = vadd.f32 %v2589, %v2595
        %v2598 = vld [vmem:[%s57] sm:$0x1]
        %v2600 = vlaneseq
        %v2601 = vshrl.u32 %v2600, 7
        %v2602 = vsub.s32 0, %v2601
        %v2603 = vrot.slane %v2598, %v2602
        %v2605 = vsub.f32 %v2597, %v2603
        %v2606 = vld [vmem:[%s59] sm:$0x1]
        %v2607 = vadd.f32 %v2606, 1e-05
        %v2608 = vrsqrt.pop %v2607
        %v2610 = vlaneseq
        %v2611 = vshrl.u32 %v2610, 7
        %v2612 = vsub.s32 0, %v2611
        %v2613 = vrot.slane %v2608, %v2612
        %v2615 = vmul.f32 %v2605, %v2613
        %v2616 = vld [vmem:[#allocation27] sm:$0x1]
        %v2618 = vlaneseq
        %v2619 = vshrl.u32 %v2618, 7
        %v2620 = vsub.s32 0, %v2619
        %v2621 = vrot.slane %v2616, %v2620
        %v2623 = vmul.f32 %v2615, %v2621
        %v2624 = vld [vmem:[%s55] sm:$0x1]
        %v2626 = vlaneseq
        %v2627 = vshrl.u32 %v2626, 7
        %v2628 = vsub.s32 0, %v2627
        %v2629 = vrot.slane %v2624, %v2628
        %v2631 = vadd.f32 %v2623, %v2629
        %v2632 = vxor.u32 %v2631, 2147483648
        %v2633 = vmul.f32 %v2632, 1.442695
        %v2634 = vpow.pop %v2633
        %v2635 = vadd.f32 %v2634, 1.0
        %v2636 = vrcp.pop %v2635
        %v2637 = vmul.f32 1.0, %v2636
        %v2638 = vmul.f32 %v2631, %v2637
        %v2639 = vld [vmem:[%s61] sm:$0xf]
        %v2640 = vld [vmem:[%s61 + $0x4] sm:$0xf]
        %v2641 = vld [vmem:[%s61 + $0x8] sm:$0xf]
        %v2642 = vld [vmem:[%s61 + $0xc] sm:$0xf]
        %v2643 = vpack.c.bf16 %v2638, %v2638
        %v2648 = vunpack.c.l.b16 %v2639
        %v2649 = vunpack.c.l.b16 %v2640
        %v2650 = vunpack.c.l.b16 %v2641
        %v2651 = vunpack.c.l.b16 %v2642
        %v2652 = vpack.c.b16 %v2649, %v2648
        %v2653 = vpack.c.b16 %v2651, %v2650
        %v2657 = vsel %vm1434, %v2643, 0
        %2659 = vmatprep.subr.bf16.mxu0 0
        %2660 = vmatpush1.bf16.msra.mxu0 %v2652
        %2661 = vmatprep.subr.bf16.mxu0 0
        %2662 = vmatpush1.bf16.msra.mxu0 %v2653
        %2663 = vmatprep.subr.bf16.mxu0 0
        %2664 = vmatpush1.bf16.msra.mxu0 0
        %2665 = vmatprep.subr.bf16.mxu0 0
        %2666 = vmatpush1.bf16.msra.mxu0 0
        %2667 = vmatprep.subr.bf16.mxu0 0
        %2668 = vmatpush1.bf16.msra.mxu0 0
        %2669 = vmatprep.subr.bf16.mxu0 0
        %2670 = vmatpush1.bf16.msra.mxu0 0
        %2671 = vmatprep.subr.bf16.mxu0 0
        %2672 = vmatpush1.bf16.msra.mxu0 0
        %2673 = vmatprep.subr.bf16.mxu0 0
        %2674 = vmatpush1.bf16.msra.mxu0 0
        %2675 = vmatprep.subr.bf16.mxu0 0
        %2676 = vmatpush1.bf16.msra.mxu0 0
        %2677 = vmatprep.subr.bf16.mxu0 0
        %2678 = vmatpush1.bf16.msra.mxu0 0
        %2679 = vmatprep.subr.bf16.mxu0 0
        %2680 = vmatpush1.bf16.msra.mxu0 0
        %2681 = vmatprep.subr.bf16.mxu0 0
        %2682 = vmatpush1.bf16.msra.mxu0 0
        %2683 = vmatprep.subr.bf16.mxu0 0
        %2684 = vmatpush1.bf16.msra.mxu0 0
        %2685 = vmatprep.subr.bf16.mxu0 0
        %2686 = vmatpush1.bf16.msra.mxu0 0
        %2687 = vmatprep.subr.bf16.mxu0 0
        %2688 = vmatpush1.bf16.msra.mxu0 0
        %2689 = vmatprep.subr.bf16.mxu0 0
        %2690 = vmatpush1.bf16.msra.mxu0 0
        %2691 = vmatprep.mubr.bf16.mxu0 0
        %2692 = vmatmul.mubr.bf16.gmra.mrb[0].mxu0 %v2657
        %v2693 = vpop.f32.mrb[0].mxu0
        %v2694 = vadd.f32 0.0, %v2693
        %v2695 = vpop.f32.mrb[0].mxu0
        %v2696 = vpop.f32.mrb[0].mxu0
        %v2697 = vpop.f32.mrb[0].mxu0
        %2698 = vdwg.mxu0
        %v2699 = vadd.f32 %v2387, %v2694
        %v2700 = vld [vmem:[%s63] sm:$0x1]
        %v2702 = vlaneseq
        %v2703 = vshrl.u32 %v2702, 7
        %v2704 = vsub.s32 0, %v2703
        %v2705 = vrot.slane %v2700, %v2704
        %v2707 = vadd.f32 %v2699, %v2705
        %v2708 = vld [vmem:[%s65] sm:$0x1]
        %v2709 = vld [vmem:[%s67] sm:$0x1]
        %v2710 = vsel %vm1434, %v2707, 0.0
        %2711 = vadd.xlane.f32.xlu0 %v2710
        %v2712 = vpop.xlane.xlu0 %2711
        %v2713 = vmul.f32 %v2712, %v1438
        %v2714 = vsub.f32 %v2707, %v2713
        %v2715 = vmul.f32 %v2714, %v2714
        %v2716 = vsel %vm1434, %v2715, 0.0
        %2717 = vadd.xlane.f32.xlu0 %v2716
        %v2718 = vpop.xlane.xlu0 %2717
        %v2719 = vmul.f32 %v2718, %v1438
        %v2720 = vadd.f32 %v2719, 1e-12
        %v2721 = vrsqrt.pop %v2720
        %v2722 = vmul.f32 %v2714, %v2721
        %v2724 = vlaneseq
        %v2725 = vshrl.u32 %v2724, 7
        %v2726 = vsub.s32 0, %v2725
        %v2727 = vrot.slane %v2708, %v2726
        %v2729 = vmul.f32 %v2722, %v2727
        %v2731 = vlaneseq
        %v2732 = vshrl.u32 %v2731, 7
        %v2733 = vsub.s32 0, %v2732
        %v2734 = vrot.slane %v2709, %v2733
        %v2736 = vadd.f32 %v2729, %v2734
        %v2737 = vld [vmem:[%s69] sm:$0xf]
        %v2738 = vld [vmem:[%s69 + $0x4] sm:$0xf]
        %v2739 = vld [vmem:[%s69 + $0x8] sm:$0xf]
        %v2740 = vld [vmem:[%s69 + $0xc] sm:$0xf]
        %v2741 = vpack.c.bf16 %v2736, %v2736
        %v2742 = vld [vmem:[%s71] sm:$0x1]
        %v2744 = vlaneseq
        %v2745 = vshrl.u32 %v2744, 7
        %v2746 = vsub.s32 0, %v2745
        %v2747 = vrot.slane %v2742, %v2746
        %v2753 = vunpack.c.l.b16 %v2737
        %v2754 = vunpack.c.l.b16 %v2738
        %v2755 = vunpack.c.l.b16 %v2739
        %v2756 = vunpack.c.l.b16 %v2740
        %v2757 = vpack.c.b16 %v2754, %v2753
        %v2758 = vpack.c.b16 %v2756, %v2755
        %v2762 = vsel %vm1434, %v2741, 0
        %2764 = vmatprep.subr.bf16.mxu0 0
        %2765 = vmatpush1.bf16.msra.mxu0 %v2757
        %2766 = vmatprep.subr.bf16.mxu0 0
        %2767 = vmatpush1.bf16.msra.mxu0 %v2758
        %2768 = vmatprep.subr.bf16.mxu0 0
        %2769 = vmatpush1.bf16.msra.mxu0 0
        %2770 = vmatprep.subr.bf16.mxu0 0
        %2771 = vmatpush1.bf16.msra.mxu0 0
        %2772 = vmatprep.subr.bf16.mxu0 0
        %2773 = vmatpush1.bf16.msra.mxu0 0
        %2774 = vmatprep.subr.bf16.mxu0 0
        %2775 = vmatpush1.bf16.msra.mxu0 0
        %2776 = vmatprep.subr.bf16.mxu0 0
        %2777 = vmatpush1.bf16.msra.mxu0 0
        %2778 = vmatprep.subr.bf16.mxu0 0
        %2779 = vmatpush1.bf16.msra.mxu0 0
        %2780 = vmatprep.subr.bf16.mxu0 0
        %2781 = vmatpush1.bf16.msra.mxu0 0
        %2782 = vmatprep.subr.bf16.mxu0 0
        %2783 = vmatpush1.bf16.msra.mxu0 0
        %2784 = vmatprep.subr.bf16.mxu0 0
        %2785 = vmatpush1.bf16.msra.mxu0 0
        %2786 = vmatprep.subr.bf16.mxu0 0
        %2787 = vmatpush1.bf16.msra.mxu0 0
        %2788 = vmatprep.subr.bf16.mxu0 0
        %2789 = vmatpush1.bf16.msra.mxu0 0
        %2790 = vmatprep.subr.bf16.mxu0 0
        %2791 = vmatpush1.bf16.msra.mxu0 0
        %2792 = vmatprep.subr.bf16.mxu0 0
        %2793 = vmatpush1.bf16.msra.mxu0 0
        %2794 = vmatprep.subr.bf16.mxu0 0
        %2795 = vmatpush1.bf16.msra.mxu0 0
        %2796 = vmatprep.mubr.bf16.mxu0 0
        %2797 = vmatmul.mubr.bf16.gmra.mrb[0].mxu0 %v2762
        %v2798 = vpop.f32.mrb[0].mxu0
        %v2799 = vadd.f32 %v2747, %v2798
        %v2800 = vpop.f32.mrb[0].mxu0
        %v2801 = vpop.f32.mrb[0].mxu0
        %v2802 = vpop.f32.mrb[0].mxu0
        %2803 = vdwg.mxu0
        %v2804 = vmax.f32 %v2799, 0.0
        %v2805 = vld [vmem:[%s73] sm:$0xf]
        %v2806 = vld [vmem:[%s73 + $0x4] sm:$0xf]
        %v2807 = vld [vmem:[%s73 + $0x8] sm:$0xf]
        %v2808 = vld [vmem:[%s73 + $0xc] sm:$0xf]
        %v2809 = vld [vmem:[%s73 + $0x10] sm:$0xf]
        %v2810 = vld [vmem:[%s73 + $0x14] sm:$0xf]
        %v2811 = vld [vmem:[%s73 + $0x18] sm:$0xf]
        %v2812 = vld [vmem:[%s73 + $0x1c] sm:$0xf]
        %v2813 = vpack.c.bf16 %v2804, %v2804
        %v2814 = vld [vmem:[%s75] sm:$0x1]
        %v2816 = vlaneseq
        %v2817 = vshrl.u32 %v2816, 7
        %v2818 = vsub.s32 0, %v2817
        %v2819 = vrot.slane %v2814, %v2818
        %v2829 = vunpack.c.l.b16 %v2805
        %v2830 = vunpack.c.l.b16 %v2806
        %v2831 = vunpack.c.l.b16 %v2807
        %v2832 = vunpack.c.l.b16 %v2808
        %v2833 = vunpack.c.l.b16 %v2809
        %v2834 = vunpack.c.l.b16 %v2810
        %v2835 = vunpack.c.l.b16 %v2811
        %v2836 = vunpack.c.l.b16 %v2812
        %v2837 = vpack.c.b16 %v2830, %v2829
        %v2838 = vpack.c.b16 %v2832, %v2831
        %v2839 = vpack.c.b16 %v2834, %v2833
        %v2840 = vpack.c.b16 %v2836, %v2835
        %v2846 = vsel %vm1571, %v2813, 0
        %2848 = vmatprep.subr.bf16.mxu0 0
        %2849 = vmatpush1.bf16.msra.mxu0 %v2837
        %2850 = vmatprep.subr.bf16.mxu0 0
        %2851 = vmatpush1.bf16.msra.mxu0 %v2838
        %2852 = vmatprep.subr.bf16.mxu0 0
        %2853 = vmatpush1.bf16.msra.mxu0 %v2839
        %2854 = vmatprep.subr.bf16.mxu0 0
        %2855 = vmatpush1.bf16.msra.mxu0 %v2840
        %2856 = vmatprep.subr.bf16.mxu0 0
        %2857 = vmatpush1.bf16.msra.mxu0 0
        %2858 = vmatprep.subr.bf16.mxu0 0
        %2859 = vmatpush1.bf16.msra.mxu0 0
        %2860 = vmatprep.subr.bf16.mxu0 0
        %2861 = vmatpush1.bf16.msra.mxu0 0
        %2862 = vmatprep.subr.bf16.mxu0 0
        %2863 = vmatpush1.bf16.msra.mxu0 0
        %2864 = vmatprep.subr.bf16.mxu0 0
        %2865 = vmatpush1.bf16.msra.mxu0 0
        %2866 = vmatprep.subr.bf16.mxu0 0
        %2867 = vmatpush1.bf16.msra.mxu0 0
        %2868 = vmatprep.subr.bf16.mxu0 0
        %2869 = vmatpush1.bf16.msra.mxu0 0
        %2870 = vmatprep.subr.bf16.mxu0 0
        %2871 = vmatpush1.bf16.msra.mxu0 0
        %2872 = vmatprep.subr.bf16.mxu0 0
        %2873 = vmatpush1.bf16.msra.mxu0 0
        %2874 = vmatprep.subr.bf16.mxu0 0
        %2875 = vmatpush1.bf16.msra.mxu0 0
        %2876 = vmatprep.subr.bf16.mxu0 0
        %2877 = vmatpush1.bf16.msra.mxu0 0
        %2878 = vmatprep.subr.bf16.mxu0 0
        %2879 = vmatpush1.bf16.msra.mxu0 0
        %2880 = vmatprep.mubr.bf16.mxu0 0
        %2881 = vmatmul.mubr.bf16.gmra.mrb[0].mxu0 %v2846
        %v2882 = vpop.f32.mrb[0].mxu0
        %v2883 = vadd.f32 %v2819, %v2882
        %v2884 = vpop.f32.mrb[0].mxu0
        %v2885 = vpop.f32.mrb[0].mxu0
        %v2886 = vpop.f32.mrb[0].mxu0
        %2887 = vdwg.mxu0
        %v2888 = vmul.f32 %v2883, 0.5
        %v2889 = vadd.f32 %v2707, %v2888
        %v2890 = vld [vmem:[%s77] sm:$0x1]
        %v2891 = vld [vmem:[%s79] sm:$0x1]
        %v2892 = vsel %vm1434, %v2889, 0.0
        %2893 = vadd.xlane.f32.xlu0 %v2892
        %v2894 = vpop.xlane.xlu0 %2893
        %v2895 = vmul.f32 %v2894, %v1438
        %v2896 = vsub.f32 %v2889, %v2895
        %v2897 = vmul.f32 %v2896, %v2896
        %v2898 = vsel %vm1434, %v2897, 0.0
        %2899 = vadd.xlane.f32.xlu0 %v2898
        %v2900 = vpop.xlane.xlu0 %2899
        %v2901 = vmul.f32 %v2900, %v1438
        %v2902 = vadd.f32 %v2901, 1e-12
        %v2903 = vrsqrt.pop %v2902
        %v2904 = vmul.f32 %v2896, %v2903
        %v2906 = vlaneseq
        %v2907 = vshrl.u32 %v2906, 7
        %v2908 = vsub.s32 0, %v2907
        %v2909 = vrot.slane %v2890, %v2908
        %v2911 = vmul.f32 %v2904, %v2909
        %v2913 = vlaneseq
        %v2914 = vshrl.u32 %v2913, 7
        %v2915 = vsub.s32 0, %v2914
        %v2916 = vrot.slane %v2891, %v2915
        %v2918 = vadd.f32 %v2911, %v2916
        %2919 = vst.msk [vmem:[%s1425] sm:$0xff] %vm1434, %v2918
        %s2920 = sand.u32 %s964, 1
        %s2921 = scalar_lea.sflag [#allocation5], %s2920
        %s2922 = sand.u32 %s964, 1
        %s2923 = smul.addr %s2922, 8
        %s2924 = scalar_lea.vmem [#allocation29], %s2923
        // Predicated region
        $region245: #{tpu_custom_call.1} parent=179 // pred_check
          %p2925 = pneg %p974
        $region246: #{tpu_custom_call.1} parent=179 // pred_check_branch
          %2927 = sbr.rel (%p2925) target = $region248
        $region247: #{tpu_custom_call.1} parent=179 // pred_region
          %s2929 = ssub.s32 128, 128
          %2930 = vsyncadd %s2921, %s2929
          %s2931 = smul.addr %s106, 128
          %s2932 = scalar_lea.hbm %s81, %s2931
          %s2934 = sshll.u32 %s2924, 4
          %s2935 = int_to_ptr.vmem [resolvable:$true] %s2934
          %2937 = dma.vmem_to_hbm [thread:$0]  %s2935, 128, %s2932, %s2921
        $region248: #{tpu_custom_call.1} parent=179 // pred_fallthru
          _
      $region180: #{tpu_custom_call.1} parent=5 // pred_fallthru
        _
      %p2938 = scmp.le.s32.totalorder 2, %s101
      // Predicated region
      $region249: #{tpu_custom_call.1} parent=5 // pred_check
        %p2939 = pneg %p2938
      $region250: #{tpu_custom_call.1} parent=5 // pred_check_branch
        %2941 = sbr.rel (%p2939) target = $region252
      $region251: #{tpu_custom_call.1} parent=5 // pred_region
        %s2942 = ssub.s32 %s101, 2
        // Predicated region
        $region253: #{tpu_custom_call.1} parent=251 // pred_check
          %p2943 = pneg %p980
        $region254: #{tpu_custom_call.1} parent=251 // pred_check_branch
          %2945 = sbr.rel (%p2943) target = $region256
        $region255: #{tpu_custom_call.1} parent=251 // pred_region
          %s2946 = sand.u32 %s965, 1
          %s2947 = scalar_lea.sflag [#allocation5], %s2946
          %s2948 = sand.u32 %s965, 1
          %s2949 = smul.addr %s2948, 8
          %s2950 = scalar_lea.vmem [#allocation29], %s2949
          %2951 = dma.done %s2947, 128
        $region256: #{tpu_custom_call.1} parent=251 // pred_fallthru
          _
      $region252: #{tpu_custom_call.1} parent=5 // pred_fallthru
        _
    $region6: #{tpu_custom_call.1} parent=1 // loop_footer
      %s105 = sadd.s32 1, %s101
    $region7: #{tpu_custom_call.1} parent=1 // loop_footer_branch
      %100 = sbr.rel target = $region3
    $region8: #{tpu_custom_call.1} parent=1 // loop_exit
      _
    %2952 = vsyncpa [#allocation4], 1
    %s2953 = scalar_lea.sflag [#allocation4], 1
    %2954 = vsyncpa %s2953, 1
    %2955 = vsyncpa [#allocation7], 1
    %2956 = vsyncpa [#allocation10], 1
    %2957 = vsyncpa [#allocation13], 1
    %2958 = vsyncpa [#allocation16], 1
    %2959 = vsyncpa [#allocation19], 1
    %2960 = vsyncpa [#allocation22], 1
    %2961 = vsyncpa [#allocation25], 1
    %2962 = vsyncpa [#allocation28], 1
    %2963 = vsyncpa [#allocation5], 1
    %s2964 = scalar_lea.sflag [#allocation5], 1
    %2965 = vsyncpa %s2964, 1

</llo_original>
